<compile_context>
chip_gen: v7x
topology: tpu7x:2x2x1
jax: 0.10.0
libtpu: 0.0.40
codegen_flags: <defaults>
</compile_context>

<pallas_src>
import functools

import jax
import jax.numpy as jnp
from jax.experimental import pallas as pl
from jax.experimental.pallas import tpu as pltpu

_HEAD = 16  # sublane-aligned left margin in the padded-activation scratch (core at row 16)


# ----------------------------- fused Pallas kernel -----------------------------

def _textcnn2_kernel(x_ref, w1_ref, aff1_ref, w2_ref, aff2_ref, w3_ref, b3_ref,
                     o_ref, p1_ref, p2_ref, *, L):
    """One batch tile (Bt elements) per grid step: conv1(im2col) -> conv2 -> conv3."""
    L1, L2, L3 = L + 4, L + 8, L + 12
    Bt = x_ref.shape[0]

    # ---- halo zeroing: only the rows that must be zero, tile-aligned, once per step ----
    # Left halo lives in rows [HEAD-3, HEAD) of the head tile; right halo is the 3 rows
    # after the core.  Core rows are rewritten for every batch element, so zeroing the
    # head tile + the tail tile(s) once per grid step keeps all halos zero.
    def zero_halo(pad_ref, l_core):
        rows, cols = pad_ref.shape
        pad_ref[0:_HEAD, :] = jnp.zeros((_HEAD, cols), pad_ref.dtype)
        tail = _HEAD + (l_core // 16) * 16            # 16-aligned, <= _HEAD + l_core
        pad_ref[tail:rows, :] = jnp.zeros((rows - tail, cols), pad_ref.dtype)

    zero_halo(p1_ref, L1)
    zero_halo(p2_ref, L2)

    def epilogue(h, aff_ref):
        # aff rows: [conv bias, PReLU alpha, BN scale, BN shift] — per channel, f32.
        aff = aff_ref[...]
        bias, alpha, scale, shift = aff[0:1], aff[1:2], aff[2:3], aff[3:4]
        h = h + bias
        h = jnp.maximum(h, 0.0) + alpha * jnp.minimum(h, 0.0)     # PReLU
        return h * scale + shift                                  # folded eval-mode BN

    def conv3(pad_ref, w_ref, l_out):
        # kernel-size-3 conv == 3 accumulated MXU matmuls over shifted windows of the
        # bf16 padded activation (f32 accumulation).  Stores are aligned; only these
        # shifted loads are sublane-offset.
        acc = jnp.dot(pad_ref[_HEAD - 3:_HEAD - 3 + l_out, :], w_ref[0],
                      preferred_element_type=jnp.float32)
        for k in (1, 2):
            acc = acc + jnp.dot(pad_ref[_HEAD - 3 + k:_HEAD - 3 + k + l_out, :],
                                w_ref[k], preferred_element_type=jnp.float32)
        return acc

    for bi in range(Bt):  # static unroll over the per-step batch tile
        # Stage 1: input arrives pre-im2col'd ([L1, 3E] bf16) -> single K=3E matmul.
        h = jnp.dot(x_ref[bi], w1_ref[...], preferred_element_type=jnp.float32)
        h = epilogue(h, aff1_ref)                                  # [L1, 512] f32
        p1_ref[_HEAD:_HEAD + L1, :] = h.astype(p1_ref.dtype)       # aligned core store

        # Stage 2.
        h = epilogue(conv3(p1_ref, w2_ref, L2), aff2_ref)          # [L2, 256] f32
        p2_ref[_HEAD:_HEAD + L2, :] = h.astype(p2_ref.dtype)

        # Stage 3 (no PReLU/BN after the last conv).
        h = conv3(p2_ref, w3_ref, L3) + b3_ref[...]                # [L3, H] f32
        o_ref[bi] = h.astype(o_ref.dtype)


def textcnn2_forward(x, kp, *, batch_tile=None):
    """x: [B, L, E] float32; returns [B, L+12, hid_dim] float32 (eval-mode BatchNorm)."""
    B, L, E = x.shape
    C1 = kp["aff1"].shape[1]
    C2 = kp["aff2"].shape[1]
    H = kp["b3"].shape[1]
    L1, L3 = L + 4, L + 12
    L2 = L + 8

    # Host-side im2col of the FIRST conv only (layout plumbing, not compute):
    #   x_im[b, i, k*E:(k+1)*E] = x_padded[b, i+k, :]
    # so stage 1 becomes one K=3E MXU matmul.  Cast to bf16 once here (matmul operands
    # were bf16 anyway) to halve the per-step input DMA.
    xp = jnp.pad(x, ((0, 0), (3, 3), (0, 0)))
    x_im = jnp.concatenate([xp[:, k:k + L1, :] for k in range(3)],
                           axis=-1).astype(jnp.bfloat16)            # [B, L1, 3E]

    if batch_tile is None:
        batch_tile = next(bt for bt in (8, 4, 2, 1) if B % bt == 0)
    Bt = batch_tile

    kern = functools.partial(_textcnn2_kernel, L=L)
    # Note: weight/affine inputs use constant index maps so they are fetched once and stay
    # VMEM-resident across grid steps (a single pipeline buffer would suffice for them).
    return pl.pallas_call(
        kern,
        out_shape=jax.ShapeDtypeStruct((B, L3, H), jnp.float32),
        grid=(B // Bt,),
        in_specs=[
            pl.BlockSpec((Bt, L1, 3 * E), lambda b: (b, 0, 0)),    # im2col'd input (per step)
            pl.BlockSpec((3 * E, C1), lambda b: (0, 0)),           # conv1 weight, taps stacked
            pl.BlockSpec((4, C1), lambda b: (0, 0)),               # bias/alpha/BN affine 1
            pl.BlockSpec((3, C1, C2), lambda b: (0, 0, 0)),        # conv2 weight taps
            pl.BlockSpec((4, C2), lambda b: (0, 0)),               # bias/alpha/BN affine 2
            pl.BlockSpec((3, C2, H), lambda b: (0, 0, 0)),         # conv3 weight taps
            pl.BlockSpec((1, H), lambda b: (0, 0)),                # conv3 bias
        ],
        out_specs=pl.BlockSpec((Bt, L3, H), lambda b: (b, 0, 0)),
        scratch_shapes=[
            pltpu.VMEM((_HEAD + L1 + 3, C1), jnp.bfloat16),        # stage-1 padded activation
            pltpu.VMEM((_HEAD + L2 + 3, C2), jnp.bfloat16),        # stage-2 padded activation
        ],
        compiler_params=pltpu.CompilerParams(
            dimension_semantics=("parallel",),
            vmem_limit_bytes=48 * 1024 * 1024),
    )(x_im, kp["w1"], kp["aff1"], kp["w2"], kp["aff2"], kp["w3"], kp["b3"])


# ----------------------------- parameters & reference -----------------------------

def init_params(key, embed_dim, hid_dim):
    C1, C2 = 512, 256
    ks = jax.random.split(key, 8)

    def conv_w(k, cin, cout):
        # stored as [tap, Cin, Cout]  (== torch Conv1d weight[Cout, Cin, tap] transposed)
        return 0.05 * jax.random.normal(k, (3, cin, cout), jnp.float32)

    def bn_fold(k, c, eps=1e-5):
        kg, kb, km, kv = jax.random.split(k, 4)
        gamma = 1.0 + 0.1 * jax.random.normal(kg, (c,), jnp.float32)
        beta = 0.1 * jax.random.normal(kb, (c,), jnp.float32)
        mean = 0.1 * jax.random.normal(km, (c,), jnp.float32)
        var = jnp.abs(1.0 + 0.1 * jax.random.normal(kv, (c,), jnp.float32))
        scale = gamma * jax.lax.rsqrt(var + eps)
        shift = beta - mean * scale
        return scale, shift

    w1 = conv_w(ks[0], embed_dim, C1)
    b1 = 0.05 * jax.random.normal(ks[1], (C1,), jnp.float32)
    w2 = conv_w(ks[2], C1, C2)
    b2 = 0.05 * jax.random.normal(ks[3], (C2,), jnp.float32)
    w3 = conv_w(ks[4], C2, hid_dim)
    b3 = 0.05 * jax.random.normal(ks[5], (hid_dim,), jnp.float32)
    a1 = jnp.float32(0.25)  # nn.PReLU() default init
    a2 = jnp.float32(0.25)
    s1, sh1 = bn_fold(ks[6], C1)
    s2, sh2 = bn_fold(ks[7], C2)

    ref = {"w1": w1, "b1": b1, "a1": a1, "s1": s1, "sh1": sh1,
           "w2": w2, "b2": b2, "a2": a2, "s2": s2, "sh2": sh2,
           "w3": w3, "b3": b3}
    kern = {
        # conv1 taps stacked along K to match the wrapper's im2col column order.
        "w1": w1.reshape(3 * embed_dim, C1).astype(jnp.bfloat16),
        "aff1": jnp.stack([b1, jnp.full((C1,), a1, jnp.float32), s1, sh1]),
        "w2": w2.astype(jnp.bfloat16),
        "aff2": jnp.stack([b2, jnp.full((C2,), a2, jnp.float32), s2, sh2]),
        "w3": w3.astype(jnp.bfloat16),
        "b3": b3.reshape(1, hid_dim),
    }
    return kern, ref


def reference_forward(x, rp):
    """Pure-JAX f32 reference mirroring TextCNN2 (eval-mode BatchNorm)."""
    def conv3(h, w, b):
        l_out = h.shape[1] + 4
        hp = jnp.pad(h, ((0, 0), (3, 3), (0, 0)))
        out = sum(jnp.einsum("blc,cd->bld", hp[:, k:k + l_out, :], w[k])
                  for k in range(3))
        return out + b

    def prelu(h, a):
        return jnp.maximum(h, 0.0) + a * jnp.minimum(h, 0.0)

    h = conv3(x, rp["w1"], rp["b1"])
    h = prelu(h, rp["a1"]) * rp["s1"] + rp["sh1"]
    h = conv3(h, rp["w2"], rp["b2"])
    h = prelu(h, rp["a2"]) * rp["s2"] + rp["sh2"]
    h = conv3(h, rp["w3"], rp["b3"])
    return h


# ----------------------------- main -----------------------------

if __name__ == "__main__":
    embed_dim, hid_dim = 64, 128
    B, L = 2, 16

    key = jax.random.PRNGKey(0)
    k_x, k_p = jax.random.split(key)
    protein = jax.random.normal(k_x, (B, L, embed_dim), jnp.float32)
    kern_params, ref_params = init_params(k_p, embed_dim, hid_dim)

    out = jax.block_until_ready(textcnn2_forward(protein, kern_params))

    assert out.shape == (B, L + 12, hid_dim), out.shape
    assert bool(jnp.all(jnp.isfinite(out)))

    ref = reference_forward(protein, ref_params)
    # Kernel uses bf16 matmul operands / bf16 inter-stage activations (f32 accumulation)
    # -> loose tolerance vs the f32 reference.
    assert bool(jnp.allclose(out, ref, rtol=1e-1, atol=1e-1)), float(
        jnp.max(jnp.abs(out - ref)))

    print("KERNEL_OK")
</pallas_src>

<mosaic_0001>
module attributes {stable_mosaic.version = 11 : i64} {
  func.func @_textcnn2_kernel(%arg0: i32, %arg1: memref<2x20x192xbf16, #tpu.memory_space<vmem>>, %arg2: memref<192x512xbf16, #tpu.memory_space<vmem>>, %arg3: memref<4x512xf32, #tpu.memory_space<vmem>>, %arg4: memref<3x512x256xbf16, #tpu.memory_space<vmem>>, %arg5: memref<4x256xf32, #tpu.memory_space<vmem>>, %arg6: memref<3x256x128xbf16, #tpu.memory_space<vmem>>, %arg7: memref<1x128xf32, #tpu.memory_space<vmem>>, %arg8: memref<2x28x128xf32, #tpu.memory_space<vmem>>, %arg9: memref<39x512xbf16, #tpu.memory_space<vmem>>, %arg10: memref<43x256xbf16, #tpu.memory_space<vmem>>) attributes {dimension_semantics = [#tpu.dimension_semantics<parallel>], iteration_bounds = array<i64: 1>, scalar_prefetch = 0 : i64, scratch_operands = 2 : i64, tpu.core_type = #tpu.core_type<tc>, window_params = [{transform_indices = @transform_0, window_bounds = array<i64: 2, 20, 192>}, {pipeline_mode = #tpu.pipeline_mode<synchronous>, transform_indices = @transform_1, window_bounds = array<i64: 192, 512>}, {pipeline_mode = #tpu.pipeline_mode<synchronous>, transform_indices = @transform_2, window_bounds = array<i64: 4, 512>}, {pipeline_mode = #tpu.pipeline_mode<synchronous>, transform_indices = @transform_3, window_bounds = array<i64: 3, 512, 256>}, {pipeline_mode = #tpu.pipeline_mode<synchronous>, transform_indices = @transform_4, window_bounds = array<i64: 4, 256>}, {pipeline_mode = #tpu.pipeline_mode<synchronous>, transform_indices = @transform_5, window_bounds = array<i64: 3, 256, 128>}, {pipeline_mode = #tpu.pipeline_mode<synchronous>, transform_indices = @transform_6, window_bounds = array<i64: 1, 128>}, {transform_indices = @transform_7, window_bounds = array<i64: 2, 28, 128>}]} {
    %cst = arith.constant 0.000000e+00 : bf16
    %0 = vector.broadcast %cst : bf16 to vector<16x512xbf16>
    %c0 = arith.constant 0 : index
    %c0_0 = arith.constant 0 : index
    %1 = vector.load %arg9[%c0, %c0_0] : memref<39x512xbf16, #tpu.memory_space<vmem>>, vector<16x512xbf16>
    tpu.vector_store %arg9[%c0, %c0_0], %0 {strides = array<i32>} : memref<39x512xbf16, #tpu.memory_space<vmem>>, vector<16x512xbf16>,
    %cst_1 = arith.constant 0.000000e+00 : bf16
    %2 = vector.broadcast %cst_1 : bf16 to vector<7x512xbf16>
    %c32 = arith.constant 32 : index
    %c0_2 = arith.constant 0 : index
    %3 = vector.load %arg9[%c32, %c0_2] : memref<39x512xbf16, #tpu.memory_space<vmem>>, vector<7x512xbf16>
    tpu.vector_store %arg9[%c32, %c0_2], %2 {strides = array<i32>} : memref<39x512xbf16, #tpu.memory_space<vmem>>, vector<7x512xbf16>,
    %cst_3 = arith.constant 0.000000e+00 : bf16
    %4 = vector.broadcast %cst_3 : bf16 to vector<16x256xbf16>
    %c0_4 = arith.constant 0 : index
    %c0_5 = arith.constant 0 : index
    %5 = vector.load %arg10[%c0_4, %c0_5] : memref<43x256xbf16, #tpu.memory_space<vmem>>, vector<16x256xbf16>
    tpu.vector_store %arg10[%c0_4, %c0_5], %4 {strides = array<i32>} : memref<43x256xbf16, #tpu.memory_space<vmem>>, vector<16x256xbf16>,
    %cst_6 = arith.constant 0.000000e+00 : bf16
    %6 = vector.broadcast %cst_6 : bf16 to vector<11x256xbf16>
    %c32_7 = arith.constant 32 : index
    %c0_8 = arith.constant 0 : index
    %7 = vector.load %arg10[%c32_7, %c0_8] : memref<43x256xbf16, #tpu.memory_space<vmem>>, vector<11x256xbf16>
    tpu.vector_store %arg10[%c32_7, %c0_8], %6 {strides = array<i32>} : memref<43x256xbf16, #tpu.memory_space<vmem>>, vector<11x256xbf16>,
    %c0_9 = arith.constant 0 : index
    %c0_10 = arith.constant 0 : index
    %c0_11 = arith.constant 0 : index
    %8 = vector.load %arg1[%c0_9, %c0_10, %c0_11] : memref<2x20x192xbf16, #tpu.memory_space<vmem>>, vector<1x20x192xbf16>
    %9 = vector.shape_cast %8 : vector<1x20x192xbf16> to vector<20x192xbf16>
    %c0_12 = arith.constant 0 : index
    %c0_13 = arith.constant 0 : index
    %10 = vector.load %arg2[%c0_12, %c0_13] : memref<192x512xbf16, #tpu.memory_space<vmem>>, vector<192x512xbf16>
    %cst_14 = arith.constant dense<0.000000e+00> : vector<20x512xf32>
    %11 = tpu.matmul %9, %10, %cst_14 {dimension_numbers = #tpu.dot_dimension_numbers<[1], [0], [0], [1], [0, 0, 1, 1], [], []>} : vector<20x192xbf16>, vector<192x512xbf16>, vector<20x512xf32> -> vector<20x512xf32>
    %c0_15 = arith.constant 0 : index
    %c0_16 = arith.constant 0 : index
    %12 = vector.load %arg3[%c0_15, %c0_16] : memref<4x512xf32, #tpu.memory_space<vmem>>, vector<4x512xf32>
    %13 = vector.extract_strided_slice %12 {offsets = [0, 0], sizes = [1, 512], strides = [1, 1]} : vector<4x512xf32> to vector<1x512xf32>
    %14 = vector.extract_strided_slice %12 {offsets = [1, 0], sizes = [1, 512], strides = [1, 1]} : vector<4x512xf32> to vector<1x512xf32>
    %15 = vector.extract_strided_slice %12 {offsets = [2, 0], sizes = [1, 512], strides = [1, 1]} : vector<4x512xf32> to vector<1x512xf32>
    %16 = vector.extract_strided_slice %12 {offsets = [3, 0], sizes = [1, 512], strides = [1, 1]} : vector<4x512xf32> to vector<1x512xf32>
    %17 = vector.broadcast %13 : vector<1x512xf32> to vector<20x512xf32>
    %18 = arith.addf %11, %17 : vector<20x512xf32>
    %cst_17 = arith.constant 0.000000e+00 : f32
    %19 = vector.broadcast %cst_17 : f32 to vector<20x512xf32>
    %20 = arith.maximumf %18, %19 : vector<20x512xf32>
    %cst_18 = arith.constant 0.000000e+00 : f32
    %21 = vector.broadcast %cst_18 : f32 to vector<20x512xf32>
    %22 = arith.minimumf %18, %21 : vector<20x512xf32>
    %23 = vector.broadcast %14 : vector<1x512xf32> to vector<20x512xf32>
    %24 = arith.mulf %23, %22 : vector<20x512xf32>
    %25 = arith.addf %20, %24 : vector<20x512xf32>
    %26 = vector.broadcast %15 : vector<1x512xf32> to vector<20x512xf32>
    %27 = arith.mulf %25, %26 : vector<20x512xf32>
    %28 = vector.broadcast %16 : vector<1x512xf32> to vector<20x512xf32>
    %29 = arith.addf %27, %28 : vector<20x512xf32>
    %30 = arith.truncf %29 : vector<20x512xf32> to vector<20x512xbf16>
    %c16 = arith.constant 16 : index
    %c0_19 = arith.constant 0 : index
    %31 = vector.load %arg9[%c16, %c0_19] : memref<39x512xbf16, #tpu.memory_space<vmem>>, vector<20x512xbf16>
    tpu.vector_store %arg9[%c16, %c0_19], %30 {strides = array<i32>} : memref<39x512xbf16, #tpu.memory_space<vmem>>, vector<20x512xbf16>,
    %c13 = arith.constant 13 : index
    %c0_20 = arith.constant 0 : index
    %32 = vector.load %arg9[%c13, %c0_20] : memref<39x512xbf16, #tpu.memory_space<vmem>>, vector<24x512xbf16>
    %c0_21 = arith.constant 0 : index
    %c0_22 = arith.constant 0 : index
    %c0_23 = arith.constant 0 : index
    %33 = vector.load %arg4[%c0_21, %c0_22, %c0_23] : memref<3x512x256xbf16, #tpu.memory_space<vmem>>, vector<1x512x256xbf16>
    %34 = vector.shape_cast %33 : vector<1x512x256xbf16> to vector<512x256xbf16>
    %cst_24 = arith.constant dense<0.000000e+00> : vector<24x256xf32>
    %35 = tpu.matmul %32, %34, %cst_24 {dimension_numbers = #tpu.dot_dimension_numbers<[1], [0], [0], [1], [0, 0, 1, 1], [], []>} : vector<24x512xbf16>, vector<512x256xbf16>, vector<24x256xf32> -> vector<24x256xf32>
    %c14 = arith.constant 14 : index
    %c0_25 = arith.constant 0 : index
    %36 = vector.load %arg9[%c14, %c0_25] : memref<39x512xbf16, #tpu.memory_space<vmem>>, vector<24x512xbf16>
    %c1 = arith.constant 1 : index
    %c0_26 = arith.constant 0 : index
    %c0_27 = arith.constant 0 : index
    %37 = vector.load %arg4[%c1, %c0_26, %c0_27] : memref<3x512x256xbf16, #tpu.memory_space<vmem>>, vector<1x512x256xbf16>
    %38 = vector.shape_cast %37 : vector<1x512x256xbf16> to vector<512x256xbf16>
    %cst_28 = arith.constant dense<0.000000e+00> : vector<24x256xf32>
    %39 = tpu.matmul %36, %38, %cst_28 {dimension_numbers = #tpu.dot_dimension_numbers<[1], [0], [0], [1], [0, 0, 1, 1], [], []>} : vector<24x512xbf16>, vector<512x256xbf16>, vector<24x256xf32> -> vector<24x256xf32>
    %40 = arith.addf %35, %39 : vector<24x256xf32>
    %c15 = arith.constant 15 : index
    %c0_29 = arith.constant 0 : index
    %41 = vector.load %arg9[%c15, %c0_29] : memref<39x512xbf16, #tpu.memory_space<vmem>>, vector<24x512xbf16>
    %c2 = arith.constant 2 : index
    %c0_30 = arith.constant 0 : index
    %c0_31 = arith.constant 0 : index
    %42 = vector.load %arg4[%c2, %c0_30, %c0_31] : memref<3x512x256xbf16, #tpu.memory_space<vmem>>, vector<1x512x256xbf16>
    %43 = vector.shape_cast %42 : vector<1x512x256xbf16> to vector<512x256xbf16>
    %cst_32 = arith.constant dense<0.000000e+00> : vector<24x256xf32>
    %44 = tpu.matmul %41, %43, %cst_32 {dimension_numbers = #tpu.dot_dimension_numbers<[1], [0], [0], [1], [0, 0, 1, 1], [], []>} : vector<24x512xbf16>, vector<512x256xbf16>, vector<24x256xf32> -> vector<24x256xf32>
    %45 = arith.addf %40, %44 : vector<24x256xf32>
    %c0_33 = arith.constant 0 : index
    %c0_34 = arith.constant 0 : index
    %46 = vector.load %arg5[%c0_33, %c0_34] : memref<4x256xf32, #tpu.memory_space<vmem>>, vector<4x256xf32>
    %47 = vector.extract_strided_slice %46 {offsets = [0, 0], sizes = [1, 256], strides = [1, 1]} : vector<4x256xf32> to vector<1x256xf32>
    %48 = vector.extract_strided_slice %46 {offsets = [1, 0], sizes = [1, 256], strides = [1, 1]} : vector<4x256xf32> to vector<1x256xf32>
    %49 = vector.extract_strided_slice %46 {offsets = [2, 0], sizes = [1, 256], strides = [1, 1]} : vector<4x256xf32> to vector<1x256xf32>
    %50 = vector.extract_strided_slice %46 {offsets = [3, 0], sizes = [1, 256], strides = [1, 1]} : vector<4x256xf32> to vector<1x256xf32>
    %51 = vector.broadcast %47 : vector<1x256xf32> to vector<24x256xf32>
    %52 = arith.addf %45, %51 : vector<24x256xf32>
    %cst_35 = arith.constant 0.000000e+00 : f32
    %53 = vector.broadcast %cst_35 : f32 to vector<24x256xf32>
    %54 = arith.maximumf %52, %53 : vector<24x256xf32>
    %cst_36 = arith.constant 0.000000e+00 : f32
    %55 = vector.broadcast %cst_36 : f32 to vector<24x256xf32>
    %56 = arith.minimumf %52, %55 : vector<24x256xf32>
    %57 = vector.broadcast %48 : vector<1x256xf32> to vector<24x256xf32>
    %58 = arith.mulf %57, %56 : vector<24x256xf32>
    %59 = arith.addf %54, %58 : vector<24x256xf32>
    %60 = vector.broadcast %49 : vector<1x256xf32> to vector<24x256xf32>
    %61 = arith.mulf %59, %60 : vector<24x256xf32>
    %62 = vector.broadcast %50 : vector<1x256xf32> to vector<24x256xf32>
    %63 = arith.addf %61, %62 : vector<24x256xf32>
    %64 = arith.truncf %63 : vector<24x256xf32> to vector<24x256xbf16>
    %c16_37 = arith.constant 16 : index
    %c0_38 = arith.constant 0 : index
    %65 = vector.load %arg10[%c16_37, %c0_38] : memref<43x256xbf16, #tpu.memory_space<vmem>>, vector<24x256xbf16>
    tpu.vector_store %arg10[%c16_37, %c0_38], %64 {strides = array<i32>} : memref<43x256xbf16, #tpu.memory_space<vmem>>, vector<24x256xbf16>,
    %c13_39 = arith.constant 13 : index
    %c0_40 = arith.constant 0 : index
    %66 = vector.load %arg10[%c13_39, %c0_40] : memref<43x256xbf16, #tpu.memory_space<vmem>>, vector<28x256xbf16>
    %c0_41 = arith.constant 0 : index
    %c0_42 = arith.constant 0 : index
    %c0_43 = arith.constant 0 : index
    %67 = vector.load %arg6[%c0_41, %c0_42, %c0_43] : memref<3x256x128xbf16, #tpu.memory_space<vmem>>, vector<1x256x128xbf16>
    %68 = vector.shape_cast %67 : vector<1x256x128xbf16> to vector<256x128xbf16>
    %cst_44 = arith.constant dense<0.000000e+00> : vector<28x128xf32>
    %69 = tpu.matmul %66, %68, %cst_44 {dimension_numbers = #tpu.dot_dimension_numbers<[1], [0], [0], [1], [0, 0, 1, 1], [], []>} : vector<28x256xbf16>, vector<256x128xbf16>, vector<28x128xf32> -> vector<28x128xf32>
    %c14_45 = arith.constant 14 : index
    %c0_46 = arith.constant 0 : index
    %70 = vector.load %arg10[%c14_45, %c0_46] : memref<43x256xbf16, #tpu.memory_space<vmem>>, vector<28x256xbf16>
    %c1_47 = arith.constant 1 : index
    %c0_48 = arith.constant 0 : index
    %c0_49 = arith.constant 0 : index
    %71 = vector.load %arg6[%c1_47, %c0_48, %c0_49] : memref<3x256x128xbf16, #tpu.memory_space<vmem>>, vector<1x256x128xbf16>
    %72 = vector.shape_cast %71 : vector<1x256x128xbf16> to vector<256x128xbf16>
    %cst_50 = arith.constant dense<0.000000e+00> : vector<28x128xf32>
    %73 = tpu.matmul %70, %72, %cst_50 {dimension_numbers = #tpu.dot_dimension_numbers<[1], [0], [0], [1], [0, 0, 1, 1], [], []>} : vector<28x256xbf16>, vector<256x128xbf16>, vector<28x128xf32> -> vector<28x128xf32>
    %74 = arith.addf %69, %73 : vector<28x128xf32>
    %c15_51 = arith.constant 15 : index
    %c0_52 = arith.constant 0 : index
    %75 = vector.load %arg10[%c15_51, %c0_52] : memref<43x256xbf16, #tpu.memory_space<vmem>>, vector<28x256xbf16>
    %c2_53 = arith.constant 2 : index
    %c0_54 = arith.constant 0 : index
    %c0_55 = arith.constant 0 : index
    %76 = vector.load %arg6[%c2_53, %c0_54, %c0_55] : memref<3x256x128xbf16, #tpu.memory_space<vmem>>, vector<1x256x128xbf16>
    %77 = vector.shape_cast %76 : vector<1x256x128xbf16> to vector<256x128xbf16>
    %cst_56 = arith.constant dense<0.000000e+00> : vector<28x128xf32>
    %78 = tpu.matmul %75, %77, %cst_56 {dimension_numbers = #tpu.dot_dimension_numbers<[1], [0], [0], [1], [0, 0, 1, 1], [], []>} : vector<28x256xbf16>, vector<256x128xbf16>, vector<28x128xf32> -> vector<28x128xf32>
    %79 = arith.addf %74, %78 : vector<28x128xf32>
    %c0_57 = arith.constant 0 : index
    %c0_58 = arith.constant 0 : index
    %80 = vector.load %arg7[%c0_57, %c0_58] : memref<1x128xf32, #tpu.memory_space<vmem>>, vector<1x128xf32>
    %81 = vector.broadcast %80 : vector<1x128xf32> to vector<28x128xf32>
    %82 = arith.addf %79, %81 : vector<28x128xf32>
    %c0_59 = arith.constant 0 : index
    %c0_60 = arith.constant 0 : index
    %c0_61 = arith.constant 0 : index
    %83 = vector.load %arg8[%c0_59, %c0_60, %c0_61] : memref<2x28x128xf32, #tpu.memory_space<vmem>>, vector<1x28x128xf32>
    %84 = vector.shape_cast %83 : vector<1x28x128xf32> to vector<28x128xf32>
    %85 = vector.shape_cast %82 : vector<28x128xf32> to vector<1x28x128xf32>
    tpu.vector_store %arg8[%c0_59, %c0_60, %c0_61], %85 {strides = array<i32>} : memref<2x28x128xf32, #tpu.memory_space<vmem>>, vector<1x28x128xf32>,
    %c1_62 = arith.constant 1 : index
    %c0_63 = arith.constant 0 : index
    %c0_64 = arith.constant 0 : index
    %86 = vector.load %arg1[%c1_62, %c0_63, %c0_64] : memref<2x20x192xbf16, #tpu.memory_space<vmem>>, vector<1x20x192xbf16>
    %87 = vector.shape_cast %86 : vector<1x20x192xbf16> to vector<20x192xbf16>
    %c0_65 = arith.constant 0 : index
    %c0_66 = arith.constant 0 : index
    %88 = vector.load %arg2[%c0_65, %c0_66] : memref<192x512xbf16, #tpu.memory_space<vmem>>, vector<192x512xbf16>
    %cst_67 = arith.constant dense<0.000000e+00> : vector<20x512xf32>
    %89 = tpu.matmul %87, %88, %cst_67 {dimension_numbers = #tpu.dot_dimension_numbers<[1], [0], [0], [1], [0, 0, 1, 1], [], []>} : vector<20x192xbf16>, vector<192x512xbf16>, vector<20x512xf32> -> vector<20x512xf32>
    %c0_68 = arith.constant 0 : index
    %c0_69 = arith.constant 0 : index
    %90 = vector.load %arg3[%c0_68, %c0_69] : memref<4x512xf32, #tpu.memory_space<vmem>>, vector<4x512xf32>
    %91 = vector.extract_strided_slice %90 {offsets = [0, 0], sizes = [1, 512], strides = [1, 1]} : vector<4x512xf32> to vector<1x512xf32>
    %92 = vector.extract_strided_slice %90 {offsets = [1, 0], sizes = [1, 512], strides = [1, 1]} : vector<4x512xf32> to vector<1x512xf32>
    %93 = vector.extract_strided_slice %90 {offsets = [2, 0], sizes = [1, 512], strides = [1, 1]} : vector<4x512xf32> to vector<1x512xf32>
    %94 = vector.extract_strided_slice %90 {offsets = [3, 0], sizes = [1, 512], strides = [1, 1]} : vector<4x512xf32> to vector<1x512xf32>
    %95 = vector.broadcast %91 : vector<1x512xf32> to vector<20x512xf32>
    %96 = arith.addf %89, %95 : vector<20x512xf32>
    %cst_70 = arith.constant 0.000000e+00 : f32
    %97 = vector.broadcast %cst_70 : f32 to vector<20x512xf32>
    %98 = arith.maximumf %96, %97 : vector<20x512xf32>
    %cst_71 = arith.constant 0.000000e+00 : f32
    %99 = vector.broadcast %cst_71 : f32 to vector<20x512xf32>
    %100 = arith.minimumf %96, %99 : vector<20x512xf32>
    %101 = vector.broadcast %92 : vector<1x512xf32> to vector<20x512xf32>
    %102 = arith.mulf %101, %100 : vector<20x512xf32>
    %103 = arith.addf %98, %102 : vector<20x512xf32>
    %104 = vector.broadcast %93 : vector<1x512xf32> to vector<20x512xf32>
    %105 = arith.mulf %103, %104 : vector<20x512xf32>
    %106 = vector.broadcast %94 : vector<1x512xf32> to vector<20x512xf32>
    %107 = arith.addf %105, %106 : vector<20x512xf32>
    %108 = arith.truncf %107 : vector<20x512xf32> to vector<20x512xbf16>
    %c16_72 = arith.constant 16 : index
    %c0_73 = arith.constant 0 : index
    %109 = vector.load %arg9[%c16_72, %c0_73] : memref<39x512xbf16, #tpu.memory_space<vmem>>, vector<20x512xbf16>
    tpu.vector_store %arg9[%c16_72, %c0_73], %108 {strides = array<i32>} : memref<39x512xbf16, #tpu.memory_space<vmem>>, vector<20x512xbf16>,
    %c13_74 = arith.constant 13 : index
    %c0_75 = arith.constant 0 : index
    %110 = vector.load %arg9[%c13_74, %c0_75] : memref<39x512xbf16, #tpu.memory_space<vmem>>, vector<24x512xbf16>
    %c0_76 = arith.constant 0 : index
    %c0_77 = arith.constant 0 : index
    %c0_78 = arith.constant 0 : index
    %111 = vector.load %arg4[%c0_76, %c0_77, %c0_78] : memref<3x512x256xbf16, #tpu.memory_space<vmem>>, vector<1x512x256xbf16>
    %112 = vector.shape_cast %111 : vector<1x512x256xbf16> to vector<512x256xbf16>
    %cst_79 = arith.constant dense<0.000000e+00> : vector<24x256xf32>
    %113 = tpu.matmul %110, %112, %cst_79 {dimension_numbers = #tpu.dot_dimension_numbers<[1], [0], [0], [1], [0, 0, 1, 1], [], []>} : vector<24x512xbf16>, vector<512x256xbf16>, vector<24x256xf32> -> vector<24x256xf32>
    %c14_80 = arith.constant 14 : index
    %c0_81 = arith.constant 0 : index
    %114 = vector.load %arg9[%c14_80, %c0_81] : memref<39x512xbf16, #tpu.memory_space<vmem>>, vector<24x512xbf16>
    %c1_82 = arith.constant 1 : index
    %c0_83 = arith.constant 0 : index
    %c0_84 = arith.constant 0 : index
    %115 = vector.load %arg4[%c1_82, %c0_83, %c0_84] : memref<3x512x256xbf16, #tpu.memory_space<vmem>>, vector<1x512x256xbf16>
    %116 = vector.shape_cast %115 : vector<1x512x256xbf16> to vector<512x256xbf16>
    %cst_85 = arith.constant dense<0.000000e+00> : vector<24x256xf32>
    %117 = tpu.matmul %114, %116, %cst_85 {dimension_numbers = #tpu.dot_dimension_numbers<[1], [0], [0], [1], [0, 0, 1, 1], [], []>} : vector<24x512xbf16>, vector<512x256xbf16>, vector<24x256xf32> -> vector<24x256xf32>
    %118 = arith.addf %113, %117 : vector<24x256xf32>
    %c15_86 = arith.constant 15 : index
    %c0_87 = arith.constant 0 : index
    %119 = vector.load %arg9[%c15_86, %c0_87] : memref<39x512xbf16, #tpu.memory_space<vmem>>, vector<24x512xbf16>
    %c2_88 = arith.constant 2 : index
    %c0_89 = arith.constant 0 : index
    %c0_90 = arith.constant 0 : index
    %120 = vector.load %arg4[%c2_88, %c0_89, %c0_90] : memref<3x512x256xbf16, #tpu.memory_space<vmem>>, vector<1x512x256xbf16>
    %121 = vector.shape_cast %120 : vector<1x512x256xbf16> to vector<512x256xbf16>
    %cst_91 = arith.constant dense<0.000000e+00> : vector<24x256xf32>
    %122 = tpu.matmul %119, %121, %cst_91 {dimension_numbers = #tpu.dot_dimension_numbers<[1], [0], [0], [1], [0, 0, 1, 1], [], []>} : vector<24x512xbf16>, vector<512x256xbf16>, vector<24x256xf32> -> vector<24x256xf32>
    %123 = arith.addf %118, %122 : vector<24x256xf32>
    %c0_92 = arith.constant 0 : index
    %c0_93 = arith.constant 0 : index
    %124 = vector.load %arg5[%c0_92, %c0_93] : memref<4x256xf32, #tpu.memory_space<vmem>>, vector<4x256xf32>
    %125 = vector.extract_strided_slice %124 {offsets = [0, 0], sizes = [1, 256], strides = [1, 1]} : vector<4x256xf32> to vector<1x256xf32>
    %126 = vector.extract_strided_slice %124 {offsets = [1, 0], sizes = [1, 256], strides = [1, 1]} : vector<4x256xf32> to vector<1x256xf32>
    %127 = vector.extract_strided_slice %124 {offsets = [2, 0], sizes = [1, 256], strides = [1, 1]} : vector<4x256xf32> to vector<1x256xf32>
    %128 = vector.extract_strided_slice %124 {offsets = [3, 0], sizes = [1, 256], strides = [1, 1]} : vector<4x256xf32> to vector<1x256xf32>
    %129 = vector.broadcast %125 : vector<1x256xf32> to vector<24x256xf32>
    %130 = arith.addf %123, %129 : vector<24x256xf32>
    %cst_94 = arith.constant 0.000000e+00 : f32
    %131 = vector.broadcast %cst_94 : f32 to vector<24x256xf32>
    %132 = arith.maximumf %130, %131 : vector<24x256xf32>
    %cst_95 = arith.constant 0.000000e+00 : f32
    %133 = vector.broadcast %cst_95 : f32 to vector<24x256xf32>
    %134 = arith.minimumf %130, %133 : vector<24x256xf32>
    %135 = vector.broadcast %126 : vector<1x256xf32> to vector<24x256xf32>
    %136 = arith.mulf %135, %134 : vector<24x256xf32>
    %137 = arith.addf %132, %136 : vector<24x256xf32>
    %138 = vector.broadcast %127 : vector<1x256xf32> to vector<24x256xf32>
    %139 = arith.mulf %137, %138 : vector<24x256xf32>
    %140 = vector.broadcast %128 : vector<1x256xf32> to vector<24x256xf32>
    %141 = arith.addf %139, %140 : vector<24x256xf32>
    %142 = arith.truncf %141 : vector<24x256xf32> to vector<24x256xbf16>
    %c16_96 = arith.constant 16 : index
    %c0_97 = arith.constant 0 : index
    %143 = vector.load %arg10[%c16_96, %c0_97] : memref<43x256xbf16, #tpu.memory_space<vmem>>, vector<24x256xbf16>
    tpu.vector_store %arg10[%c16_96, %c0_97], %142 {strides = array<i32>} : memref<43x256xbf16, #tpu.memory_space<vmem>>, vector<24x256xbf16>,
    %c13_98 = arith.constant 13 : index
    %c0_99 = arith.constant 0 : index
    %144 = vector.load %arg10[%c13_98, %c0_99] : memref<43x256xbf16, #tpu.memory_space<vmem>>, vector<28x256xbf16>
    %c0_100 = arith.constant 0 : index
    %c0_101 = arith.constant 0 : index
    %c0_102 = arith.constant 0 : index
    %145 = vector.load %arg6[%c0_100, %c0_101, %c0_102] : memref<3x256x128xbf16, #tpu.memory_space<vmem>>, vector<1x256x128xbf16>
    %146 = vector.shape_cast %145 : vector<1x256x128xbf16> to vector<256x128xbf16>
    %cst_103 = arith.constant dense<0.000000e+00> : vector<28x128xf32>
    %147 = tpu.matmul %144, %146, %cst_103 {dimension_numbers = #tpu.dot_dimension_numbers<[1], [0], [0], [1], [0, 0, 1, 1], [], []>} : vector<28x256xbf16>, vector<256x128xbf16>, vector<28x128xf32> -> vector<28x128xf32>
    %c14_104 = arith.constant 14 : index
    %c0_105 = arith.constant 0 : index
    %148 = vector.load %arg10[%c14_104, %c0_105] : memref<43x256xbf16, #tpu.memory_space<vmem>>, vector<28x256xbf16>
    %c1_106 = arith.constant 1 : index
    %c0_107 = arith.constant 0 : index
    %c0_108 = arith.constant 0 : index
    %149 = vector.load %arg6[%c1_106, %c0_107, %c0_108] : memref<3x256x128xbf16, #tpu.memory_space<vmem>>, vector<1x256x128xbf16>
    %150 = vector.shape_cast %149 : vector<1x256x128xbf16> to vector<256x128xbf16>
    %cst_109 = arith.constant dense<0.000000e+00> : vector<28x128xf32>
    %151 = tpu.matmul %148, %150, %cst_109 {dimension_numbers = #tpu.dot_dimension_numbers<[1], [0], [0], [1], [0, 0, 1, 1], [], []>} : vector<28x256xbf16>, vector<256x128xbf16>, vector<28x128xf32> -> vector<28x128xf32>
    %152 = arith.addf %147, %151 : vector<28x128xf32>
    %c15_110 = arith.constant 15 : index
    %c0_111 = arith.constant 0 : index
    %153 = vector.load %arg10[%c15_110, %c0_111] : memref<43x256xbf16, #tpu.memory_space<vmem>>, vector<28x256xbf16>
    %c2_112 = arith.constant 2 : index
    %c0_113 = arith.constant 0 : index
    %c0_114 = arith.constant 0 : index
    %154 = vector.load %arg6[%c2_112, %c0_113, %c0_114] : memref<3x256x128xbf16, #tpu.memory_space<vmem>>, vector<1x256x128xbf16>
    %155 = vector.shape_cast %154 : vector<1x256x128xbf16> to vector<256x128xbf16>
    %cst_115 = arith.constant dense<0.000000e+00> : vector<28x128xf32>
    %156 = tpu.matmul %153, %155, %cst_115 {dimension_numbers = #tpu.dot_dimension_numbers<[1], [0], [0], [1], [0, 0, 1, 1], [], []>} : vector<28x256xbf16>, vector<256x128xbf16>, vector<28x128xf32> -> vector<28x128xf32>
    %157 = arith.addf %152, %156 : vector<28x128xf32>
    %c0_116 = arith.constant 0 : index
    %c0_117 = arith.constant 0 : index
    %158 = vector.load %arg7[%c0_116, %c0_117] : memref<1x128xf32, #tpu.memory_space<vmem>>, vector<1x128xf32>
    %159 = vector.broadcast %158 : vector<1x128xf32> to vector<28x128xf32>
    %160 = arith.addf %157, %159 : vector<28x128xf32>
    %c1_118 = arith.constant 1 : index
    %c0_119 = arith.constant 0 : index
    %c0_120 = arith.constant 0 : index
    %161 = vector.load %arg8[%c1_118, %c0_119, %c0_120] : memref<2x28x128xf32, #tpu.memory_space<vmem>>, vector<1x28x128xf32>
    %162 = vector.shape_cast %161 : vector<1x28x128xf32> to vector<28x128xf32>
    %163 = vector.shape_cast %160 : vector<28x128xf32> to vector<1x28x128xf32>
    tpu.vector_store %arg8[%c1_118, %c0_119, %c0_120], %163 {strides = array<i32>} : memref<2x28x128xf32, #tpu.memory_space<vmem>>, vector<1x28x128xf32>,
    return
  }
  func.func @transform_0(%arg0: i32) -> (i32, i32, i32) {
    %c0_i32 = arith.constant 0 : i32
    %c0_i32_0 = arith.constant 0 : i32
    %c0_i32_1 = arith.constant 0 : i32
    return %arg0, %c0_i32, %c0_i32_0 : i32, i32, i32
  }
  func.func @transform_1(%arg0: i32) -> (i32, i32) {
    %c0_i32 = arith.constant 0 : i32
    %c0_i32_0 = arith.constant 0 : i32
    %c0_i32_1 = arith.constant 0 : i32
    return %c0_i32, %c0_i32_0 : i32, i32
  }
  func.func @transform_2(%arg0: i32) -> (i32, i32) {
    %c0_i32 = arith.constant 0 : i32
    %c0_i32_0 = arith.constant 0 : i32
    %c0_i32_1 = arith.constant 0 : i32
    return %c0_i32, %c0_i32_0 : i32, i32
  }
  func.func @transform_3(%arg0: i32) -> (i32, i32, i32) {
    %c0_i32 = arith.constant 0 : i32
    %c0_i32_0 = arith.constant 0 : i32
    %c0_i32_1 = arith.constant 0 : i32
    %c0_i32_2 = arith.constant 0 : i32
    return %c0_i32, %c0_i32_0, %c0_i32_1 : i32, i32, i32
  }
  func.func @transform_4(%arg0: i32) -> (i32, i32) {
    %c0_i32 = arith.constant 0 : i32
    %c0_i32_0 = arith.constant 0 : i32
    %c0_i32_1 = arith.constant 0 : i32
    return %c0_i32, %c0_i32_0 : i32, i32
  }
  func.func @transform_5(%arg0: i32) -> (i32, i32, i32) {
    %c0_i32 = arith.constant 0 : i32
    %c0_i32_0 = arith.constant 0 : i32
    %c0_i32_1 = arith.constant 0 : i32
    %c0_i32_2 = arith.constant 0 : i32
    return %c0_i32, %c0_i32_0, %c0_i32_1 : i32, i32, i32
  }
  func.func @transform_6(%arg0: i32) -> (i32, i32) {
    %c0_i32 = arith.constant 0 : i32
    %c0_i32_0 = arith.constant 0 : i32
    %c0_i32_1 = arith.constant 0 : i32
    return %c0_i32, %c0_i32_0 : i32, i32
  }
  func.func @transform_7(%arg0: i32) -> (i32, i32, i32) {
    %c0_i32 = arith.constant 0 : i32
    %c0_i32_0 = arith.constant 0 : i32
    %c0_i32_1 = arith.constant 0 : i32
    return %arg0, %c0_i32, %c0_i32_0 : i32, i32, i32
  }
}

</mosaic_0001>

<llo_original>
// kernel: tpu_custom_call.1
$region0: #{tpu_custom_call.1}
  #allocation0 [shape = 'u32[]', space=smem, size = 0x4, offset = 0x4, fixed_abs, tag = 'smem constant byte address 0x4 - core index']
  #allocation1 [shape = 'u32[144,128]{1,0:T(1,128)}', space=vmem, size = 0x12000, scoped, tag = 'internal scratch']
  #allocation2 [shape = 'bf16[39,512]{1,0:T(8,128)(2,1)}', space=vmem, size = 0xa000, scoped, tag = 'scratch operand']
  #allocation3 [shape = 'bf16[43,256]{1,0:T(8,128)(2,1)}', space=vmem, size = 0x6000, scoped, tag = 'scratch operand']
  %s0 = inlined_call_operand.vmem [shape: bf16[2,20,192], index: 0, kind: input, shape index: {}]
  %s1 = inlined_call_operand.hbm [shape: bf16[192,512], index: 1, kind: input, shape index: {}]
  %s2 = inlined_call_operand.vmem [shape: f32[4,512], index: 2, kind: input, shape index: {}]
  %s3 = inlined_call_operand.hbm [shape: bf16[3,512,256], index: 3, kind: input, shape index: {}]
  %s4 = inlined_call_operand.vmem [shape: f32[4,256], index: 4, kind: input, shape index: {}]
  %s5 = inlined_call_operand.hbm [shape: bf16[3,256,128], index: 5, kind: input, shape index: {}]
  %s6 = inlined_call_operand.vmem [shape: f32[1,128], index: 6, kind: input, shape index: {}]
  %s7 = inlined_call_operand.vmem [shape: f32[2,28,128], index: 7, kind: output, shape index: {}]
  %s8 = sld [smem:[#allocation0]]
  $region50: #{tpu_custom_call.1} parent=0
    _
  %s10 = ssub.s32 1, %s8
  %s11 = scalar_select 0, %s10, %s8
  $region1: #{tpu_custom_call.1} parent=0
    #allocation4 [shape = 'u8[196608]{0}', space=vmem, size = 0x30000, scoped, tag = 'input window, operand 1, single buffered']
    #allocation5 [shape = 's32[1]{0}', space=sflag, size = 0x4, scoped, tag = 'scoped memory for tpu_custom_call.1']
    #allocation6 [shape = 'u8[786432]{0}', space=vmem, size = 0xc0000, scoped, tag = 'input window, operand 3, single buffered']
    #allocation7 [shape = 's32[1]{0}', space=sflag, size = 0x4, scoped, tag = 'scoped memory for tpu_custom_call.1']
    #allocation8 [shape = 'u8[196608]{0}', space=vmem, size = 0x30000, scoped, tag = 'input window, operand 5, single buffered']
    %12 = vsyncpa [#allocation5], 0
    %13 = vsyncpa [#allocation7], 0
    // Predicated region
    $region2: #{tpu_custom_call.1} parent=1 // pred_check
      _
    $region3: #{tpu_custom_call.1} parent=1 // pred_check_branch
      %15 = sbr.rel (0) target = $region5
    $region4: #{tpu_custom_call.1} parent=1 // pred_region
      _
    $region5: #{tpu_custom_call.1} parent=1 // pred_fallthru
      _
    // Predicated region
    $region6: #{tpu_custom_call.1} parent=1 // pred_check
      _
    $region7: #{tpu_custom_call.1} parent=1 // pred_check_branch
      %17 = sbr.rel (0) target = $region9
    $region8: #{tpu_custom_call.1} parent=1 // pred_region
      %s19 = ssub.s32 6144, 6144
      %20 = vsyncadd [#allocation5], %s19
      %s21 = sshll.u32 [#allocation4], 4
      %s22 = int_to_ptr.vmem [resolvable:$true] %s21
      %27 = dma.hbm_to_vmem [thread:$0]  %s1, 6144, %s22, [#allocation5], 256, 256, 16
    $region9: #{tpu_custom_call.1} parent=1 // pred_fallthru
      _
    // Predicated region
    $region10: #{tpu_custom_call.1} parent=1 // pred_check
      _
    $region11: #{tpu_custom_call.1} parent=1 // pred_check_branch
      %29 = sbr.rel (0) target = $region13
    $region12: #{tpu_custom_call.1} parent=1 // pred_region
      _
    $region13: #{tpu_custom_call.1} parent=1 // pred_fallthru
      _
    // Predicated region
    $region14: #{tpu_custom_call.1} parent=1 // pred_check
      _
    $region15: #{tpu_custom_call.1} parent=1 // pred_check_branch
      %31 = sbr.rel (0) target = $region17
    $region16: #{tpu_custom_call.1} parent=1 // pred_region
      %s33 = ssub.s32 24576, 24576
      %34 = vsyncadd [#allocation7], %s33
      %s35 = sshll.u32 [#allocation6], 4
      %s36 = int_to_ptr.vmem [resolvable:$true] %s35
      %41 = dma.hbm_to_vmem [thread:$0]  %s3, 24576, %s36, [#allocation7], 128, 128, 8
    $region17: #{tpu_custom_call.1} parent=1 // pred_fallthru
      _
    // Predicated region
    $region18: #{tpu_custom_call.1} parent=1 // pred_check
      _
    $region19: #{tpu_custom_call.1} parent=1 // pred_check_branch
      %43 = sbr.rel (0) target = $region21
    $region20: #{tpu_custom_call.1} parent=1 // pred_region
      _
    $region21: #{tpu_custom_call.1} parent=1 // pred_fallthru
      _
    // Predicated region
    $region22: #{tpu_custom_call.1} parent=1 // pred_check
      _
    $region23: #{tpu_custom_call.1} parent=1 // pred_check_branch
      %45 = sbr.rel (0) target = $region25
    $region24: #{tpu_custom_call.1} parent=1 // pred_region
      %s47 = ssub.s32 6144, 6144
      %48 = vsyncadd [#allocation7], %s47
      %s49 = sshll.u32 [#allocation8], 4
      %s50 = int_to_ptr.vmem [resolvable:$true] %s49
      %55 = dma.hbm_to_vmem [thread:$0]  %s5, 6144, %s50, [#allocation7], 64, 64, 4
    $region25: #{tpu_custom_call.1} parent=1 // pred_fallthru
      _
    // Predicated region
    $region26: #{tpu_custom_call.1} parent=1 // pred_check
      _
    $region27: #{tpu_custom_call.1} parent=1 // pred_check_branch
      %57 = sbr.rel (0) target = $region29
    $region28: #{tpu_custom_call.1} parent=1 // pred_region
      _
    $region29: #{tpu_custom_call.1} parent=1 // pred_fallthru
      _
    // Predicated region
    $region30: #{tpu_custom_call.1} parent=1 // pred_check
      _
    $region31: #{tpu_custom_call.1} parent=1 // pred_check_branch
      %59 = sbr.rel (0) target = $region33
    $region32: #{tpu_custom_call.1} parent=1 // pred_region
      %60 = dma.done [#allocation5], 6144
    $region33: #{tpu_custom_call.1} parent=1 // pred_fallthru
      _
    // Predicated region
    $region34: #{tpu_custom_call.1} parent=1 // pred_check
      _
    $region35: #{tpu_custom_call.1} parent=1 // pred_check_branch
      %62 = sbr.rel (0) target = $region37
    $region36: #{tpu_custom_call.1} parent=1 // pred_region
      %63 = dma.done [#allocation7], 24576
    $region37: #{tpu_custom_call.1} parent=1 // pred_fallthru
      _
    // Predicated region
    $region38: #{tpu_custom_call.1} parent=1 // pred_check
      _
    $region39: #{tpu_custom_call.1} parent=1 // pred_check_branch
      %65 = sbr.rel (0) target = $region41
    $region40: #{tpu_custom_call.1} parent=1 // pred_region
      %66 = dma.done [#allocation7], 6144
    $region41: #{tpu_custom_call.1} parent=1 // pred_fallthru
      _
    %68 = vst [vmem:[#allocation2] sm:$0xff] 0
    %69 = vst [vmem:[#allocation2 + $0x8] sm:$0xff] 0
    %70 = vst [vmem:[#allocation2 + $0x10] sm:$0xff] 0
    %71 = vst [vmem:[#allocation2 + $0x18] sm:$0xff] 0
    %vm72 = vcmask 1043456
    %vm73 = vsmask.f32 3328
    %vm74 = vmand %vm72, %vm73
    %vm75 = vcmask 1047556
    %vm76 = vsmask.f32 7424
    %vm77 = vmand %vm75, %vm76
    %vm78 = vmor %vm77, %vm74
    %v79 = vld [vmem:[#allocation2 + $0x40] sm:$0xff]
    %v80 = vsel %vm78, 0, %v79
    %81 = vst [vmem:[#allocation2 + $0x40] sm:$0xff] %v80
    %v82 = vld [vmem:[#allocation2 + $0x48] sm:$0xff]
    %v83 = vsel %vm78, 0, %v82
    %84 = vst [vmem:[#allocation2 + $0x48] sm:$0xff] %v83
    %85 = vst [vmem:[#allocation3] sm:$0xff] 0
    %86 = vst [vmem:[#allocation3 + $0x8] sm:$0xff] 0
    %87 = vst [vmem:[#allocation3 + $0x20] sm:$0xff] 0
    %vm88 = vcmask 1041408
    %vm89 = vsmask.f32 1280
    %vm90 = vmand %vm88, %vm89
    %vm91 = vcmask 1045508
    %vm92 = vsmask.f32 5376
    %vm93 = vmand %vm91, %vm92
    %vm94 = vmor %vm93, %vm90
    %v95 = vld [vmem:[#allocation3 + $0x28] sm:$0x33]
    %v96 = vsel %vm94, 0, %v95
    %97 = vst [vmem:[#allocation3 + $0x28] sm:$0x33] %v96
    %v98 = vld [vmem:[%s0] sm:$0xff]
    %v99 = vld [vmem:[%s0 + $0x8] sm:$0xff]
    %v100 = vld [vmem:[%s0 + $0x10] sm:$0x33]
    %v101 = vld [vmem:[#allocation4] sm:$0xff]
    %v102 = vld [vmem:[#allocation4 + $0x8] sm:$0xff]
    %v103 = vld [vmem:[#allocation4 + $0x10] sm:$0xff]
    %v104 = vld [vmem:[#allocation4 + $0x18] sm:$0xff]
    %v105 = vld [vmem:[#allocation4 + $0x20] sm:$0xff]
    %v106 = vld [vmem:[#allocation4 + $0x28] sm:$0xff]
    %v107 = vld [vmem:[#allocation4 + $0x30] sm:$0xff]
    %v108 = vld [vmem:[#allocation4 + $0x38] sm:$0xff]
    %v109 = vld [vmem:[#allocation4 + $0x40] sm:$0xff]
    %v110 = vld [vmem:[#allocation4 + $0x48] sm:$0xff]
    %v111 = vld [vmem:[#allocation4 + $0x50] sm:$0xff]
    %v112 = vld [vmem:[#allocation4 + $0x58] sm:$0xff]
    %v113 = vld [vmem:[#allocation4 + $0x60] sm:$0xff]
    %v114 = vld [vmem:[#allocation4 + $0x68] sm:$0xff]
    %v115 = vld [vmem:[#allocation4 + $0x70] sm:$0xff]
    %v116 = vld [vmem:[#allocation4 + $0x78] sm:$0xff]
    %v117 = vld [vmem:[#allocation4 + $0x80] sm:$0xff]
    %v118 = vld [vmem:[#allocation4 + $0x88] sm:$0xff]
    %v119 = vld [vmem:[#allocation4 + $0x90] sm:$0xff]
    %v120 = vld [vmem:[#allocation4 + $0x98] sm:$0xff]
    %v121 = vld [vmem:[#allocation4 + $0xa0] sm:$0xff]
    %v122 = vld [vmem:[#allocation4 + $0xa8] sm:$0xff]
    %v123 = vld [vmem:[#allocation4 + $0xb0] sm:$0xff]
    %v124 = vld [vmem:[#allocation4 + $0xb8] sm:$0xff]
    %v125 = vld [vmem:[#allocation4 + $0xc0] sm:$0xff]
    %v126 = vld [vmem:[#allocation4 + $0xc8] sm:$0xff]
    %v127 = vld [vmem:[#allocation4 + $0xd0] sm:$0xff]
    %v128 = vld [vmem:[#allocation4 + $0xd8] sm:$0xff]
    %v129 = vld [vmem:[#allocation4 + $0xe0] sm:$0xff]
    %v130 = vld [vmem:[#allocation4 + $0xe8] sm:$0xff]
    %v131 = vld [vmem:[#allocation4 + $0xf0] sm:$0xff]
    %v132 = vld [vmem:[#allocation4 + $0xf8] sm:$0xff]
    %v133 = vld [vmem:[#allocation4 + $0x100] sm:$0xff]
    %v134 = vld [vmem:[#allocation4 + $0x108] sm:$0xff]
    %v135 = vld [vmem:[#allocation4 + $0x110] sm:$0xff]
    %v136 = vld [vmem:[#allocation4 + $0x118] sm:$0xff]
    %v137 = vld [vmem:[#allocation4 + $0x120] sm:$0xff]
    %v138 = vld [vmem:[#allocation4 + $0x128] sm:$0xff]
    %v139 = vld [vmem:[#allocation4 + $0x130] sm:$0xff]
    %v140 = vld [vmem:[#allocation4 + $0x138] sm:$0xff]
    %v141 = vld [vmem:[#allocation4 + $0x140] sm:$0xff]
    %v142 = vld [vmem:[#allocation4 + $0x148] sm:$0xff]
    %v143 = vld [vmem:[#allocation4 + $0x150] sm:$0xff]
    %v144 = vld [vmem:[#allocation4 + $0x158] sm:$0xff]
    %v145 = vld [vmem:[#allocation4 + $0x160] sm:$0xff]
    %v146 = vld [vmem:[#allocation4 + $0x168] sm:$0xff]
    %v147 = vld [vmem:[#allocation4 + $0x170] sm:$0xff]
    %v148 = vld [vmem:[#allocation4 + $0x178] sm:$0xff]
    %v149 = vld [vmem:[%s2] sm:$0xff]
    %v150 = vld [vmem:[%s2 + $0x8] sm:$0xff]
    %v153 = vlaneseq
    %v154 = vshrl.u32 %v153, 7
    %v155 = vsub.s32 0, %v154
    %v156 = vrot.slane %v149, %v155
    %v157 = vlaneseq
    %v158 = vshrl.u32 %v157, 7
    %v159 = vsub.s32 4, %v158
    %v160 = vrot.slane %v149, %v159
    %v161 = vlaneseq
    %v162 = vshrl.u32 %v161, 7
    %v163 = vsub.s32 0, %v162
    %v164 = vrot.slane %v150, %v163
    %v165 = vlaneseq
    %v166 = vshrl.u32 %v165, 7
    %v167 = vsub.s32 4, %v166
    %v168 = vrot.slane %v150, %v167
    %v173 = vlaneseq
    %v174 = vshrl.u32 %v173, 7
    %v175 = vsub.s32 0, %v174
    %v176 = vrot.slane %v156, %v175
    %v177 = vlaneseq
    %v178 = vshrl.u32 %v177, 7
    %v179 = vsub.s32 0, %v178
    %v180 = vrot.slane %v160, %v179
    %v181 = vlaneseq
    %v182 = vshrl.u32 %v181, 7
    %v183 = vsub.s32 0, %v182
    %v184 = vrot.slane %v164, %v183
    %v185 = vlaneseq
    %v186 = vshrl.u32 %v185, 7
    %v187 = vsub.s32 0, %v186
    %v188 = vrot.slane %v168, %v187
    %v192 = vunpack.c.l.b16 %v98
    %v193 = vunpack.c.h.b16 %v98
    %v194 = vunpack.c.l.b16 %v99
    %v195 = vunpack.c.h.b16 %v99
    %v196 = vunpack.c.l.b16 %v100
    %v197 = vunpack.c.h.b16 %v100
    %v198 = vpack.c.b16 %v194, %v192
    %v199 = vpack.c.b16 %v195, %v193
    %v200 = vpack.c.b16 %v196, %v196
    %v201 = vpack.c.b16 %v197, %v197
    %v252 = vunpack.c.l.b16 %v101
    %v253 = vunpack.c.h.b16 %v101
    %v254 = vunpack.c.l.b16 %v102
    %v255 = vunpack.c.h.b16 %v102
    %v256 = vunpack.c.l.b16 %v103
    %v257 = vunpack.c.h.b16 %v103
    %v258 = vunpack.c.l.b16 %v104
    %v259 = vunpack.c.h.b16 %v104
    %v260 = vunpack.c.l.b16 %v105
    %v261 = vunpack.c.h.b16 %v105
    %v262 = vunpack.c.l.b16 %v106
    %v263 = vunpack.c.h.b16 %v106
    %v264 = vunpack.c.l.b16 %v107
    %v265 = vunpack.c.h.b16 %v107
    %v266 = vunpack.c.l.b16 %v108
    %v267 = vunpack.c.h.b16 %v108
    %v268 = vunpack.c.l.b16 %v109
    %v269 = vunpack.c.h.b16 %v109
    %v270 = vunpack.c.l.b16 %v110
    %v271 = vunpack.c.h.b16 %v110
    %v272 = vunpack.c.l.b16 %v111
    %v273 = vunpack.c.h.b16 %v111
    %v274 = vunpack.c.l.b16 %v112
    %v275 = vunpack.c.h.b16 %v112
    %v276 = vunpack.c.l.b16 %v113
    %v277 = vunpack.c.h.b16 %v113
    %v278 = vunpack.c.l.b16 %v114
    %v279 = vunpack.c.h.b16 %v114
    %v280 = vunpack.c.l.b16 %v115
    %v281 = vunpack.c.h.b16 %v115
    %v282 = vunpack.c.l.b16 %v116
    %v283 = vunpack.c.h.b16 %v116
    %v284 = vunpack.c.l.b16 %v117
    %v285 = vunpack.c.h.b16 %v117
    %v286 = vunpack.c.l.b16 %v118
    %v287 = vunpack.c.h.b16 %v118
    %v288 = vunpack.c.l.b16 %v119
    %v289 = vunpack.c.h.b16 %v119
    %v290 = vunpack.c.l.b16 %v120
    %v291 = vunpack.c.h.b16 %v120
    %v292 = vunpack.c.l.b16 %v121
    %v293 = vunpack.c.h.b16 %v121
    %v294 = vunpack.c.l.b16 %v122
    %v295 = vunpack.c.h.b16 %v122
    %v296 = vunpack.c.l.b16 %v123
    %v297 = vunpack.c.h.b16 %v123
    %v298 = vunpack.c.l.b16 %v124
    %v299 = vunpack.c.h.b16 %v124
    %v300 = vunpack.c.l.b16 %v125
    %v301 = vunpack.c.h.b16 %v125
    %v302 = vunpack.c.l.b16 %v126
    %v303 = vunpack.c.h.b16 %v126
    %v304 = vunpack.c.l.b16 %v127
    %v305 = vunpack.c.h.b16 %v127
    %v306 = vunpack.c.l.b16 %v128
    %v307 = vunpack.c.h.b16 %v128
    %v308 = vunpack.c.l.b16 %v129
    %v309 = vunpack.c.h.b16 %v129
    %v310 = vunpack.c.l.b16 %v130
    %v311 = vunpack.c.h.b16 %v130
    %v312 = vunpack.c.l.b16 %v131
    %v313 = vunpack.c.h.b16 %v131
    %v314 = vunpack.c.l.b16 %v132
    %v315 = vunpack.c.h.b16 %v132
    %v316 = vunpack.c.l.b16 %v133
    %v317 = vunpack.c.h.b16 %v133
    %v318 = vunpack.c.l.b16 %v134
    %v319 = vunpack.c.h.b16 %v134
    %v320 = vunpack.c.l.b16 %v135
    %v321 = vunpack.c.h.b16 %v135
    %v322 = vunpack.c.l.b16 %v136
    %v323 = vunpack.c.h.b16 %v136
    %v324 = vunpack.c.l.b16 %v137
    %v325 = vunpack.c.h.b16 %v137
    %v326 = vunpack.c.l.b16 %v138
    %v327 = vunpack.c.h.b16 %v138
    %v328 = vunpack.c.l.b16 %v139
    %v329 = vunpack.c.h.b16 %v139
    %v330 = vunpack.c.l.b16 %v140
    %v331 = vunpack.c.h.b16 %v140
    %v332 = vunpack.c.l.b16 %v141
    %v333 = vunpack.c.h.b16 %v141
    %v334 = vunpack.c.l.b16 %v142
    %v335 = vunpack.c.h.b16 %v142
    %v336 = vunpack.c.l.b16 %v143
    %v337 = vunpack.c.h.b16 %v143
    %v338 = vunpack.c.l.b16 %v144
    %v339 = vunpack.c.h.b16 %v144
    %v340 = vunpack.c.l.b16 %v145
    %v341 = vunpack.c.h.b16 %v145
    %v342 = vunpack.c.l.b16 %v146
    %v343 = vunpack.c.h.b16 %v146
    %v344 = vunpack.c.l.b16 %v147
    %v345 = vunpack.c.h.b16 %v147
    %v346 = vunpack.c.l.b16 %v148
    %v347 = vunpack.c.h.b16 %v148
    %v348 = vpack.c.b16 %v256, %v252
    %v349 = vpack.c.b16 %v257, %v253
    %v350 = vpack.c.b16 %v258, %v254
    %v351 = vpack.c.b16 %v259, %v255
    %v352 = vpack.c.b16 %v264, %v260
    %v353 = vpack.c.b16 %v265, %v261
    %v354 = vpack.c.b16 %v266, %v262
    %v355 = vpack.c.b16 %v267, %v263
    %v356 = vpack.c.b16 %v272, %v268
    %v357 = vpack.c.b16 %v273, %v269
    %v358 = vpack.c.b16 %v274, %v270
    %v359 = vpack.c.b16 %v275, %v271
    %v360 = vpack.c.b16 %v280, %v276
    %v361 = vpack.c.b16 %v281, %v277
    %v362 = vpack.c.b16 %v282, %v278
    %v363 = vpack.c.b16 %v283, %v279
    %v364 = vpack.c.b16 %v288, %v284
    %v365 = vpack.c.b16 %v289, %v285
    %v366 = vpack.c.b16 %v290, %v286
    %v367 = vpack.c.b16 %v291, %v287
    %v368 = vpack.c.b16 %v296, %v292
    %v369 = vpack.c.b16 %v297, %v293
    %v370 = vpack.c.b16 %v298, %v294
    %v371 = vpack.c.b16 %v299, %v295
    %v372 = vpack.c.b16 %v304, %v300
    %v373 = vpack.c.b16 %v305, %v301
    %v374 = vpack.c.b16 %v306, %v302
    %v375 = vpack.c.b16 %v307, %v303
    %v376 = vpack.c.b16 %v312, %v308
    %v377 = vpack.c.b16 %v313, %v309
    %v378 = vpack.c.b16 %v314, %v310
    %v379 = vpack.c.b16 %v315, %v311
    %v380 = vpack.c.b16 %v320, %v316
    %v381 = vpack.c.b16 %v321, %v317
    %v382 = vpack.c.b16 %v322, %v318
    %v383 = vpack.c.b16 %v323, %v319
    %v384 = vpack.c.b16 %v328, %v324
    %v385 = vpack.c.b16 %v329, %v325
    %v386 = vpack.c.b16 %v330, %v326
    %v387 = vpack.c.b16 %v331, %v327
    %v388 = vpack.c.b16 %v336, %v332
    %v389 = vpack.c.b16 %v337, %v333
    %v390 = vpack.c.b16 %v338, %v334
    %v391 = vpack.c.b16 %v339, %v335
    %v392 = vpack.c.b16 %v344, %v340
    %v393 = vpack.c.b16 %v345, %v341
    %v394 = vpack.c.b16 %v346, %v342
    %v395 = vpack.c.b16 %v347, %v343
    %vm444 = vcmask 523264
    %v446 = vsel %vm444, %v199, 0
    %v449 = vsel %vm444, %v201, 0
    %451 = vmatprep.subr.bf16.mxu0 %v349
    %452 = vmatpush1.bf16.msra.mxu0 %v348
    %453 = vmatprep.subr.bf16.mxu0 %v353
    %454 = vmatpush1.bf16.msra.mxu0 %v352
    %455 = vmatprep.subr.bf16.mxu0 %v357
    %456 = vmatpush1.bf16.msra.mxu0 %v356
    %457 = vmatprep.subr.bf16.mxu0 %v361
    %458 = vmatpush1.bf16.msra.mxu0 %v360
    %459 = vmatprep.subr.bf16.mxu0 %v365
    %460 = vmatpush1.bf16.msra.mxu0 %v364
    %461 = vmatprep.subr.bf16.mxu0 %v369
    %462 = vmatpush1.bf16.msra.mxu0 %v368
    %463 = vmatprep.subr.bf16.mxu0 %v373
    %464 = vmatpush1.bf16.msra.mxu0 %v372
    %465 = vmatprep.subr.bf16.mxu0 %v377
    %466 = vmatpush1.bf16.msra.mxu0 %v376
    %467 = vmatprep.subr.bf16.mxu0 %v381
    %468 = vmatpush1.bf16.msra.mxu0 %v380
    %469 = vmatprep.subr.bf16.mxu0 %v385
    %470 = vmatpush1.bf16.msra.mxu0 %v384
    %471 = vmatprep.subr.bf16.mxu0 %v389
    %472 = vmatpush1.bf16.msra.mxu0 %v388
    %473 = vmatprep.subr.bf16.mxu0 %v393
    %474 = vmatpush1.bf16.msra.mxu0 %v392
    %475 = vmatprep.subr.bf16.mxu0 0
    %476 = vmatpush1.bf16.msra.mxu0 0
    %477 = vmatprep.subr.bf16.mxu0 0
    %478 = vmatpush1.bf16.msra.mxu0 0
    %479 = vmatprep.subr.bf16.mxu0 0
    %480 = vmatpush1.bf16.msra.mxu0 0
    %481 = vmatprep.subr.bf16.mxu0 0
    %482 = vmatpush1.bf16.msra.mxu0 0
    %483 = vmatprep.mubr.bf16.mxu0 %v446
    %484 = vmatmul.mubr.bf16.gmra.mrb[0].mxu0 %v198
    %v485 = vpop.f32.mrb[0].mxu0
    %v486 = vadd.f32 %v176, %v485
    %v487 = vpop.f32.mrb[0].mxu0
    %v488 = vadd.f32 %v180, %v487
    %v489 = vpop.f32.mrb[0].mxu0
    %v490 = vadd.f32 %v176, %v489
    %v491 = vpop.f32.mrb[0].mxu0
    %v492 = vadd.f32 %v180, %v491
    %493 = vmatprep.mubr.bf16.mxu0 %v449
    %494 = vmatmul.mubr.bf16.gmra.mrb[0].mxu0 %v200
    %v495 = vpop.f32.mrb[0].mxu0
    %v496 = vadd.f32 %v176, %v495
    %v497 = vpop.f32.mrb[0].mxu0
    %v498 = vadd.f32 %v180, %v497
    %v499 = vpop.f32.mrb[0].mxu0
    %v500 = vpop.f32.mrb[0].mxu0
    %501 = vdwg.mxu0
    %502 = vmatprep.subr.bf16.mxu0 %v351
    %503 = vmatpush1.bf16.msra.mxu0 %v350
    %504 = vmatprep.subr.bf16.mxu0 %v355
    %505 = vmatpush1.bf16.msra.mxu0 %v354
    %506 = vmatprep.subr.bf16.mxu0 %v359
    %507 = vmatpush1.bf16.msra.mxu0 %v358
    %508 = vmatprep.subr.bf16.mxu0 %v363
    %509 = vmatpush1.bf16.msra.mxu0 %v362
    %510 = vmatprep.subr.bf16.mxu0 %v367
    %511 = vmatpush1.bf16.msra.mxu0 %v366
    %512 = vmatprep.subr.bf16.mxu0 %v371
    %513 = vmatpush1.bf16.msra.mxu0 %v370
    %514 = vmatprep.subr.bf16.mxu0 %v375
    %515 = vmatpush1.bf16.msra.mxu0 %v374
    %516 = vmatprep.subr.bf16.mxu0 %v379
    %517 = vmatpush1.bf16.msra.mxu0 %v378
    %518 = vmatprep.subr.bf16.mxu0 %v383
    %519 = vmatpush1.bf16.msra.mxu0 %v382
    %520 = vmatprep.subr.bf16.mxu0 %v387
    %521 = vmatpush1.bf16.msra.mxu0 %v386
    %522 = vmatprep.subr.bf16.mxu0 %v391
    %523 = vmatpush1.bf16.msra.mxu0 %v390
    %524 = vmatprep.subr.bf16.mxu0 %v395
    %525 = vmatpush1.bf16.msra.mxu0 %v394
    %526 = vmatprep.subr.bf16.mxu0 0
    %527 = vmatpush1.bf16.msra.mxu0 0
    %528 = vmatprep.subr.bf16.mxu0 0
    %529 = vmatpush1.bf16.msra.mxu0 0
    %530 = vmatprep.subr.bf16.mxu0 0
    %531 = vmatpush1.bf16.msra.mxu0 0
    %532 = vmatprep.subr.bf16.mxu0 0
    %533 = vmatpush1.bf16.msra.mxu0 0
    %534 = vmatprep.mubr.bf16.mxu0 %v446
    %535 = vmatmul.mubr.bf16.gmra.mrb[0].mxu0 %v198
    %v536 = vpop.f32.mrb[0].mxu0
    %v537 = vadd.f32 %v184, %v536
    %v538 = vpop.f32.mrb[0].mxu0
    %v539 = vadd.f32 %v188, %v538
    %v540 = vpop.f32.mrb[0].mxu0
    %v541 = vadd.f32 %v184, %v540
    %v542 = vpop.f32.mrb[0].mxu0
    %v543 = vadd.f32 %v188, %v542
    %544 = vmatprep.mubr.bf16.mxu0 %v449
    %545 = vmatmul.mubr.bf16.gmra.mrb[0].mxu0 %v200
    %v546 = vpop.f32.mrb[0].mxu0
    %v547 = vadd.f32 %v184, %v546
    %v548 = vpop.f32.mrb[0].mxu0
    %v549 = vadd.f32 %v188, %v548
    %v550 = vpop.f32.mrb[0].mxu0
    %v551 = vpop.f32.mrb[0].mxu0
    %552 = vdwg.mxu0
    %v553 = vmax.f32 %v486, 0.0
    %v554 = vmax.f32 %v488, 0.0
    %v555 = vmax.f32 %v537, 0.0
    %v556 = vmax.f32 %v539, 0.0
    %v557 = vmax.f32 %v490, 0.0
    %v558 = vmax.f32 %v492, 0.0
    %v559 = vmax.f32 %v541, 0.0
    %v560 = vmax.f32 %v543, 0.0
    %v561 = vmax.f32 %v496, 0.0
    %v562 = vmax.f32 %v498, 0.0
    %v563 = vmax.f32 %v547, 0.0
    %v564 = vmax.f32 %v549, 0.0
    %v565 = vmin.f32 %v486, 0.0
    %v566 = vmin.f32 %v488, 0.0
    %v567 = vmin.f32 %v537, 0.0
    %v568 = vmin.f32 %v539, 0.0
    %v569 = vmin.f32 %v490, 0.0
    %v570 = vmin.f32 %v492, 0.0
    %v571 = vmin.f32 %v541, 0.0
    %v572 = vmin.f32 %v543, 0.0
    %v573 = vmin.f32 %v496, 0.0
    %v574 = vmin.f32 %v498, 0.0
    %v575 = vmin.f32 %v547, 0.0
    %v576 = vmin.f32 %v549, 0.0
    %v577 = vlaneseq
    %v578 = vshrl.u32 %v577, 7
    %v579 = vsub.s32 1, %v578
    %v580 = vrot.slane %v149, %v579
    %v581 = vlaneseq
    %v582 = vshrl.u32 %v581, 7
    %v583 = vsub.s32 5, %v582
    %v584 = vrot.slane %v149, %v583
    %v585 = vlaneseq
    %v586 = vshrl.u32 %v585, 7
    %v587 = vsub.s32 1, %v586
    %v588 = vrot.slane %v150, %v587
    %v589 = vlaneseq
    %v590 = vshrl.u32 %v589, 7
    %v591 = vsub.s32 5, %v590
    %v592 = vrot.slane %v150, %v591
    %v597 = vlaneseq
    %v598 = vshrl.u32 %v597, 7
    %v599 = vsub.s32 1, %v598
    %v600 = vrot.slane %v580, %v599
    %v601 = vlaneseq
    %v602 = vshrl.u32 %v601, 7
    %v603 = vsub.s32 1, %v602
    %v604 = vrot.slane %v584, %v603
    %v605 = vlaneseq
    %v606 = vshrl.u32 %v605, 7
    %v607 = vsub.s32 1, %v606
    %v608 = vrot.slane %v588, %v607
    %v609 = vlaneseq
    %v610 = vshrl.u32 %v609, 7
    %v611 = vsub.s32 1, %v610
    %v612 = vrot.slane %v592, %v611
    %v613 = vmul.f32 %v600, %v565
    %v614 = vmul.f32 %v604, %v566
    %v615 = vmul.f32 %v608, %v567
    %v616 = vmul.f32 %v612, %v568
    %v617 = vmul.f32 %v600, %v569
    %v618 = vmul.f32 %v604, %v570
    %v619 = vmul.f32 %v608, %v571
    %v620 = vmul.f32 %v612, %v572
    %v621 = vmul.f32 %v600, %v573
    %v622 = vmul.f32 %v604, %v574
    %v623 = vmul.f32 %v608, %v575
    %v624 = vmul.f32 %v612, %v576
    %v625 = vadd.f32 %v553, %v613
    %v626 = vadd.f32 %v554, %v614
    %v627 = vadd.f32 %v555, %v615
    %v628 = vadd.f32 %v556, %v616
    %v629 = vadd.f32 %v557, %v617
    %v630 = vadd.f32 %v558, %v618
    %v631 = vadd.f32 %v559, %v619
    %v632 = vadd.f32 %v560, %v620
    %v633 = vadd.f32 %v561, %v621
    %v634 = vadd.f32 %v562, %v622
    %v635 = vadd.f32 %v563, %v623
    %v636 = vadd.f32 %v564, %v624
    %v637 = vlaneseq
    %v638 = vshrl.u32 %v637, 7
    %v639 = vsub.s32 2, %v638
    %v640 = vrot.slane %v149, %v639
    %v641 = vlaneseq
    %v642 = vshrl.u32 %v641, 7
    %v643 = vsub.s32 6, %v642
    %v644 = vrot.slane %v149, %v643
    %v645 = vlaneseq
    %v646 = vshrl.u32 %v645, 7
    %v647 = vsub.s32 2, %v646
    %v648 = vrot.slane %v150, %v647
    %v649 = vlaneseq
    %v650 = vshrl.u32 %v649, 7
    %v651 = vsub.s32 6, %v650
    %v652 = vrot.slane %v150, %v651
    %v657 = vlaneseq
    %v658 = vshrl.u32 %v657, 7
    %v659 = vsub.s32 2, %v658
    %v660 = vrot.slane %v640, %v659
    %v661 = vlaneseq
    %v662 = vshrl.u32 %v661, 7
    %v663 = vsub.s32 2, %v662
    %v664 = vrot.slane %v644, %v663
    %v665 = vlaneseq
    %v666 = vshrl.u32 %v665, 7
    %v667 = vsub.s32 2, %v666
    %v668 = vrot.slane %v648, %v667
    %v669 = vlaneseq
    %v670 = vshrl.u32 %v669, 7
    %v671 = vsub.s32 2, %v670
    %v672 = vrot.slane %v652, %v671
    %v673 = vmul.f32 %v625, %v660
    %v674 = vmul.f32 %v626, %v664
    %v675 = vmul.f32 %v627, %v668
    %v676 = vmul.f32 %v628, %v672
    %v677 = vmul.f32 %v629, %v660
    %v678 = vmul.f32 %v630, %v664
    %v679 = vmul.f32 %v631, %v668
    %v680 = vmul.f32 %v632, %v672
    %v681 = vmul.f32 %v633, %v660
    %v682 = vmul.f32 %v634, %v664
    %v683 = vmul.f32 %v635, %v668
    %v684 = vmul.f32 %v636, %v672
    %v685 = vlaneseq
    %v686 = vshrl.u32 %v685, 7
    %v687 = vsub.s32 3, %v686
    %v688 = vrot.slane %v149, %v687
    %v689 = vlaneseq
    %v690 = vshrl.u32 %v689, 7
    %v691 = vsub.s32 7, %v690
    %v692 = vrot.slane %v149, %v691
    %v693 = vlaneseq
    %v694 = vshrl.u32 %v693, 7
    %v695 = vsub.s32 3, %v694
    %v696 = vrot.slane %v150, %v695
    %v697 = vlaneseq
    %v698 = vshrl.u32 %v697, 7
    %v699 = vsub.s32 7, %v698
    %v700 = vrot.slane %v150, %v699
    %v705 = vlaneseq
    %v706 = vshrl.u32 %v705, 7
    %v707 = vsub.s32 3, %v706
    %v708 = vrot.slane %v688, %v707
    %v709 = vlaneseq
    %v710 = vshrl.u32 %v709, 7
    %v711 = vsub.s32 3, %v710
    %v712 = vrot.slane %v692, %v711
    %v713 = vlaneseq
    %v714 = vshrl.u32 %v713, 7
    %v715 = vsub.s32 3, %v714
    %v716 = vrot.slane %v696, %v715
    %v717 = vlaneseq
    %v718 = vshrl.u32 %v717, 7
    %v719 = vsub.s32 3, %v718
    %v720 = vrot.slane %v700, %v719
    %v721 = vadd.f32 %v673, %v708
    %v722 = vadd.f32 %v674, %v712
    %v723 = vadd.f32 %v675, %v716
    %v724 = vadd.f32 %v676, %v720
    %v725 = vadd.f32 %v677, %v708
    %v726 = vadd.f32 %v678, %v712
    %v727 = vadd.f32 %v679, %v716
    %v728 = vadd.f32 %v680, %v720
    %v729 = vadd.f32 %v681, %v708
    %v730 = vadd.f32 %v682, %v712
    %v731 = vadd.f32 %v683, %v716
    %v732 = vadd.f32 %v684, %v720
    %v733 = vpack.c.bf16 %v725, %v721
    %v734 = vpack.c.bf16 %v726, %v722
    %v735 = vpack.c.bf16 %v727, %v723
    %v736 = vpack.c.bf16 %v728, %v724
    %v737 = vpack.c.bf16 %v729, %v729
    %v738 = vpack.c.bf16 %v730, %v730
    %v739 = vpack.c.bf16 %v731, %v731
    %v740 = vpack.c.bf16 %v732, %v732
    %v749 = vunpack.c.l.b16 %v733
    %v750 = vunpack.c.l.b16 %v734
    %v751 = vunpack.c.l.b16 %v735
    %v752 = vunpack.c.l.b16 %v736
    %v753 = vunpack.c.h.b16 %v733
    %v754 = vunpack.c.h.b16 %v734
    %v755 = vunpack.c.h.b16 %v735
    %v756 = vunpack.c.h.b16 %v736
    %v757 = vunpack.c.l.b16 %v737
    %v758 = vunpack.c.l.b16 %v738
    %v759 = vunpack.c.l.b16 %v739
    %v760 = vunpack.c.l.b16 %v740
    %v761 = vpack.c.b16 %v750, %v749
    %v762 = vpack.c.b16 %v752, %v751
    %v763 = vpack.c.b16 %v754, %v753
    %v764 = vpack.c.b16 %v756, %v755
    %v765 = vpack.c.b16 %v758, %v757
    %v766 = vpack.c.b16 %v760, %v759
    %773 = vst [vmem:[#allocation2 + $0x20] sm:$0xff] %v761
    %774 = vst [vmem:[#allocation2 + $0x28] sm:$0xff] %v762
    %775 = vst [vmem:[#allocation2 + $0x30] sm:$0xff] %v763
    %776 = vst [vmem:[#allocation2 + $0x38] sm:$0xff] %v764
    %777 = vst [vmem:[#allocation2 + $0x40] sm:$0x33] %v765
    %778 = vst [vmem:[#allocation2 + $0x48] sm:$0x33] %v766
    %v779 = vld [vmem:[#allocation2 + $0x10] sm:$0xcc]
    %v780 = vld [vmem:[#allocation2 + $0x18] sm:$0xcc]
    %v781 = vld [vmem:[#allocation2 + $0x20] sm:$0xff]
    %v782 = vld [vmem:[#allocation2 + $0x28] sm:$0xff]
    %v783 = vld [vmem:[#allocation2 + $0x30] sm:$0xff]
    %v784 = vld [vmem:[#allocation2 + $0x38] sm:$0xff]
    %v785 = vld [vmem:[#allocation2 + $0x40] sm:$0x77]
    %v786 = vld [vmem:[#allocation2 + $0x48] sm:$0x77]
    %v787 = vld [vmem:[#allocation6] sm:$0xff]
    %v788 = vld [vmem:[#allocation6 + $0x8] sm:$0xff]
    %v789 = vld [vmem:[#allocation6 + $0x10] sm:$0xff]
    %v790 = vld [vmem:[#allocation6 + $0x18] sm:$0xff]
    %v791 = vld [vmem:[#allocation6 + $0x20] sm:$0xff]
    %v792 = vld [vmem:[#allocation6 + $0x28] sm:$0xff]
    %v793 = vld [vmem:[#allocation6 + $0x30] sm:$0xff]
    %v794 = vld [vmem:[#allocation6 + $0x38] sm:$0xff]
    %v795 = vld [vmem:[#allocation6 + $0x40] sm:$0xff]
    %v796 = vld [vmem:[#allocation6 + $0x48] sm:$0xff]
    %v797 = vld [vmem:[#allocation6 + $0x50] sm:$0xff]
    %v798 = vld [vmem:[#allocation6 + $0x58] sm:$0xff]
    %v799 = vld [vmem:[#allocation6 + $0x60] sm:$0xff]
    %v800 = vld [vmem:[#allocation6 + $0x68] sm:$0xff]
    %v801 = vld [vmem:[#allocation6 + $0x70] sm:$0xff]
    %v802 = vld [vmem:[#allocation6 + $0x78] sm:$0xff]
    %v803 = vld [vmem:[#allocation6 + $0x80] sm:$0xff]
    %v804 = vld [vmem:[#allocation6 + $0x88] sm:$0xff]
    %v805 = vld [vmem:[#allocation6 + $0x90] sm:$0xff]
    %v806 = vld [vmem:[#allocation6 + $0x98] sm:$0xff]
    %v807 = vld [vmem:[#allocation6 + $0xa0] sm:$0xff]
    %v808 = vld [vmem:[#allocation6 + $0xa8] sm:$0xff]
    %v809 = vld [vmem:[#allocation6 + $0xb0] sm:$0xff]
    %v810 = vld [vmem:[#allocation6 + $0xb8] sm:$0xff]
    %v811 = vld [vmem:[#allocation6 + $0xc0] sm:$0xff]
    %v812 = vld [vmem:[#allocation6 + $0xc8] sm:$0xff]
    %v813 = vld [vmem:[#allocation6 + $0xd0] sm:$0xff]
    %v814 = vld [vmem:[#allocation6 + $0xd8] sm:$0xff]
    %v815 = vld [vmem:[#allocation6 + $0xe0] sm:$0xff]
    %v816 = vld [vmem:[#allocation6 + $0xe8] sm:$0xff]
    %v817 = vld [vmem:[#allocation6 + $0xf0] sm:$0xff]
    %v818 = vld [vmem:[#allocation6 + $0xf8] sm:$0xff]
    %v819 = vld [vmem:[#allocation6 + $0x100] sm:$0xff]
    %v820 = vld [vmem:[#allocation6 + $0x108] sm:$0xff]
    %v821 = vld [vmem:[#allocation6 + $0x110] sm:$0xff]
    %v822 = vld [vmem:[#allocation6 + $0x118] sm:$0xff]
    %v823 = vld [vmem:[#allocation6 + $0x120] sm:$0xff]
    %v824 = vld [vmem:[#allocation6 + $0x128] sm:$0xff]
    %v825 = vld [vmem:[#allocation6 + $0x130] sm:$0xff]
    %v826 = vld [vmem:[#allocation6 + $0x138] sm:$0xff]
    %v827 = vld [vmem:[#allocation6 + $0x140] sm:$0xff]
    %v828 = vld [vmem:[#allocation6 + $0x148] sm:$0xff]
    %v829 = vld [vmem:[#allocation6 + $0x150] sm:$0xff]
    %v830 = vld [vmem:[#allocation6 + $0x158] sm:$0xff]
    %v831 = vld [vmem:[#allocation6 + $0x160] sm:$0xff]
    %v832 = vld [vmem:[#allocation6 + $0x168] sm:$0xff]
    %v833 = vld [vmem:[#allocation6 + $0x170] sm:$0xff]
    %v834 = vld [vmem:[#allocation6 + $0x178] sm:$0xff]
    %v835 = vld [vmem:[#allocation6 + $0x180] sm:$0xff]
    %v836 = vld [vmem:[#allocation6 + $0x188] sm:$0xff]
    %v837 = vld [vmem:[#allocation6 + $0x190] sm:$0xff]
    %v838 = vld [vmem:[#allocation6 + $0x198] sm:$0xff]
    %v839 = vld [vmem:[#allocation6 + $0x1a0] sm:$0xff]
    %v840 = vld [vmem:[#allocation6 + $0x1a8] sm:$0xff]
    %v841 = vld [vmem:[#allocation6 + $0x1b0] sm:$0xff]
    %v842 = vld [vmem:[#allocation6 + $0x1b8] sm:$0xff]
    %v843 = vld [vmem:[#allocation6 + $0x1c0] sm:$0xff]
    %v844 = vld [vmem:[#allocation6 + $0x1c8] sm:$0xff]
    %v845 = vld [vmem:[#allocation6 + $0x1d0] sm:$0xff]
    %v846 = vld [vmem:[#allocation6 + $0x1d8] sm:$0xff]
    %v847 = vld [vmem:[#allocation6 + $0x1e0] sm:$0xff]
    %v848 = vld [vmem:[#allocation6 + $0x1e8] sm:$0xff]
    %v849 = vld [vmem:[#allocation6 + $0x1f0] sm:$0xff]
    %v850 = vld [vmem:[#allocation6 + $0x1f8] sm:$0xff]
    %v851 = vld [vmem:[#allocation2 + $0x10] sm:$0x88]
    %v852 = vld [vmem:[#allocation2 + $0x18] sm:$0x88]
    %s853 = scalar_lea.vmem [#allocation6], 512
    %v854 = vld [vmem:[%s853] sm:$0xff]
    %v855 = vld [vmem:[%s853 + $0x8] sm:$0xff]
    %v856 = vld [vmem:[%s853 + $0x10] sm:$0xff]
    %v857 = vld [vmem:[%s853 + $0x18] sm:$0xff]
    %v858 = vld [vmem:[%s853 + $0x20] sm:$0xff]
    %v859 = vld [vmem:[%s853 + $0x28] sm:$0xff]
    %v860 = vld [vmem:[%s853 + $0x30] sm:$0xff]
    %v861 = vld [vmem:[%s853 + $0x38] sm:$0xff]
    %v862 = vld [vmem:[%s853 + $0x40] sm:$0xff]
    %v863 = vld [vmem:[%s853 + $0x48] sm:$0xff]
    %v864 = vld [vmem:[%s853 + $0x50] sm:$0xff]
    %v865 = vld [vmem:[%s853 + $0x58] sm:$0xff]
    %v866 = vld [vmem:[%s853 + $0x60] sm:$0xff]
    %v867 = vld [vmem:[%s853 + $0x68] sm:$0xff]
    %v868 = vld [vmem:[%s853 + $0x70] sm:$0xff]
    %v869 = vld [vmem:[%s853 + $0x78] sm:$0xff]
    %v870 = vld [vmem:[%s853 + $0x80] sm:$0xff]
    %v871 = vld [vmem:[%s853 + $0x88] sm:$0xff]
    %v872 = vld [vmem:[%s853 + $0x90] sm:$0xff]
    %v873 = vld [vmem:[%s853 + $0x98] sm:$0xff]
    %v874 = vld [vmem:[%s853 + $0xa0] sm:$0xff]
    %v875 = vld [vmem:[%s853 + $0xa8] sm:$0xff]
    %v876 = vld [vmem:[%s853 + $0xb0] sm:$0xff]
    %v877 = vld [vmem:[%s853 + $0xb8] sm:$0xff]
    %v878 = vld [vmem:[%s853 + $0xc0] sm:$0xff]
    %v879 = vld [vmem:[%s853 + $0xc8] sm:$0xff]
    %v880 = vld [vmem:[%s853 + $0xd0] sm:$0xff]
    %v881 = vld [vmem:[%s853 + $0xd8] sm:$0xff]
    %v882 = vld [vmem:[%s853 + $0xe0] sm:$0xff]
    %v883 = vld [vmem:[%s853 + $0xe8] sm:$0xff]
    %v884 = vld [vmem:[%s853 + $0xf0] sm:$0xff]
    %v885 = vld [vmem:[%s853 + $0xf8] sm:$0xff]
    %v886 = vld [vmem:[%s853 + $0x100] sm:$0xff]
    %v887 = vld [vmem:[%s853 + $0x108] sm:$0xff]
    %v888 = vld [vmem:[%s853 + $0x110] sm:$0xff]
    %v889 = vld [vmem:[%s853 + $0x118] sm:$0xff]
    %v890 = vld [vmem:[%s853 + $0x120] sm:$0xff]
    %v891 = vld [vmem:[%s853 + $0x128] sm:$0xff]
    %v892 = vld [vmem:[%s853 + $0x130] sm:$0xff]
    %v893 = vld [vmem:[%s853 + $0x138] sm:$0xff]
    %v894 = vld [vmem:[%s853 + $0x140] sm:$0xff]
    %v895 = vld [vmem:[%s853 + $0x148] sm:$0xff]
    %v896 = vld [vmem:[%s853 + $0x150] sm:$0xff]
    %v897 = vld [vmem:[%s853 + $0x158] sm:$0xff]
    %v898 = vld [vmem:[%s853 + $0x160] sm:$0xff]
    %v899 = vld [vmem:[%s853 + $0x168] sm:$0xff]
    %v900 = vld [vmem:[%s853 + $0x170] sm:$0xff]
    %v901 = vld [vmem:[%s853 + $0x178] sm:$0xff]
    %v902 = vld [vmem:[%s853 + $0x180] sm:$0xff]
    %v903 = vld [vmem:[%s853 + $0x188] sm:$0xff]
    %v904 = vld [vmem:[%s853 + $0x190] sm:$0xff]
    %v905 = vld [vmem:[%s853 + $0x198] sm:$0xff]
    %v906 = vld [vmem:[%s853 + $0x1a0] sm:$0xff]
    %v907 = vld [vmem:[%s853 + $0x1a8] sm:$0xff]
    %v908 = vld [vmem:[%s853 + $0x1b0] sm:$0xff]
    %v909 = vld [vmem:[%s853 + $0x1b8] sm:$0xff]
    %v910 = vld [vmem:[%s853 + $0x1c0] sm:$0xff]
    %v911 = vld [vmem:[%s853 + $0x1c8] sm:$0xff]
    %v912 = vld [vmem:[%s853 + $0x1d0] sm:$0xff]
    %v913 = vld [vmem:[%s853 + $0x1d8] sm:$0xff]
    %v914 = vld [vmem:[%s853 + $0x1e0] sm:$0xff]
    %v915 = vld [vmem:[%s853 + $0x1e8] sm:$0xff]
    %v916 = vld [vmem:[%s853 + $0x1f0] sm:$0xff]
    %v917 = vld [vmem:[%s853 + $0x1f8] sm:$0xff]
    %v926 = vunpack.c.l.b16 %v851
    %v927 = vunpack.c.h.b16 %v851
    %v928 = vunpack.c.l.b16 %v852
    %v929 = vunpack.c.h.b16 %v852
    %v930 = vunpack.c.l.b16 %v781
    %v931 = vunpack.c.h.b16 %v781
    %v932 = vunpack.c.l.b16 %v782
    %v933 = vunpack.c.h.b16 %v782
    %v934 = vunpack.c.l.b16 %v783
    %v935 = vunpack.c.h.b16 %v783
    %v936 = vunpack.c.l.b16 %v784
    %v937 = vunpack.c.h.b16 %v784
    %v938 = vunpack.c.l.b16 %v785
    %v939 = vunpack.c.h.b16 %v785
    %v940 = vunpack.c.l.b16 %v786
    %v941 = vunpack.c.h.b16 %v786
    %v942 = vpack.c.b16 %v930, %v926
    %v943 = vpack.c.b16 %v931, %v927
    %v944 = vpack.c.b16 %v932, %v928
    %v945 = vpack.c.b16 %v933, %v929
    %v946 = vpack.c.b16 %v938, %v934
    %v947 = vpack.c.b16 %v939, %v935
    %v948 = vpack.c.b16 %v940, %v936
    %v949 = vpack.c.b16 %v941, %v937
    %vm950 = vcmask 1044480
    %v951 = vrot.slane %v942, 3
    %v952 = vrot.slane %v946, 3
    %v953 = vsel %vm950, %v951, %v952
    %v954 = vrot.slane %v943, 3
    %v955 = vrot.slane %v947, 3
    %v956 = vsel %vm950, %v954, %v955
    %v957 = vrot.slane %v944, 3
    %v958 = vrot.slane %v948, 3
    %v959 = vsel %vm950, %v957, %v958
    %v960 = vrot.slane %v945, 3
    %v961 = vrot.slane %v949, 3
    %v962 = vsel %vm950, %v960, %v961
    %v1035 = vunpack.c.l.b16 %v854
    %v1036 = vunpack.c.h.b16 %v854
    %v1037 = vunpack.c.l.b16 %v855
    %v1038 = vunpack.c.h.b16 %v855
    %v1039 = vunpack.c.l.b16 %v856
    %v1040 = vunpack.c.h.b16 %v856
    %v1041 = vunpack.c.l.b16 %v857
    %v1042 = vunpack.c.h.b16 %v857
    %v1043 = vunpack.c.l.b16 %v858
    %v1044 = vunpack.c.h.b16 %v858
    %v1045 = vunpack.c.l.b16 %v859
    %v1046 = vunpack.c.h.b16 %v859
    %v1047 = vunpack.c.l.b16 %v860
    %v1048 = vunpack.c.h.b16 %v860
    %v1049 = vunpack.c.l.b16 %v861
    %v1050 = vunpack.c.h.b16 %v861
    %v1051 = vunpack.c.l.b16 %v862
    %v1052 = vunpack.c.h.b16 %v862
    %v1053 = vunpack.c.l.b16 %v863
    %v1054 = vunpack.c.h.b16 %v863
    %v1055 = vunpack.c.l.b16 %v864
    %v1056 = vunpack.c.h.b16 %v864
    %v1057 = vunpack.c.l.b16 %v865
    %v1058 = vunpack.c.h.b16 %v865
    %v1059 = vunpack.c.l.b16 %v866
    %v1060 = vunpack.c.h.b16 %v866
    %v1061 = vunpack.c.l.b16 %v867
    %v1062 = vunpack.c.h.b16 %v867
    %v1063 = vunpack.c.l.b16 %v868
    %v1064 = vunpack.c.h.b16 %v868
    %v1065 = vunpack.c.l.b16 %v869
    %v1066 = vunpack.c.h.b16 %v869
    %v1067 = vunpack.c.l.b16 %v870
    %v1068 = vunpack.c.h.b16 %v870
    %v1069 = vunpack.c.l.b16 %v871
    %v1070 = vunpack.c.h.b16 %v871
    %v1071 = vunpack.c.l.b16 %v872
    %v1072 = vunpack.c.h.b16 %v872
    %v1073 = vunpack.c.l.b16 %v873
    %v1074 = vunpack.c.h.b16 %v873
    %v1075 = vunpack.c.l.b16 %v874
    %v1076 = vunpack.c.h.b16 %v874
    %v1077 = vunpack.c.l.b16 %v875
    %v1078 = vunpack.c.h.b16 %v875
    %v1079 = vunpack.c.l.b16 %v876
    %v1080 = vunpack.c.h.b16 %v876
    %v1081 = vunpack.c.l.b16 %v877
    %v1082 = vunpack.c.h.b16 %v877
    %v1083 = vunpack.c.l.b16 %v878
    %v1084 = vunpack.c.h.b16 %v878
    %v1085 = vunpack.c.l.b16 %v879
    %v1086 = vunpack.c.h.b16 %v879
    %v1087 = vunpack.c.l.b16 %v880
    %v1088 = vunpack.c.h.b16 %v880
    %v1089 = vunpack.c.l.b16 %v881
    %v1090 = vunpack.c.h.b16 %v881
    %v1091 = vunpack.c.l.b16 %v882
    %v1092 = vunpack.c.h.b16 %v882
    %v1093 = vunpack.c.l.b16 %v883
    %v1094 = vunpack.c.h.b16 %v883
    %v1095 = vunpack.c.l.b16 %v884
    %v1096 = vunpack.c.h.b16 %v884
    %v1097 = vunpack.c.l.b16 %v885
    %v1098 = vunpack.c.h.b16 %v885
    %v1099 = vunpack.c.l.b16 %v886
    %v1100 = vunpack.c.h.b16 %v886
    %v1101 = vunpack.c.l.b16 %v887
    %v1102 = vunpack.c.h.b16 %v887
    %v1103 = vunpack.c.l.b16 %v888
    %v1104 = vunpack.c.h.b16 %v888
    %v1105 = vunpack.c.l.b16 %v889
    %v1106 = vunpack.c.h.b16 %v889
    %v1107 = vunpack.c.l.b16 %v890
    %v1108 = vunpack.c.h.b16 %v890
    %v1109 = vunpack.c.l.b16 %v891
    %v1110 = vunpack.c.h.b16 %v891
    %v1111 = vunpack.c.l.b16 %v892
    %v1112 = vunpack.c.h.b16 %v892
    %v1113 = vunpack.c.l.b16 %v893
    %v1114 = vunpack.c.h.b16 %v893
    %v1115 = vunpack.c.l.b16 %v894
    %v1116 = vunpack.c.h.b16 %v894
    %v1117 = vunpack.c.l.b16 %v895
    %v1118 = vunpack.c.h.b16 %v895
    %v1119 = vunpack.c.l.b16 %v896
    %v1120 = vunpack.c.h.b16 %v896
    %v1121 = vunpack.c.l.b16 %v897
    %v1122 = vunpack.c.h.b16 %v897
    %v1123 = vunpack.c.l.b16 %v898
    %v1124 = vunpack.c.h.b16 %v898
    %v1125 = vunpack.c.l.b16 %v899
    %v1126 = vunpack.c.h.b16 %v899
    %v1127 = vunpack.c.l.b16 %v900
    %v1128 = vunpack.c.h.b16 %v900
    %v1129 = vunpack.c.l.b16 %v901
    %v1130 = vunpack.c.h.b16 %v901
    %v1131 = vunpack.c.l.b16 %v902
    %v1132 = vunpack.c.h.b16 %v902
    %v1133 = vunpack.c.l.b16 %v903
    %v1134 = vunpack.c.h.b16 %v903
    %v1135 = vunpack.c.l.b16 %v904
    %v1136 = vunpack.c.h.b16 %v904
    %v1137 = vunpack.c.l.b16 %v905
    %v1138 = vunpack.c.h.b16 %v905
    %v1139 = vunpack.c.l.b16 %v906
    %v1140 = vunpack.c.h.b16 %v906
    %v1141 = vunpack.c.l.b16 %v907
    %v1142 = vunpack.c.h.b16 %v907
    %v1143 = vunpack.c.l.b16 %v908
    %v1144 = vunpack.c.h.b16 %v908
    %v1145 = vunpack.c.l.b16 %v909
    %v1146 = vunpack.c.h.b16 %v909
    %v1147 = vunpack.c.l.b16 %v910
    %v1148 = vunpack.c.h.b16 %v910
    %v1149 = vunpack.c.l.b16 %v911
    %v1150 = vunpack.c.h.b16 %v911
    %v1151 = vunpack.c.l.b16 %v912
    %v1152 = vunpack.c.h.b16 %v912
    %v1153 = vunpack.c.l.b16 %v913
    %v1154 = vunpack.c.h.b16 %v913
    %v1155 = vunpack.c.l.b16 %v914
    %v1156 = vunpack.c.h.b16 %v914
    %v1157 = vunpack.c.l.b16 %v915
    %v1158 = vunpack.c.h.b16 %v915
    %v1159 = vunpack.c.l.b16 %v916
    %v1160 = vunpack.c.h.b16 %v916
    %v1161 = vunpack.c.l.b16 %v917
    %v1162 = vunpack.c.h.b16 %v917
    %v1163 = vpack.c.b16 %v1037, %v1035
    %v1164 = vpack.c.b16 %v1038, %v1036
    %v1165 = vpack.c.b16 %v1041, %v1039
    %v1166 = vpack.c.b16 %v1042, %v1040
    %v1167 = vpack.c.b16 %v1045, %v1043
    %v1168 = vpack.c.b16 %v1046, %v1044
    %v1169 = vpack.c.b16 %v1049, %v1047
    %v1170 = vpack.c.b16 %v1050, %v1048
    %v1171 = vpack.c.b16 %v1053, %v1051
    %v1172 = vpack.c.b16 %v1054, %v1052
    %v1173 = vpack.c.b16 %v1057, %v1055
    %v1174 = vpack.c.b16 %v1058, %v1056
    %v1175 = vpack.c.b16 %v1061, %v1059
    %v1176 = vpack.c.b16 %v1062, %v1060
    %v1177 = vpack.c.b16 %v1065, %v1063
    %v1178 = vpack.c.b16 %v1066, %v1064
    %v1179 = vpack.c.b16 %v1069, %v1067
    %v1180 = vpack.c.b16 %v1070, %v1068
    %v1181 = vpack.c.b16 %v1073, %v1071
    %v1182 = vpack.c.b16 %v1074, %v1072
    %v1183 = vpack.c.b16 %v1077, %v1075
    %v1184 = vpack.c.b16 %v1078, %v1076
    %v1185 = vpack.c.b16 %v1081, %v1079
    %v1186 = vpack.c.b16 %v1082, %v1080
    %v1187 = vpack.c.b16 %v1085, %v1083
    %v1188 = vpack.c.b16 %v1086, %v1084
    %v1189 = vpack.c.b16 %v1089, %v1087
    %v1190 = vpack.c.b16 %v1090, %v1088
    %v1191 = vpack.c.b16 %v1093, %v1091
    %v1192 = vpack.c.b16 %v1094, %v1092
    %v1193 = vpack.c.b16 %v1097, %v1095
    %v1194 = vpack.c.b16 %v1098, %v1096
    %v1195 = vpack.c.b16 %v1101, %v1099
    %v1196 = vpack.c.b16 %v1102, %v1100
    %v1197 = vpack.c.b16 %v1105, %v1103
    %v1198 = vpack.c.b16 %v1106, %v1104
    %v1199 = vpack.c.b16 %v1109, %v1107
    %v1200 = vpack.c.b16 %v1110, %v1108
    %v1201 = vpack.c.b16 %v1113, %v1111
    %v1202 = vpack.c.b16 %v1114, %v1112
    %v1203 = vpack.c.b16 %v1117, %v1115
    %v1204 = vpack.c.b16 %v1118, %v1116
    %v1205 = vpack.c.b16 %v1121, %v1119
    %v1206 = vpack.c.b16 %v1122, %v1120
    %v1207 = vpack.c.b16 %v1125, %v1123
    %v1208 = vpack.c.b16 %v1126, %v1124
    %v1209 = vpack.c.b16 %v1129, %v1127
    %v1210 = vpack.c.b16 %v1130, %v1128
    %v1211 = vpack.c.b16 %v1133, %v1131
    %v1212 = vpack.c.b16 %v1134, %v1132
    %v1213 = vpack.c.b16 %v1137, %v1135
    %v1214 = vpack.c.b16 %v1138, %v1136
    %v1215 = vpack.c.b16 %v1141, %v1139
    %v1216 = vpack.c.b16 %v1142, %v1140
    %v1217 = vpack.c.b16 %v1145, %v1143
    %v1218 = vpack.c.b16 %v1146, %v1144
    %v1219 = vpack.c.b16 %v1149, %v1147
    %v1220 = vpack.c.b16 %v1150, %v1148
    %v1221 = vpack.c.b16 %v1153, %v1151
    %v1222 = vpack.c.b16 %v1154, %v1152
    %v1223 = vpack.c.b16 %v1157, %v1155
    %v1224 = vpack.c.b16 %v1158, %v1156
    %v1225 = vpack.c.b16 %v1161, %v1159
    %v1226 = vpack.c.b16 %v1162, %v1160
    %1291 = vmatprep.subr.bf16.mxu0 %v1164
    %1292 = vmatpush1.bf16.msra.mxu0 %v1163
    %1293 = vmatprep.subr.bf16.mxu0 %v1166
    %1294 = vmatpush1.bf16.msra.mxu0 %v1165
    %1295 = vmatprep.subr.bf16.mxu0 %v1168
    %1296 = vmatpush1.bf16.msra.mxu0 %v1167
    %1297 = vmatprep.subr.bf16.mxu0 %v1170
    %1298 = vmatpush1.bf16.msra.mxu0 %v1169
    %1299 = vmatprep.subr.bf16.mxu0 %v1172
    %1300 = vmatpush1.bf16.msra.mxu0 %v1171
    %1301 = vmatprep.subr.bf16.mxu0 %v1174
    %1302 = vmatpush1.bf16.msra.mxu0 %v1173
    %1303 = vmatprep.subr.bf16.mxu0 %v1176
    %1304 = vmatpush1.bf16.msra.mxu0 %v1175
    %1305 = vmatprep.subr.bf16.mxu0 %v1178
    %1306 = vmatpush1.bf16.msra.mxu0 %v1177
    %1307 = vmatprep.subr.bf16.mxu0 %v1180
    %1308 = vmatpush1.bf16.msra.mxu0 %v1179
    %1309 = vmatprep.subr.bf16.mxu0 %v1182
    %1310 = vmatpush1.bf16.msra.mxu0 %v1181
    %1311 = vmatprep.subr.bf16.mxu0 %v1184
    %1312 = vmatpush1.bf16.msra.mxu0 %v1183
    %1313 = vmatprep.subr.bf16.mxu0 %v1186
    %1314 = vmatpush1.bf16.msra.mxu0 %v1185
    %1315 = vmatprep.subr.bf16.mxu0 %v1188
    %1316 = vmatpush1.bf16.msra.mxu0 %v1187
    %1317 = vmatprep.subr.bf16.mxu0 %v1190
    %1318 = vmatpush1.bf16.msra.mxu0 %v1189
    %1319 = vmatprep.subr.bf16.mxu0 %v1192
    %1320 = vmatpush1.bf16.msra.mxu0 %v1191
    %1321 = vmatprep.subr.bf16.mxu0 %v1194
    %1322 = vmatpush1.bf16.msra.mxu0 %v1193
    %1323 = vmatprep.mubr.bf16.mxu0 %v956
    %1324 = vmatmul.mubr.bf16.gmra.mrb[0].mxu0 %v953
    %v1325 = vpop.f32.mrb[0].mxu0
    %v1326 = vadd.f32 0.0, %v1325
    %v1327 = vpop.f32.mrb[0].mxu0
    %v1328 = vadd.f32 0.0, %v1327
    %v1329 = vpop.f32.mrb[0].mxu0
    %v1330 = vadd.f32 0.0, %v1329
    %v1331 = vpop.f32.mrb[0].mxu0
    %v1332 = vadd.f32 0.0, %v1331
    %1333 = vmatprep.mubr.bf16.mxu0 %v955
    %1334 = vmatmul.mubr.bf16.gmra.mrb[0].mxu0 %v952
    %v1335 = vpop.f32.mrb[0].mxu0
    %v1336 = vadd.f32 0.0, %v1335
    %v1337 = vpop.f32.mrb[0].mxu0
    %v1338 = vadd.f32 0.0, %v1337
    %v1339 = vpop.f32.mrb[0].mxu0
    %v1340 = vpop.f32.mrb[0].mxu0
    %1341 = vdwg.mxu0
    %1342 = vmatprep.subr.bf16.mxu0 %v1196
    %1343 = vmatpush1.bf16.msra.mxu0 %v1195
    %1344 = vmatprep.subr.bf16.mxu0 %v1198
    %1345 = vmatpush1.bf16.msra.mxu0 %v1197
    %1346 = vmatprep.subr.bf16.mxu0 %v1200
    %1347 = vmatpush1.bf16.msra.mxu0 %v1199
    %1348 = vmatprep.subr.bf16.mxu0 %v1202
    %1349 = vmatpush1.bf16.msra.mxu0 %v1201
    %1350 = vmatprep.subr.bf16.mxu0 %v1204
    %1351 = vmatpush1.bf16.msra.mxu0 %v1203
    %1352 = vmatprep.subr.bf16.mxu0 %v1206
    %1353 = vmatpush1.bf16.msra.mxu0 %v1205
    %1354 = vmatprep.subr.bf16.mxu0 %v1208
    %1355 = vmatpush1.bf16.msra.mxu0 %v1207
    %1356 = vmatprep.subr.bf16.mxu0 %v1210
    %1357 = vmatpush1.bf16.msra.mxu0 %v1209
    %1358 = vmatprep.subr.bf16.mxu0 %v1212
    %1359 = vmatpush1.bf16.msra.mxu0 %v1211
    %1360 = vmatprep.subr.bf16.mxu0 %v1214
    %1361 = vmatpush1.bf16.msra.mxu0 %v1213
    %1362 = vmatprep.subr.bf16.mxu0 %v1216
    %1363 = vmatpush1.bf16.msra.mxu0 %v1215
    %1364 = vmatprep.subr.bf16.mxu0 %v1218
    %1365 = vmatpush1.bf16.msra.mxu0 %v1217
    %1366 = vmatprep.subr.bf16.mxu0 %v1220
    %1367 = vmatpush1.bf16.msra.mxu0 %v1219
    %1368 = vmatprep.subr.bf16.mxu0 %v1222
    %1369 = vmatpush1.bf16.msra.mxu0 %v1221
    %1370 = vmatprep.subr.bf16.mxu0 %v1224
    %1371 = vmatpush1.bf16.msra.mxu0 %v1223
    %1372 = vmatprep.subr.bf16.mxu0 %v1226
    %1373 = vmatpush1.bf16.msra.mxu0 %v1225
    %1374 = vmatprep.mubr.bf16.mxu0 %v962
    %1375 = vmatmul.mubr.bf16.gmra.mrb[0].mxu0 %v959
    %v1376 = vpop.f32.mrb[0].mxu0
    %v1377 = vadd.f32 %v1326, %v1376
    %v1378 = vpop.f32.mrb[0].mxu0
    %v1379 = vadd.f32 %v1328, %v1378
    %v1380 = vpop.f32.mrb[0].mxu0
    %v1381 = vadd.f32 %v1330, %v1380
    %v1382 = vpop.f32.mrb[0].mxu0
    %v1383 = vadd.f32 %v1332, %v1382
    %1384 = vmatprep.mubr.bf16.mxu0 %v961
    %1385 = vmatmul.mubr.bf16.gmra.mrb[0].mxu0 %v958
    %v1386 = vpop.f32.mrb[0].mxu0
    %v1387 = vadd.f32 %v1336, %v1386
    %v1388 = vpop.f32.mrb[0].mxu0
    %v1389 = vadd.f32 %v1338, %v1388
    %v1390 = vpop.f32.mrb[0].mxu0
    %v1391 = vpop.f32.mrb[0].mxu0
    %1392 = vdwg.mxu0
    %v1395 = vunpack.c.l.b16 %v779
    %v1396 = vunpack.c.h.b16 %v779
    %v1397 = vunpack.c.l.b16 %v780
    %v1398 = vunpack.c.h.b16 %v780
    %v1399 = vpack.c.b16 %v930, %v1395
    %v1400 = vpack.c.b16 %v931, %v1396
    %v1401 = vpack.c.b16 %v932, %v1397
    %v1402 = vpack.c.b16 %v933, %v1398
    %v1404 = vshrl.u32 %v1399, 16
    %v1406 = vrot.slane %v1404, 2
    %v1407 = vshll.u32 %v1399, 16
    %v1409 = vrot.slane %v1407, 3
    %v1410 = vor.u32 %v1406, %v1409
    %v1412 = vshrl.u32 %v946, 16
    %v1414 = vrot.slane %v1412, 2
    %v1415 = vshll.u32 %v946, 16
    %v1417 = vrot.slane %v1415, 3
    %v1418 = vor.u32 %v1414, %v1417
    %v1419 = vsel %vm92, %v1410, %v1418
    %v1421 = vshrl.u32 %v1400, 16
    %v1423 = vrot.slane %v1421, 2
    %v1424 = vshll.u32 %v1400, 16
    %v1426 = vrot.slane %v1424, 3
    %v1427 = vor.u32 %v1423, %v1426
    %v1429 = vshrl.u32 %v947, 16
    %v1431 = vrot.slane %v1429, 2
    %v1432 = vshll.u32 %v947, 16
    %v1434 = vrot.slane %v1432, 3
    %v1435 = vor.u32 %v1431, %v1434
    %v1436 = vsel %vm92, %v1427, %v1435
    %v1438 = vshrl.u32 %v1401, 16
    %v1440 = vrot.slane %v1438, 2
    %v1441 = vshll.u32 %v1401, 16
    %v1443 = vrot.slane %v1441, 3
    %v1444 = vor.u32 %v1440, %v1443
    %v1446 = vshrl.u32 %v948, 16
    %v1448 = vrot.slane %v1446, 2
    %v1449 = vshll.u32 %v948, 16
    %v1451 = vrot.slane %v1449, 3
    %v1452 = vor.u32 %v1448, %v1451
    %v1453 = vsel %vm92, %v1444, %v1452
    %v1455 = vshrl.u32 %v1402, 16
    %v1457 = vrot.slane %v1455, 2
    %v1458 = vshll.u32 %v1402, 16
    %v1460 = vrot.slane %v1458, 3
    %v1461 = vor.u32 %v1457, %v1460
    %v1463 = vshrl.u32 %v949, 16
    %v1465 = vrot.slane %v1463, 2
    %v1466 = vshll.u32 %v949, 16
    %v1468 = vrot.slane %v1466, 3
    %v1469 = vor.u32 %v1465, %v1468
    %v1470 = vsel %vm92, %v1461, %v1469
    %v1543 = vunpack.c.l.b16 %v787
    %v1544 = vunpack.c.h.b16 %v787
    %v1545 = vunpack.c.l.b16 %v788
    %v1546 = vunpack.c.h.b16 %v788
    %v1547 = vunpack.c.l.b16 %v789
    %v1548 = vunpack.c.h.b16 %v789
    %v1549 = vunpack.c.l.b16 %v790
    %v1550 = vunpack.c.h.b16 %v790
    %v1551 = vunpack.c.l.b16 %v791
    %v1552 = vunpack.c.h.b16 %v791
    %v1553 = vunpack.c.l.b16 %v792
    %v1554 = vunpack.c.h.b16 %v792
    %v1555 = vunpack.c.l.b16 %v793
    %v1556 = vunpack.c.h.b16 %v793
    %v1557 = vunpack.c.l.b16 %v794
    %v1558 = vunpack.c.h.b16 %v794
    %v1559 = vunpack.c.l.b16 %v795
    %v1560 = vunpack.c.h.b16 %v795
    %v1561 = vunpack.c.l.b16 %v796
    %v1562 = vunpack.c.h.b16 %v796
    %v1563 = vunpack.c.l.b16 %v797
    %v1564 = vunpack.c.h.b16 %v797
    %v1565 = vunpack.c.l.b16 %v798
    %v1566 = vunpack.c.h.b16 %v798
    %v1567 = vunpack.c.l.b16 %v799
    %v1568 = vunpack.c.h.b16 %v799
    %v1569 = vunpack.c.l.b16 %v800
    %v1570 = vunpack.c.h.b16 %v800
    %v1571 = vunpack.c.l.b16 %v801
    %v1572 = vunpack.c.h.b16 %v801
    %v1573 = vunpack.c.l.b16 %v802
    %v1574 = vunpack.c.h.b16 %v802
    %v1575 = vunpack.c.l.b16 %v803
    %v1576 = vunpack.c.h.b16 %v803
    %v1577 = vunpack.c.l.b16 %v804
    %v1578 = vunpack.c.h.b16 %v804
    %v1579 = vunpack.c.l.b16 %v805
    %v1580 = vunpack.c.h.b16 %v805
    %v1581 = vunpack.c.l.b16 %v806
    %v1582 = vunpack.c.h.b16 %v806
    %v1583 = vunpack.c.l.b16 %v807
    %v1584 = vunpack.c.h.b16 %v807
    %v1585 = vunpack.c.l.b16 %v808
    %v1586 = vunpack.c.h.b16 %v808
    %v1587 = vunpack.c.l.b16 %v809
    %v1588 = vunpack.c.h.b16 %v809
    %v1589 = vunpack.c.l.b16 %v810
    %v1590 = vunpack.c.h.b16 %v810
    %v1591 = vunpack.c.l.b16 %v811
    %v1592 = vunpack.c.h.b16 %v811
    %v1593 = vunpack.c.l.b16 %v812
    %v1594 = vunpack.c.h.b16 %v812
    %v1595 = vunpack.c.l.b16 %v813
    %v1596 = vunpack.c.h.b16 %v813
    %v1597 = vunpack.c.l.b16 %v814
    %v1598 = vunpack.c.h.b16 %v814
    %v1599 = vunpack.c.l.b16 %v815
    %v1600 = vunpack.c.h.b16 %v815
    %v1601 = vunpack.c.l.b16 %v816
    %v1602 = vunpack.c.h.b16 %v816
    %v1603 = vunpack.c.l.b16 %v817
    %v1604 = vunpack.c.h.b16 %v817
    %v1605 = vunpack.c.l.b16 %v818
    %v1606 = vunpack.c.h.b16 %v818
    %v1607 = vunpack.c.l.b16 %v819
    %v1608 = vunpack.c.h.b16 %v819
    %v1609 = vunpack.c.l.b16 %v820
    %v1610 = vunpack.c.h.b16 %v820
    %v1611 = vunpack.c.l.b16 %v821
    %v1612 = vunpack.c.h.b16 %v821
    %v1613 = vunpack.c.l.b16 %v822
    %v1614 = vunpack.c.h.b16 %v822
    %v1615 = vunpack.c.l.b16 %v823
    %v1616 = vunpack.c.h.b16 %v823
    %v1617 = vunpack.c.l.b16 %v824
    %v1618 = vunpack.c.h.b16 %v824
    %v1619 = vunpack.c.l.b16 %v825
    %v1620 = vunpack.c.h.b16 %v825
    %v1621 = vunpack.c.l.b16 %v826
    %v1622 = vunpack.c.h.b16 %v826
    %v1623 = vunpack.c.l.b16 %v827
    %v1624 = vunpack.c.h.b16 %v827
    %v1625 = vunpack.c.l.b16 %v828
    %v1626 = vunpack.c.h.b16 %v828
    %v1627 = vunpack.c.l.b16 %v829
    %v1628 = vunpack.c.h.b16 %v829
    %v1629 = vunpack.c.l.b16 %v830
    %v1630 = vunpack.c.h.b16 %v830
    %v1631 = vunpack.c.l.b16 %v831
    %v1632 = vunpack.c.h.b16 %v831
    %v1633 = vunpack.c.l.b16 %v832
    %v1634 = vunpack.c.h.b16 %v832
    %v1635 = vunpack.c.l.b16 %v833
    %v1636 = vunpack.c.h.b16 %v833
    %v1637 = vunpack.c.l.b16 %v834
    %v1638 = vunpack.c.h.b16 %v834
    %v1639 = vunpack.c.l.b16 %v835
    %v1640 = vunpack.c.h.b16 %v835
    %v1641 = vunpack.c.l.b16 %v836
    %v1642 = vunpack.c.h.b16 %v836
    %v1643 = vunpack.c.l.b16 %v837
    %v1644 = vunpack.c.h.b16 %v837
    %v1645 = vunpack.c.l.b16 %v838
    %v1646 = vunpack.c.h.b16 %v838
    %v1647 = vunpack.c.l.b16 %v839
    %v1648 = vunpack.c.h.b16 %v839
    %v1649 = vunpack.c.l.b16 %v840
    %v1650 = vunpack.c.h.b16 %v840
    %v1651 = vunpack.c.l.b16 %v841
    %v1652 = vunpack.c.h.b16 %v841
    %v1653 = vunpack.c.l.b16 %v842
    %v1654 = vunpack.c.h.b16 %v842
    %v1655 = vunpack.c.l.b16 %v843
    %v1656 = vunpack.c.h.b16 %v843
    %v1657 = vunpack.c.l.b16 %v844
    %v1658 = vunpack.c.h.b16 %v844
    %v1659 = vunpack.c.l.b16 %v845
    %v1660 = vunpack.c.h.b16 %v845
    %v1661 = vunpack.c.l.b16 %v846
    %v1662 = vunpack.c.h.b16 %v846
    %v1663 = vunpack.c.l.b16 %v847
    %v1664 = vunpack.c.h.b16 %v847
    %v1665 = vunpack.c.l.b16 %v848
    %v1666 = vunpack.c.h.b16 %v848
    %v1667 = vunpack.c.l.b16 %v849
    %v1668 = vunpack.c.h.b16 %v849
    %v1669 = vunpack.c.l.b16 %v850
    %v1670 = vunpack.c.h.b16 %v850
    %v1671 = vpack.c.b16 %v1545, %v1543
    %v1672 = vpack.c.b16 %v1546, %v1544
    %v1673 = vpack.c.b16 %v1549, %v1547
    %v1674 = vpack.c.b16 %v1550, %v1548
    %v1675 = vpack.c.b16 %v1553, %v1551
    %v1676 = vpack.c.b16 %v1554, %v1552
    %v1677 = vpack.c.b16 %v1557, %v1555
    %v1678 = vpack.c.b16 %v1558, %v1556
    %v1679 = vpack.c.b16 %v1561, %v1559
    %v1680 = vpack.c.b16 %v1562, %v1560
    %v1681 = vpack.c.b16 %v1565, %v1563
    %v1682 = vpack.c.b16 %v1566, %v1564
    %v1683 = vpack.c.b16 %v1569, %v1567
    %v1684 = vpack.c.b16 %v1570, %v1568
    %v1685 = vpack.c.b16 %v1573, %v1571
    %v1686 = vpack.c.b16 %v1574, %v1572
    %v1687 = vpack.c.b16 %v1577, %v1575
    %v1688 = vpack.c.b16 %v1578, %v1576
    %v1689 = vpack.c.b16 %v1581, %v1579
    %v1690 = vpack.c.b16 %v1582, %v1580
    %v1691 = vpack.c.b16 %v1585, %v1583
    %v1692 = vpack.c.b16 %v1586, %v1584
    %v1693 = vpack.c.b16 %v1589, %v1587
    %v1694 = vpack.c.b16 %v1590, %v1588
    %v1695 = vpack.c.b16 %v1593, %v1591
    %v1696 = vpack.c.b16 %v1594, %v1592
    %v1697 = vpack.c.b16 %v1597, %v1595
    %v1698 = vpack.c.b16 %v1598, %v1596
    %v1699 = vpack.c.b16 %v1601, %v1599
    %v1700 = vpack.c.b16 %v1602, %v1600
    %v1701 = vpack.c.b16 %v1605, %v1603
    %v1702 = vpack.c.b16 %v1606, %v1604
    %v1703 = vpack.c.b16 %v1609, %v1607
    %v1704 = vpack.c.b16 %v1610, %v1608
    %v1705 = vpack.c.b16 %v1613, %v1611
    %v1706 = vpack.c.b16 %v1614, %v1612
    %v1707 = vpack.c.b16 %v1617, %v1615
    %v1708 = vpack.c.b16 %v1618, %v1616
    %v1709 = vpack.c.b16 %v1621, %v1619
    %v1710 = vpack.c.b16 %v1622, %v1620
    %v1711 = vpack.c.b16 %v1625, %v1623
    %v1712 = vpack.c.b16 %v1626, %v1624
    %v1713 = vpack.c.b16 %v1629, %v1627
    %v1714 = vpack.c.b16 %v1630, %v1628
    %v1715 = vpack.c.b16 %v1633, %v1631
    %v1716 = vpack.c.b16 %v1634, %v1632
    %v1717 = vpack.c.b16 %v1637, %v1635
    %v1718 = vpack.c.b16 %v1638, %v1636
    %v1719 = vpack.c.b16 %v1641, %v1639
    %v1720 = vpack.c.b16 %v1642, %v1640
    %v1721 = vpack.c.b16 %v1645, %v1643
    %v1722 = vpack.c.b16 %v1646, %v1644
    %v1723 = vpack.c.b16 %v1649, %v1647
    %v1724 = vpack.c.b16 %v1650, %v1648
    %v1725 = vpack.c.b16 %v1653, %v1651
    %v1726 = vpack.c.b16 %v1654, %v1652
    %v1727 = vpack.c.b16 %v1657, %v1655
    %v1728 = vpack.c.b16 %v1658, %v1656
    %v1729 = vpack.c.b16 %v1661, %v1659
    %v1730 = vpack.c.b16 %v1662, %v1660
    %v1731 = vpack.c.b16 %v1665, %v1663
    %v1732 = vpack.c.b16 %v1666, %v1664
    %v1733 = vpack.c.b16 %v1669, %v1667
    %v1734 = vpack.c.b16 %v1670, %v1668
    %1799 = vmatprep.subr.bf16.mxu0 %v1672
    %1800 = vmatpush1.bf16.msra.mxu0 %v1671
    %1801 = vmatprep.subr.bf16.mxu0 %v1674
    %1802 = vmatpush1.bf16.msra.mxu0 %v1673
    %1803 = vmatprep.subr.bf16.mxu0 %v1676
    %1804 = vmatpush1.bf16.msra.mxu0 %v1675
    %1805 = vmatprep.subr.bf16.mxu0 %v1678
    %1806 = vmatpush1.bf16.msra.mxu0 %v1677
    %1807 = vmatprep.subr.bf16.mxu0 %v1680
    %1808 = vmatpush1.bf16.msra.mxu0 %v1679
    %1809 = vmatprep.subr.bf16.mxu0 %v1682
    %1810 = vmatpush1.bf16.msra.mxu0 %v1681
    %1811 = vmatprep.subr.bf16.mxu0 %v1684
    %1812 = vmatpush1.bf16.msra.mxu0 %v1683
    %1813 = vmatprep.subr.bf16.mxu0 %v1686
    %1814 = vmatpush1.bf16.msra.mxu0 %v1685
    %1815 = vmatprep.subr.bf16.mxu0 %v1688
    %1816 = vmatpush1.bf16.msra.mxu0 %v1687
    %1817 = vmatprep.subr.bf16.mxu0 %v1690
    %1818 = vmatpush1.bf16.msra.mxu0 %v1689
    %1819 = vmatprep.subr.bf16.mxu0 %v1692
    %1820 = vmatpush1.bf16.msra.mxu0 %v1691
    %1821 = vmatprep.subr.bf16.mxu0 %v1694
    %1822 = vmatpush1.bf16.msra.mxu0 %v1693
    %1823 = vmatprep.subr.bf16.mxu0 %v1696
    %1824 = vmatpush1.bf16.msra.mxu0 %v1695
    %1825 = vmatprep.subr.bf16.mxu0 %v1698
    %1826 = vmatpush1.bf16.msra.mxu0 %v1697
    %1827 = vmatprep.subr.bf16.mxu0 %v1700
    %1828 = vmatpush1.bf16.msra.mxu0 %v1699
    %1829 = vmatprep.subr.bf16.mxu0 %v1702
    %1830 = vmatpush1.bf16.msra.mxu0 %v1701
    %1831 = vmatprep.mubr.bf16.mxu0 %v1436
    %1832 = vmatmul.mubr.bf16.gmra.mrb[0].mxu0 %v1419
    %v1833 = vpop.f32.mrb[0].mxu0
    %v1834 = vadd.f32 %v1377, %v1833
    %v1835 = vpop.f32.mrb[0].mxu0
    %v1836 = vadd.f32 %v1379, %v1835
    %v1837 = vpop.f32.mrb[0].mxu0
    %v1838 = vadd.f32 %v1381, %v1837
    %v1839 = vpop.f32.mrb[0].mxu0
    %v1840 = vadd.f32 %v1383, %v1839
    %1841 = vmatprep.mubr.bf16.mxu0 %v1435
    %1842 = vmatmul.mubr.bf16.gmra.mrb[0].mxu0 %v1418
    %v1843 = vpop.f32.mrb[0].mxu0
    %v1844 = vadd.f32 %v1387, %v1843
    %v1845 = vpop.f32.mrb[0].mxu0
    %v1846 = vadd.f32 %v1389, %v1845
    %v1847 = vpop.f32.mrb[0].mxu0
    %v1848 = vpop.f32.mrb[0].mxu0
    %1849 = vdwg.mxu0
    %1850 = vmatprep.subr.bf16.mxu0 %v1704
    %1851 = vmatpush1.bf16.msra.mxu0 %v1703
    %1852 = vmatprep.subr.bf16.mxu0 %v1706
    %1853 = vmatpush1.bf16.msra.mxu0 %v1705
    %1854 = vmatprep.subr.bf16.mxu0 %v1708
    %1855 = vmatpush1.bf16.msra.mxu0 %v1707
    %1856 = vmatprep.subr.bf16.mxu0 %v1710
    %1857 = vmatpush1.bf16.msra.mxu0 %v1709
    %1858 = vmatprep.subr.bf16.mxu0 %v1712
    %1859 = vmatpush1.bf16.msra.mxu0 %v1711
    %1860 = vmatprep.subr.bf16.mxu0 %v1714
    %1861 = vmatpush1.bf16.msra.mxu0 %v1713
    %1862 = vmatprep.subr.bf16.mxu0 %v1716
    %1863 = vmatpush1.bf16.msra.mxu0 %v1715
    %1864 = vmatprep.subr.bf16.mxu0 %v1718
    %1865 = vmatpush1.bf16.msra.mxu0 %v1717
    %1866 = vmatprep.subr.bf16.mxu0 %v1720
    %1867 = vmatpush1.bf16.msra.mxu0 %v1719
    %1868 = vmatprep.subr.bf16.mxu0 %v1722
    %1869 = vmatpush1.bf16.msra.mxu0 %v1721
    %1870 = vmatprep.subr.bf16.mxu0 %v1724
    %1871 = vmatpush1.bf16.msra.mxu0 %v1723
    %1872 = vmatprep.subr.bf16.mxu0 %v1726
    %1873 = vmatpush1.bf16.msra.mxu0 %v1725
    %1874 = vmatprep.subr.bf16.mxu0 %v1728
    %1875 = vmatpush1.bf16.msra.mxu0 %v1727
    %1876 = vmatprep.subr.bf16.mxu0 %v1730
    %1877 = vmatpush1.bf16.msra.mxu0 %v1729
    %1878 = vmatprep.subr.bf16.mxu0 %v1732
    %1879 = vmatpush1.bf16.msra.mxu0 %v1731
    %1880 = vmatprep.subr.bf16.mxu0 %v1734
    %1881 = vmatpush1.bf16.msra.mxu0 %v1733
    %1882 = vmatprep.mubr.bf16.mxu0 %v1470
    %1883 = vmatmul.mubr.bf16.gmra.mrb[0].mxu0 %v1453
    %v1884 = vpop.f32.mrb[0].mxu0
    %v1885 = vadd.f32 %v1834, %v1884
    %v1886 = vpop.f32.mrb[0].mxu0
    %v1887 = vadd.f32 %v1836, %v1886
    %v1888 = vpop.f32.mrb[0].mxu0
    %v1889 = vadd.f32 %v1838, %v1888
    %v1890 = vpop.f32.mrb[0].mxu0
    %v1891 = vadd.f32 %v1840, %v1890
    %1892 = vmatprep.mubr.bf16.mxu0 %v1469
    %1893 = vmatmul.mubr.bf16.gmra.mrb[0].mxu0 %v1452
    %v1894 = vpop.f32.mrb[0].mxu0
    %v1895 = vadd.f32 %v1844, %v1894
    %v1896 = vpop.f32.mrb[0].mxu0
    %v1897 = vadd.f32 %v1846, %v1896
    %v1898 = vpop.f32.mrb[0].mxu0
    %v1899 = vpop.f32.mrb[0].mxu0
    %1900 = vdwg.mxu0
    %v1901 = vld [vmem:[#allocation2 + $0x40] sm:$0xff]
    %v1902 = vld [vmem:[#allocation2 + $0x48] sm:$0xff]
    %s1903 = scalar_lea.vmem [#allocation6], 1024
    %v1904 = vld [vmem:[%s1903] sm:$0xff]
    %v1905 = vld [vmem:[%s1903 + $0x8] sm:$0xff]
    %v1906 = vld [vmem:[%s1903 + $0x10] sm:$0xff]
    %v1907 = vld [vmem:[%s1903 + $0x18] sm:$0xff]
    %v1908 = vld [vmem:[%s1903 + $0x20] sm:$0xff]
    %v1909 = vld [vmem:[%s1903 + $0x28] sm:$0xff]
    %v1910 = vld [vmem:[%s1903 + $0x30] sm:$0xff]
    %v1911 = vld [vmem:[%s1903 + $0x38] sm:$0xff]
    %v1912 = vld [vmem:[%s1903 + $0x40] sm:$0xff]
    %v1913 = vld [vmem:[%s1903 + $0x48] sm:$0xff]
    %v1914 = vld [vmem:[%s1903 + $0x50] sm:$0xff]
    %v1915 = vld [vmem:[%s1903 + $0x58] sm:$0xff]
    %v1916 = vld [vmem:[%s1903 + $0x60] sm:$0xff]
    %v1917 = vld [vmem:[%s1903 + $0x68] sm:$0xff]
    %v1918 = vld [vmem:[%s1903 + $0x70] sm:$0xff]
    %v1919 = vld [vmem:[%s1903 + $0x78] sm:$0xff]
    %v1920 = vld [vmem:[%s1903 + $0x80] sm:$0xff]
    %v1921 = vld [vmem:[%s1903 + $0x88] sm:$0xff]
    %v1922 = vld [vmem:[%s1903 + $0x90] sm:$0xff]
    %v1923 = vld [vmem:[%s1903 + $0x98] sm:$0xff]
    %v1924 = vld [vmem:[%s1903 + $0xa0] sm:$0xff]
    %v1925 = vld [vmem:[%s1903 + $0xa8] sm:$0xff]
    %v1926 = vld [vmem:[%s1903 + $0xb0] sm:$0xff]
    %v1927 = vld [vmem:[%s1903 + $0xb8] sm:$0xff]
    %v1928 = vld [vmem:[%s1903 + $0xc0] sm:$0xff]
    %v1929 = vld [vmem:[%s1903 + $0xc8] sm:$0xff]
    %v1930 = vld [vmem:[%s1903 + $0xd0] sm:$0xff]
    %v1931 = vld [vmem:[%s1903 + $0xd8] sm:$0xff]
    %v1932 = vld [vmem:[%s1903 + $0xe0] sm:$0xff]
    %v1933 = vld [vmem:[%s1903 + $0xe8] sm:$0xff]
    %v1934 = vld [vmem:[%s1903 + $0xf0] sm:$0xff]
    %v1935 = vld [vmem:[%s1903 + $0xf8] sm:$0xff]
    %v1936 = vld [vmem:[%s1903 + $0x100] sm:$0xff]
    %v1937 = vld [vmem:[%s1903 + $0x108] sm:$0xff]
    %v1938 = vld [vmem:[%s1903 + $0x110] sm:$0xff]
    %v1939 = vld [vmem:[%s1903 + $0x118] sm:$0xff]
    %v1940 = vld [vmem:[%s1903 + $0x120] sm:$0xff]
    %v1941 = vld [vmem:[%s1903 + $0x128] sm:$0xff]
    %v1942 = vld [vmem:[%s1903 + $0x130] sm:$0xff]
    %v1943 = vld [vmem:[%s1903 + $0x138] sm:$0xff]
    %v1944 = vld [vmem:[%s1903 + $0x140] sm:$0xff]
    %v1945 = vld [vmem:[%s1903 + $0x148] sm:$0xff]
    %v1946 = vld [vmem:[%s1903 + $0x150] sm:$0xff]
    %v1947 = vld [vmem:[%s1903 + $0x158] sm:$0xff]
    %v1948 = vld [vmem:[%s1903 + $0x160] sm:$0xff]
    %v1949 = vld [vmem:[%s1903 + $0x168] sm:$0xff]
    %v1950 = vld [vmem:[%s1903 + $0x170] sm:$0xff]
    %v1951 = vld [vmem:[%s1903 + $0x178] sm:$0xff]
    %v1952 = vld [vmem:[%s1903 + $0x180] sm:$0xff]
    %v1953 = vld [vmem:[%s1903 + $0x188] sm:$0xff]
    %v1954 = vld [vmem:[%s1903 + $0x190] sm:$0xff]
    %v1955 = vld [vmem:[%s1903 + $0x198] sm:$0xff]
    %v1956 = vld [vmem:[%s1903 + $0x1a0] sm:$0xff]
    %v1957 = vld [vmem:[%s1903 + $0x1a8] sm:$0xff]
    %v1958 = vld [vmem:[%s1903 + $0x1b0] sm:$0xff]
    %v1959 = vld [vmem:[%s1903 + $0x1b8] sm:$0xff]
    %v1960 = vld [vmem:[%s1903 + $0x1c0] sm:$0xff]
    %v1961 = vld [vmem:[%s1903 + $0x1c8] sm:$0xff]
    %v1962 = vld [vmem:[%s1903 + $0x1d0] sm:$0xff]
    %v1963 = vld [vmem:[%s1903 + $0x1d8] sm:$0xff]
    %v1964 = vld [vmem:[%s1903 + $0x1e0] sm:$0xff]
    %v1965 = vld [vmem:[%s1903 + $0x1e8] sm:$0xff]
    %v1966 = vld [vmem:[%s1903 + $0x1f0] sm:$0xff]
    %v1967 = vld [vmem:[%s1903 + $0x1f8] sm:$0xff]
    %v1970 = vunpack.c.l.b16 %v1901
    %v1971 = vunpack.c.h.b16 %v1901
    %v1972 = vunpack.c.l.b16 %v1902
    %v1973 = vunpack.c.h.b16 %v1902
    %v1974 = vpack.c.b16 %v1970, %v934
    %v1975 = vpack.c.b16 %v1971, %v935
    %v1976 = vpack.c.b16 %v1972, %v936
    %v1977 = vpack.c.b16 %v1973, %v937
    %vm1978 = vsmask.f32 4352
    %v1980 = vshrl.u32 %v942, 16
    %v1982 = vrot.slane %v1980, 3
    %v1983 = vshll.u32 %v942, 16
    %v1985 = vrot.slane %v1983, 4
    %v1986 = vor.u32 %v1982, %v1985
    %v1988 = vshrl.u32 %v1974, 16
    %v1990 = vrot.slane %v1988, 3
    %v1991 = vshll.u32 %v1974, 16
    %v1993 = vrot.slane %v1991, 4
    %v1994 = vor.u32 %v1990, %v1993
    %v1995 = vsel %vm1978, %v1986, %v1994
    %v1997 = vshrl.u32 %v943, 16
    %v1999 = vrot.slane %v1997, 3
    %v2000 = vshll.u32 %v943, 16
    %v2002 = vrot.slane %v2000, 4
    %v2003 = vor.u32 %v1999, %v2002
    %v2005 = vshrl.u32 %v1975, 16
    %v2007 = vrot.slane %v2005, 3
    %v2008 = vshll.u32 %v1975, 16
    %v2010 = vrot.slane %v2008, 4
    %v2011 = vor.u32 %v2007, %v2010
    %v2012 = vsel %vm1978, %v2003, %v2011
    %v2014 = vshrl.u32 %v944, 16
    %v2016 = vrot.slane %v2014, 3
    %v2017 = vshll.u32 %v944, 16
    %v2019 = vrot.slane %v2017, 4
    %v2020 = vor.u32 %v2016, %v2019
    %v2022 = vshrl.u32 %v1976, 16
    %v2024 = vrot.slane %v2022, 3
    %v2025 = vshll.u32 %v1976, 16
    %v2027 = vrot.slane %v2025, 4
    %v2028 = vor.u32 %v2024, %v2027
    %v2029 = vsel %vm1978, %v2020, %v2028
    %v2031 = vshrl.u32 %v945, 16
    %v2033 = vrot.slane %v2031, 3
    %v2034 = vshll.u32 %v945, 16
    %v2036 = vrot.slane %v2034, 4
    %v2037 = vor.u32 %v2033, %v2036
    %v2039 = vshrl.u32 %v1977, 16
    %v2041 = vrot.slane %v2039, 3
    %v2042 = vshll.u32 %v1977, 16
    %v2044 = vrot.slane %v2042, 4
    %v2045 = vor.u32 %v2041, %v2044
    %v2046 = vsel %vm1978, %v2037, %v2045
    %v2119 = vunpack.c.l.b16 %v1904
    %v2120 = vunpack.c.h.b16 %v1904
    %v2121 = vunpack.c.l.b16 %v1905
    %v2122 = vunpack.c.h.b16 %v1905
    %v2123 = vunpack.c.l.b16 %v1906
    %v2124 = vunpack.c.h.b16 %v1906
    %v2125 = vunpack.c.l.b16 %v1907
    %v2126 = vunpack.c.h.b16 %v1907
    %v2127 = vunpack.c.l.b16 %v1908
    %v2128 = vunpack.c.h.b16 %v1908
    %v2129 = vunpack.c.l.b16 %v1909
    %v2130 = vunpack.c.h.b16 %v1909
    %v2131 = vunpack.c.l.b16 %v1910
    %v2132 = vunpack.c.h.b16 %v1910
    %v2133 = vunpack.c.l.b16 %v1911
    %v2134 = vunpack.c.h.b16 %v1911
    %v2135 = vunpack.c.l.b16 %v1912
    %v2136 = vunpack.c.h.b16 %v1912
    %v2137 = vunpack.c.l.b16 %v1913
    %v2138 = vunpack.c.h.b16 %v1913
    %v2139 = vunpack.c.l.b16 %v1914
    %v2140 = vunpack.c.h.b16 %v1914
    %v2141 = vunpack.c.l.b16 %v1915
    %v2142 = vunpack.c.h.b16 %v1915
    %v2143 = vunpack.c.l.b16 %v1916
    %v2144 = vunpack.c.h.b16 %v1916
    %v2145 = vunpack.c.l.b16 %v1917
    %v2146 = vunpack.c.h.b16 %v1917
    %v2147 = vunpack.c.l.b16 %v1918
    %v2148 = vunpack.c.h.b16 %v1918
    %v2149 = vunpack.c.l.b16 %v1919
    %v2150 = vunpack.c.h.b16 %v1919
    %v2151 = vunpack.c.l.b16 %v1920
    %v2152 = vunpack.c.h.b16 %v1920
    %v2153 = vunpack.c.l.b16 %v1921
    %v2154 = vunpack.c.h.b16 %v1921
    %v2155 = vunpack.c.l.b16 %v1922
    %v2156 = vunpack.c.h.b16 %v1922
    %v2157 = vunpack.c.l.b16 %v1923
    %v2158 = vunpack.c.h.b16 %v1923
    %v2159 = vunpack.c.l.b16 %v1924
    %v2160 = vunpack.c.h.b16 %v1924
    %v2161 = vunpack.c.l.b16 %v1925
    %v2162 = vunpack.c.h.b16 %v1925
    %v2163 = vunpack.c.l.b16 %v1926
    %v2164 = vunpack.c.h.b16 %v1926
    %v2165 = vunpack.c.l.b16 %v1927
    %v2166 = vunpack.c.h.b16 %v1927
    %v2167 = vunpack.c.l.b16 %v1928
    %v2168 = vunpack.c.h.b16 %v1928
    %v2169 = vunpack.c.l.b16 %v1929
    %v2170 = vunpack.c.h.b16 %v1929
    %v2171 = vunpack.c.l.b16 %v1930
    %v2172 = vunpack.c.h.b16 %v1930
    %v2173 = vunpack.c.l.b16 %v1931
    %v2174 = vunpack.c.h.b16 %v1931
    %v2175 = vunpack.c.l.b16 %v1932
    %v2176 = vunpack.c.h.b16 %v1932
    %v2177 = vunpack.c.l.b16 %v1933
    %v2178 = vunpack.c.h.b16 %v1933
    %v2179 = vunpack.c.l.b16 %v1934
    %v2180 = vunpack.c.h.b16 %v1934
    %v2181 = vunpack.c.l.b16 %v1935
    %v2182 = vunpack.c.h.b16 %v1935
    %v2183 = vunpack.c.l.b16 %v1936
    %v2184 = vunpack.c.h.b16 %v1936
    %v2185 = vunpack.c.l.b16 %v1937
    %v2186 = vunpack.c.h.b16 %v1937
    %v2187 = vunpack.c.l.b16 %v1938
    %v2188 = vunpack.c.h.b16 %v1938
    %v2189 = vunpack.c.l.b16 %v1939
    %v2190 = vunpack.c.h.b16 %v1939
    %v2191 = vunpack.c.l.b16 %v1940
    %v2192 = vunpack.c.h.b16 %v1940
    %v2193 = vunpack.c.l.b16 %v1941
    %v2194 = vunpack.c.h.b16 %v1941
    %v2195 = vunpack.c.l.b16 %v1942
    %v2196 = vunpack.c.h.b16 %v1942
    %v2197 = vunpack.c.l.b16 %v1943
    %v2198 = vunpack.c.h.b16 %v1943
    %v2199 = vunpack.c.l.b16 %v1944
    %v2200 = vunpack.c.h.b16 %v1944
    %v2201 = vunpack.c.l.b16 %v1945
    %v2202 = vunpack.c.h.b16 %v1945
    %v2203 = vunpack.c.l.b16 %v1946
    %v2204 = vunpack.c.h.b16 %v1946
    %v2205 = vunpack.c.l.b16 %v1947
    %v2206 = vunpack.c.h.b16 %v1947
    %v2207 = vunpack.c.l.b16 %v1948
    %v2208 = vunpack.c.h.b16 %v1948
    %v2209 = vunpack.c.l.b16 %v1949
    %v2210 = vunpack.c.h.b16 %v1949
    %v2211 = vunpack.c.l.b16 %v1950
    %v2212 = vunpack.c.h.b16 %v1950
    %v2213 = vunpack.c.l.b16 %v1951
    %v2214 = vunpack.c.h.b16 %v1951
    %v2215 = vunpack.c.l.b16 %v1952
    %v2216 = vunpack.c.h.b16 %v1952
    %v2217 = vunpack.c.l.b16 %v1953
    %v2218 = vunpack.c.h.b16 %v1953
    %v2219 = vunpack.c.l.b16 %v1954
    %v2220 = vunpack.c.h.b16 %v1954
    %v2221 = vunpack.c.l.b16 %v1955
    %v2222 = vunpack.c.h.b16 %v1955
    %v2223 = vunpack.c.l.b16 %v1956
    %v2224 = vunpack.c.h.b16 %v1956
    %v2225 = vunpack.c.l.b16 %v1957
    %v2226 = vunpack.c.h.b16 %v1957
    %v2227 = vunpack.c.l.b16 %v1958
    %v2228 = vunpack.c.h.b16 %v1958
    %v2229 = vunpack.c.l.b16 %v1959
    %v2230 = vunpack.c.h.b16 %v1959
    %v2231 = vunpack.c.l.b16 %v1960
    %v2232 = vunpack.c.h.b16 %v1960
    %v2233 = vunpack.c.l.b16 %v1961
    %v2234 = vunpack.c.h.b16 %v1961
    %v2235 = vunpack.c.l.b16 %v1962
    %v2236 = vunpack.c.h.b16 %v1962
    %v2237 = vunpack.c.l.b16 %v1963
    %v2238 = vunpack.c.h.b16 %v1963
    %v2239 = vunpack.c.l.b16 %v1964
    %v2240 = vunpack.c.h.b16 %v1964
    %v2241 = vunpack.c.l.b16 %v1965
    %v2242 = vunpack.c.h.b16 %v1965
    %v2243 = vunpack.c.l.b16 %v1966
    %v2244 = vunpack.c.h.b16 %v1966
    %v2245 = vunpack.c.l.b16 %v1967
    %v2246 = vunpack.c.h.b16 %v1967
    %v2247 = vpack.c.b16 %v2121, %v2119
    %v2248 = vpack.c.b16 %v2122, %v2120
    %v2249 = vpack.c.b16 %v2125, %v2123
    %v2250 = vpack.c.b16 %v2126, %v2124
    %v2251 = vpack.c.b16 %v2129, %v2127
    %v2252 = vpack.c.b16 %v2130, %v2128
    %v2253 = vpack.c.b16 %v2133, %v2131
    %v2254 = vpack.c.b16 %v2134, %v2132
    %v2255 = vpack.c.b16 %v2137, %v2135
    %v2256 = vpack.c.b16 %v2138, %v2136
    %v2257 = vpack.c.b16 %v2141, %v2139
    %v2258 = vpack.c.b16 %v2142, %v2140
    %v2259 = vpack.c.b16 %v2145, %v2143
    %v2260 = vpack.c.b16 %v2146, %v2144
    %v2261 = vpack.c.b16 %v2149, %v2147
    %v2262 = vpack.c.b16 %v2150, %v2148
    %v2263 = vpack.c.b16 %v2153, %v2151
    %v2264 = vpack.c.b16 %v2154, %v2152
    %v2265 = vpack.c.b16 %v2157, %v2155
    %v2266 = vpack.c.b16 %v2158, %v2156
    %v2267 = vpack.c.b16 %v2161, %v2159
    %v2268 = vpack.c.b16 %v2162, %v2160
    %v2269 = vpack.c.b16 %v2165, %v2163
    %v2270 = vpack.c.b16 %v2166, %v2164
    %v2271 = vpack.c.b16 %v2169, %v2167
    %v2272 = vpack.c.b16 %v2170, %v2168
    %v2273 = vpack.c.b16 %v2173, %v2171
    %v2274 = vpack.c.b16 %v2174, %v2172
    %v2275 = vpack.c.b16 %v2177, %v2175
    %v2276 = vpack.c.b16 %v2178, %v2176
    %v2277 = vpack.c.b16 %v2181, %v2179
    %v2278 = vpack.c.b16 %v2182, %v2180
    %v2279 = vpack.c.b16 %v2185, %v2183
    %v2280 = vpack.c.b16 %v2186, %v2184
    %v2281 = vpack.c.b16 %v2189, %v2187
    %v2282 = vpack.c.b16 %v2190, %v2188
    %v2283 = vpack.c.b16 %v2193, %v2191
    %v2284 = vpack.c.b16 %v2194, %v2192
    %v2285 = vpack.c.b16 %v2197, %v2195
    %v2286 = vpack.c.b16 %v2198, %v2196
    %v2287 = vpack.c.b16 %v2201, %v2199
    %v2288 = vpack.c.b16 %v2202, %v2200
    %v2289 = vpack.c.b16 %v2205, %v2203
    %v2290 = vpack.c.b16 %v2206, %v2204
    %v2291 = vpack.c.b16 %v2209, %v2207
    %v2292 = vpack.c.b16 %v2210, %v2208
    %v2293 = vpack.c.b16 %v2213, %v2211
    %v2294 = vpack.c.b16 %v2214, %v2212
    %v2295 = vpack.c.b16 %v2217, %v2215
    %v2296 = vpack.c.b16 %v2218, %v2216
    %v2297 = vpack.c.b16 %v2221, %v2219
    %v2298 = vpack.c.b16 %v2222, %v2220
    %v2299 = vpack.c.b16 %v2225, %v2223
    %v2300 = vpack.c.b16 %v2226, %v2224
    %v2301 = vpack.c.b16 %v2229, %v2227
    %v2302 = vpack.c.b16 %v2230, %v2228
    %v2303 = vpack.c.b16 %v2233, %v2231
    %v2304 = vpack.c.b16 %v2234, %v2232
    %v2305 = vpack.c.b16 %v2237, %v2235
    %v2306 = vpack.c.b16 %v2238, %v2236
    %v2307 = vpack.c.b16 %v2241, %v2239
    %v2308 = vpack.c.b16 %v2242, %v2240
    %v2309 = vpack.c.b16 %v2245, %v2243
    %v2310 = vpack.c.b16 %v2246, %v2244
    %2375 = vmatprep.subr.bf16.mxu0 %v2248
    %2376 = vmatpush1.bf16.msra.mxu0 %v2247
    %2377 = vmatprep.subr.bf16.mxu0 %v2250
    %2378 = vmatpush1.bf16.msra.mxu0 %v2249
    %2379 = vmatprep.subr.bf16.mxu0 %v2252
    %2380 = vmatpush1.bf16.msra.mxu0 %v2251
    %2381 = vmatprep.subr.bf16.mxu0 %v2254
    %2382 = vmatpush1.bf16.msra.mxu0 %v2253
    %2383 = vmatprep.subr.bf16.mxu0 %v2256
    %2384 = vmatpush1.bf16.msra.mxu0 %v2255
    %2385 = vmatprep.subr.bf16.mxu0 %v2258
    %2386 = vmatpush1.bf16.msra.mxu0 %v2257
    %2387 = vmatprep.subr.bf16.mxu0 %v2260
    %2388 = vmatpush1.bf16.msra.mxu0 %v2259
    %2389 = vmatprep.subr.bf16.mxu0 %v2262
    %2390 = vmatpush1.bf16.msra.mxu0 %v2261
    %2391 = vmatprep.subr.bf16.mxu0 %v2264
    %2392 = vmatpush1.bf16.msra.mxu0 %v2263
    %2393 = vmatprep.subr.bf16.mxu0 %v2266
    %2394 = vmatpush1.bf16.msra.mxu0 %v2265
    %2395 = vmatprep.subr.bf16.mxu0 %v2268
    %2396 = vmatpush1.bf16.msra.mxu0 %v2267
    %2397 = vmatprep.subr.bf16.mxu0 %v2270
    %2398 = vmatpush1.bf16.msra.mxu0 %v2269
    %2399 = vmatprep.subr.bf16.mxu0 %v2272
    %2400 = vmatpush1.bf16.msra.mxu0 %v2271
    %2401 = vmatprep.subr.bf16.mxu0 %v2274
    %2402 = vmatpush1.bf16.msra.mxu0 %v2273
    %2403 = vmatprep.subr.bf16.mxu0 %v2276
    %2404 = vmatpush1.bf16.msra.mxu0 %v2275
    %2405 = vmatprep.subr.bf16.mxu0 %v2278
    %2406 = vmatpush1.bf16.msra.mxu0 %v2277
    %2407 = vmatprep.mubr.bf16.mxu0 %v2012
    %2408 = vmatmul.mubr.bf16.gmra.mrb[0].mxu0 %v1995
    %v2409 = vpop.f32.mrb[0].mxu0
    %v2410 = vadd.f32 0.0, %v2409
    %v2411 = vpop.f32.mrb[0].mxu0
    %v2412 = vadd.f32 0.0, %v2411
    %v2413 = vpop.f32.mrb[0].mxu0
    %v2414 = vadd.f32 0.0, %v2413
    %v2415 = vpop.f32.mrb[0].mxu0
    %v2416 = vadd.f32 0.0, %v2415
    %2417 = vmatprep.mubr.bf16.mxu0 %v2011
    %2418 = vmatmul.mubr.bf16.gmra.mrb[0].mxu0 %v1994
    %v2419 = vpop.f32.mrb[0].mxu0
    %v2420 = vadd.f32 0.0, %v2419
    %v2421 = vpop.f32.mrb[0].mxu0
    %v2422 = vadd.f32 0.0, %v2421
    %v2423 = vpop.f32.mrb[0].mxu0
    %v2424 = vpop.f32.mrb[0].mxu0
    %2425 = vdwg.mxu0
    %2426 = vmatprep.subr.bf16.mxu0 %v2280
    %2427 = vmatpush1.bf16.msra.mxu0 %v2279
    %2428 = vmatprep.subr.bf16.mxu0 %v2282
    %2429 = vmatpush1.bf16.msra.mxu0 %v2281
    %2430 = vmatprep.subr.bf16.mxu0 %v2284
    %2431 = vmatpush1.bf16.msra.mxu0 %v2283
    %2432 = vmatprep.subr.bf16.mxu0 %v2286
    %2433 = vmatpush1.bf16.msra.mxu0 %v2285
    %2434 = vmatprep.subr.bf16.mxu0 %v2288
    %2435 = vmatpush1.bf16.msra.mxu0 %v2287
    %2436 = vmatprep.subr.bf16.mxu0 %v2290
    %2437 = vmatpush1.bf16.msra.mxu0 %v2289
    %2438 = vmatprep.subr.bf16.mxu0 %v2292
    %2439 = vmatpush1.bf16.msra.mxu0 %v2291
    %2440 = vmatprep.subr.bf16.mxu0 %v2294
    %2441 = vmatpush1.bf16.msra.mxu0 %v2293
    %2442 = vmatprep.subr.bf16.mxu0 %v2296
    %2443 = vmatpush1.bf16.msra.mxu0 %v2295
    %2444 = vmatprep.subr.bf16.mxu0 %v2298
    %2445 = vmatpush1.bf16.msra.mxu0 %v2297
    %2446 = vmatprep.subr.bf16.mxu0 %v2300
    %2447 = vmatpush1.bf16.msra.mxu0 %v2299
    %2448 = vmatprep.subr.bf16.mxu0 %v2302
    %2449 = vmatpush1.bf16.msra.mxu0 %v2301
    %2450 = vmatprep.subr.bf16.mxu0 %v2304
    %2451 = vmatpush1.bf16.msra.mxu0 %v2303
    %2452 = vmatprep.subr.bf16.mxu0 %v2306
    %2453 = vmatpush1.bf16.msra.mxu0 %v2305
    %2454 = vmatprep.subr.bf16.mxu0 %v2308
    %2455 = vmatpush1.bf16.msra.mxu0 %v2307
    %2456 = vmatprep.subr.bf16.mxu0 %v2310
    %2457 = vmatpush1.bf16.msra.mxu0 %v2309
    %2458 = vmatprep.mubr.bf16.mxu0 %v2046
    %2459 = vmatmul.mubr.bf16.gmra.mrb[0].mxu0 %v2029
    %v2460 = vpop.f32.mrb[0].mxu0
    %v2461 = vadd.f32 %v2410, %v2460
    %v2462 = vpop.f32.mrb[0].mxu0
    %v2463 = vadd.f32 %v2412, %v2462
    %v2464 = vpop.f32.mrb[0].mxu0
    %v2465 = vadd.f32 %v2414, %v2464
    %v2466 = vpop.f32.mrb[0].mxu0
    %v2467 = vadd.f32 %v2416, %v2466
    %2468 = vmatprep.mubr.bf16.mxu0 %v2045
    %2469 = vmatmul.mubr.bf16.gmra.mrb[0].mxu0 %v2028
    %v2470 = vpop.f32.mrb[0].mxu0
    %v2471 = vadd.f32 %v2420, %v2470
    %v2472 = vpop.f32.mrb[0].mxu0
    %v2473 = vadd.f32 %v2422, %v2472
    %v2474 = vpop.f32.mrb[0].mxu0
    %v2475 = vpop.f32.mrb[0].mxu0
    %2476 = vdwg.mxu0
    %v2477 = vadd.f32 %v1885, %v2461
    %v2478 = vadd.f32 %v1887, %v2463
    %v2479 = vadd.f32 %v1889, %v2465
    %v2480 = vadd.f32 %v1891, %v2467
    %v2481 = vadd.f32 %v1895, %v2471
    %v2482 = vadd.f32 %v1897, %v2473
    %v2483 = vld [vmem:[%s4] sm:$0xff]
    %v2485 = vlaneseq
    %v2486 = vshrl.u32 %v2485, 7
    %v2487 = vsub.s32 0, %v2486
    %v2488 = vrot.slane %v2483, %v2487
    %v2489 = vlaneseq
    %v2490 = vshrl.u32 %v2489, 7
    %v2491 = vsub.s32 4, %v2490
    %v2492 = vrot.slane %v2483, %v2491
    %v2495 = vlaneseq
    %v2496 = vshrl.u32 %v2495, 7
    %v2497 = vsub.s32 0, %v2496
    %v2498 = vrot.slane %v2488, %v2497
    %v2499 = vlaneseq
    %v2500 = vshrl.u32 %v2499, 7
    %v2501 = vsub.s32 0, %v2500
    %v2502 = vrot.slane %v2492, %v2501
    %v2503 = vadd.f32 %v2477, %v2498
    %v2504 = vadd.f32 %v2478, %v2502
    %v2505 = vadd.f32 %v2479, %v2498
    %v2506 = vadd.f32 %v2480, %v2502
    %v2507 = vadd.f32 %v2481, %v2498
    %v2508 = vadd.f32 %v2482, %v2502
    %v2509 = vmax.f32 %v2503, 0.0
    %v2510 = vmax.f32 %v2504, 0.0
    %v2511 = vmax.f32 %v2505, 0.0
    %v2512 = vmax.f32 %v2506, 0.0
    %v2513 = vmax.f32 %v2507, 0.0
    %v2514 = vmax.f32 %v2508, 0.0
    %v2515 = vmin.f32 %v2503, 0.0
    %v2516 = vmin.f32 %v2504, 0.0
    %v2517 = vmin.f32 %v2505, 0.0
    %v2518 = vmin.f32 %v2506, 0.0
    %v2519 = vmin.f32 %v2507, 0.0
    %v2520 = vmin.f32 %v2508, 0.0
    %v2521 = vlaneseq
    %v2522 = vshrl.u32 %v2521, 7
    %v2523 = vsub.s32 1, %v2522
    %v2524 = vrot.slane %v2483, %v2523
    %v2525 = vlaneseq
    %v2526 = vshrl.u32 %v2525, 7
    %v2527 = vsub.s32 5, %v2526
    %v2528 = vrot.slane %v2483, %v2527
    %v2531 = vlaneseq
    %v2532 = vshrl.u32 %v2531, 7
    %v2533 = vsub.s32 1, %v2532
    %v2534 = vrot.slane %v2524, %v2533
    %v2535 = vlaneseq
    %v2536 = vshrl.u32 %v2535, 7
    %v2537 = vsub.s32 1, %v2536
    %v2538 = vrot.slane %v2528, %v2537
    %v2539 = vmul.f32 %v2534, %v2515
    %v2540 = vmul.f32 %v2538, %v2516
    %v2541 = vmul.f32 %v2534, %v2517
    %v2542 = vmul.f32 %v2538, %v2518
    %v2543 = vmul.f32 %v2534, %v2519
    %v2544 = vmul.f32 %v2538, %v2520
    %v2545 = vadd.f32 %v2509, %v2539
    %v2546 = vadd.f32 %v2510, %v2540
    %v2547 = vadd.f32 %v2511, %v2541
    %v2548 = vadd.f32 %v2512, %v2542
    %v2549 = vadd.f32 %v2513, %v2543
    %v2550 = vadd.f32 %v2514, %v2544
    %v2551 = vlaneseq
    %v2552 = vshrl.u32 %v2551, 7
    %v2553 = vsub.s32 2, %v2552
    %v2554 = vrot.slane %v2483, %v2553
    %v2555 = vlaneseq
    %v2556 = vshrl.u32 %v2555, 7
    %v2557 = vsub.s32 6, %v2556
    %v2558 = vrot.slane %v2483, %v2557
    %v2561 = vlaneseq
    %v2562 = vshrl.u32 %v2561, 7
    %v2563 = vsub.s32 2, %v2562
    %v2564 = vrot.slane %v2554, %v2563
    %v2565 = vlaneseq
    %v2566 = vshrl.u32 %v2565, 7
    %v2567 = vsub.s32 2, %v2566
    %v2568 = vrot.slane %v2558, %v2567
    %v2569 = vmul.f32 %v2545, %v2564
    %v2570 = vmul.f32 %v2546, %v2568
    %v2571 = vmul.f32 %v2547, %v2564
    %v2572 = vmul.f32 %v2548, %v2568
    %v2573 = vmul.f32 %v2549, %v2564
    %v2574 = vmul.f32 %v2550, %v2568
    %v2575 = vlaneseq
    %v2576 = vshrl.u32 %v2575, 7
    %v2577 = vsub.s32 3, %v2576
    %v2578 = vrot.slane %v2483, %v2577
    %v2579 = vlaneseq
    %v2580 = vshrl.u32 %v2579, 7
    %v2581 = vsub.s32 7, %v2580
    %v2582 = vrot.slane %v2483, %v2581
    %v2585 = vlaneseq
    %v2586 = vshrl.u32 %v2585, 7
    %v2587 = vsub.s32 3, %v2586
    %v2588 = vrot.slane %v2578, %v2587
    %v2589 = vlaneseq
    %v2590 = vshrl.u32 %v2589, 7
    %v2591 = vsub.s32 3, %v2590
    %v2592 = vrot.slane %v2582, %v2591
    %v2593 = vadd.f32 %v2569, %v2588
    %v2594 = vadd.f32 %v2570, %v2592
    %v2595 = vadd.f32 %v2571, %v2588
    %v2596 = vadd.f32 %v2572, %v2592
    %v2597 = vadd.f32 %v2573, %v2588
    %v2598 = vadd.f32 %v2574, %v2592
    %v2599 = vpack.c.bf16 %v2595, %v2593
    %v2600 = vpack.c.bf16 %v2596, %v2594
    %v2601 = vpack.c.bf16 %v2597, %v2597
    %v2602 = vpack.c.bf16 %v2598, %v2598
    %v2607 = vunpack.c.l.b16 %v2599
    %v2608 = vunpack.c.l.b16 %v2600
    %v2609 = vunpack.c.h.b16 %v2599
    %v2610 = vunpack.c.h.b16 %v2600
    %v2611 = vunpack.c.l.b16 %v2601
    %v2612 = vunpack.c.l.b16 %v2602
    %v2613 = vpack.c.b16 %v2608, %v2607
    %v2614 = vpack.c.b16 %v2610, %v2609
    %v2615 = vpack.c.b16 %v2612, %v2611
    %2619 = vst [vmem:[#allocation3 + $0x10] sm:$0xff] %v2613
    %2620 = vst [vmem:[#allocation3 + $0x18] sm:$0xff] %v2614
    %2621 = vst [vmem:[#allocation3 + $0x20] sm:$0xff] %v2615
    %v2622 = vld [vmem:[#allocation3 + $0x8] sm:$0xcc]
    %v2623 = vld [vmem:[#allocation3 + $0x10] sm:$0xff]
    %v2624 = vld [vmem:[#allocation3 + $0x18] sm:$0xff]
    %v2625 = vld [vmem:[#allocation3 + $0x20] sm:$0xff]
    %v2626 = vld [vmem:[#allocation3 + $0x28] sm:$0x11]
    %v2627 = vld [vmem:[#allocation8] sm:$0xf]
    %v2628 = vld [vmem:[#allocation8 + $0x4] sm:$0xf]
    %v2629 = vld [vmem:[#allocation8 + $0x8] sm:$0xf]
    %v2630 = vld [vmem:[#allocation8 + $0xc] sm:$0xf]
    %v2631 = vld [vmem:[#allocation8 + $0x10] sm:$0xf]
    %v2632 = vld [vmem:[#allocation8 + $0x14] sm:$0xf]
    %v2633 = vld [vmem:[#allocation8 + $0x18] sm:$0xf]
    %v2634 = vld [vmem:[#allocation8 + $0x1c] sm:$0xf]
    %v2635 = vld [vmem:[#allocation8 + $0x20] sm:$0xf]
    %v2636 = vld [vmem:[#allocation8 + $0x24] sm:$0xf]
    %v2637 = vld [vmem:[#allocation8 + $0x28] sm:$0xf]
    %v2638 = vld [vmem:[#allocation8 + $0x2c] sm:$0xf]
    %v2639 = vld [vmem:[#allocation8 + $0x30] sm:$0xf]
    %v2640 = vld [vmem:[#allocation8 + $0x34] sm:$0xf]
    %v2641 = vld [vmem:[#allocation8 + $0x38] sm:$0xf]
    %v2642 = vld [vmem:[#allocation8 + $0x3c] sm:$0xf]
    %v2643 = vld [vmem:[#allocation8 + $0x40] sm:$0xf]
    %v2644 = vld [vmem:[#allocation8 + $0x44] sm:$0xf]
    %v2645 = vld [vmem:[#allocation8 + $0x48] sm:$0xf]
    %v2646 = vld [vmem:[#allocation8 + $0x4c] sm:$0xf]
    %v2647 = vld [vmem:[#allocation8 + $0x50] sm:$0xf]
    %v2648 = vld [vmem:[#allocation8 + $0x54] sm:$0xf]
    %v2649 = vld [vmem:[#allocation8 + $0x58] sm:$0xf]
    %v2650 = vld [vmem:[#allocation8 + $0x5c] sm:$0xf]
    %v2651 = vld [vmem:[#allocation8 + $0x60] sm:$0xf]
    %v2652 = vld [vmem:[#allocation8 + $0x64] sm:$0xf]
    %v2653 = vld [vmem:[#allocation8 + $0x68] sm:$0xf]
    %v2654 = vld [vmem:[#allocation8 + $0x6c] sm:$0xf]
    %v2655 = vld [vmem:[#allocation8 + $0x70] sm:$0xf]
    %v2656 = vld [vmem:[#allocation8 + $0x74] sm:$0xf]
    %v2657 = vld [vmem:[#allocation8 + $0x78] sm:$0xf]
    %v2658 = vld [vmem:[#allocation8 + $0x7c] sm:$0xf]
    %v2659 = vld [vmem:[#allocation3 + $0x8] sm:$0x88]
    %s2660 = scalar_lea.vmem [#allocation8], 128
    %v2661 = vld [vmem:[%s2660] sm:$0xf]
    %v2662 = vld [vmem:[%s2660 + $0x4] sm:$0xf]
    %v2663 = vld [vmem:[%s2660 + $0x8] sm:$0xf]
    %v2664 = vld [vmem:[%s2660 + $0xc] sm:$0xf]
    %v2665 = vld [vmem:[%s2660 + $0x10] sm:$0xf]
    %v2666 = vld [vmem:[%s2660 + $0x14] sm:$0xf]
    %v2667 = vld [vmem:[%s2660 + $0x18] sm:$0xf]
    %v2668 = vld [vmem:[%s2660 + $0x1c] sm:$0xf]
    %v2669 = vld [vmem:[%s2660 + $0x20] sm:$0xf]
    %v2670 = vld [vmem:[%s2660 + $0x24] sm:$0xf]
    %v2671 = vld [vmem:[%s2660 + $0x28] sm:$0xf]
    %v2672 = vld [vmem:[%s2660 + $0x2c] sm:$0xf]
    %v2673 = vld [vmem:[%s2660 + $0x30] sm:$0xf]
    %v2674 = vld [vmem:[%s2660 + $0x34] sm:$0xf]
    %v2675 = vld [vmem:[%s2660 + $0x38] sm:$0xf]
    %v2676 = vld [vmem:[%s2660 + $0x3c] sm:$0xf]
    %v2677 = vld [vmem:[%s2660 + $0x40] sm:$0xf]
    %v2678 = vld [vmem:[%s2660 + $0x44] sm:$0xf]
    %v2679 = vld [vmem:[%s2660 + $0x48] sm:$0xf]
    %v2680 = vld [vmem:[%s2660 + $0x4c] sm:$0xf]
    %v2681 = vld [vmem:[%s2660 + $0x50] sm:$0xf]
    %v2682 = vld [vmem:[%s2660 + $0x54] sm:$0xf]
    %v2683 = vld [vmem:[%s2660 + $0x58] sm:$0xf]
    %v2684 = vld [vmem:[%s2660 + $0x5c] sm:$0xf]
    %v2685 = vld [vmem:[%s2660 + $0x60] sm:$0xf]
    %v2686 = vld [vmem:[%s2660 + $0x64] sm:$0xf]
    %v2687 = vld [vmem:[%s2660 + $0x68] sm:$0xf]
    %v2688 = vld [vmem:[%s2660 + $0x6c] sm:$0xf]
    %v2689 = vld [vmem:[%s2660 + $0x70] sm:$0xf]
    %v2690 = vld [vmem:[%s2660 + $0x74] sm:$0xf]
    %v2691 = vld [vmem:[%s2660 + $0x78] sm:$0xf]
    %v2692 = vld [vmem:[%s2660 + $0x7c] sm:$0xf]
    %v2698 = vunpack.c.l.b16 %v2659
    %v2699 = vunpack.c.h.b16 %v2659
    %v2700 = vunpack.c.l.b16 %v2623
    %v2701 = vunpack.c.h.b16 %v2623
    %v2702 = vunpack.c.l.b16 %v2624
    %v2703 = vunpack.c.h.b16 %v2624
    %v2704 = vunpack.c.l.b16 %v2625
    %v2705 = vunpack.c.h.b16 %v2625
    %v2706 = vunpack.c.l.b16 %v2626
    %v2707 = vunpack.c.h.b16 %v2626
    %v2708 = vpack.c.b16 %v2700, %v2698
    %v2709 = vpack.c.b16 %v2701, %v2699
    %v2710 = vpack.c.b16 %v2704, %v2702
    %v2711 = vpack.c.b16 %v2705, %v2703
    %v2712 = vpack.c.b16 %v2706, %v2706
    %v2713 = vpack.c.b16 %v2707, %v2707
    %v2714 = vrot.slane %v2708, 3
    %v2715 = vrot.slane %v2710, 3
    %v2716 = vsel %vm950, %v2714, %v2715
    %v2717 = vrot.slane %v2709, 3
    %v2718 = vrot.slane %v2711, 3
    %v2719 = vsel %vm950, %v2717, %v2718
    %v2720 = vrot.slane %v2712, 3
    %v2721 = vsel %vm950, %v2715, %v2720
    %v2722 = vrot.slane %v2713, 3
    %v2723 = vsel %vm950, %v2718, %v2722
    %v2760 = vunpack.c.l.b16 %v2661
    %v2761 = vunpack.c.l.b16 %v2662
    %v2762 = vunpack.c.l.b16 %v2663
    %v2763 = vunpack.c.l.b16 %v2664
    %v2764 = vunpack.c.l.b16 %v2665
    %v2765 = vunpack.c.l.b16 %v2666
    %v2766 = vunpack.c.l.b16 %v2667
    %v2767 = vunpack.c.l.b16 %v2668
    %v2768 = vunpack.c.l.b16 %v2669
    %v2769 = vunpack.c.l.b16 %v2670
    %v2770 = vunpack.c.l.b16 %v2671
    %v2771 = vunpack.c.l.b16 %v2672
    %v2772 = vunpack.c.l.b16 %v2673
    %v2773 = vunpack.c.l.b16 %v2674
    %v2774 = vunpack.c.l.b16 %v2675
    %v2775 = vunpack.c.l.b16 %v2676
    %v2776 = vunpack.c.l.b16 %v2677
    %v2777 = vunpack.c.l.b16 %v2678
    %v2778 = vunpack.c.l.b16 %v2679
    %v2779 = vunpack.c.l.b16 %v2680
    %v2780 = vunpack.c.l.b16 %v2681
    %v2781 = vunpack.c.l.b16 %v2682
    %v2782 = vunpack.c.l.b16 %v2683
    %v2783 = vunpack.c.l.b16 %v2684
    %v2784 = vunpack.c.l.b16 %v2685
    %v2785 = vunpack.c.l.b16 %v2686
    %v2786 = vunpack.c.l.b16 %v2687
    %v2787 = vunpack.c.l.b16 %v2688
    %v2788 = vunpack.c.l.b16 %v2689
    %v2789 = vunpack.c.l.b16 %v2690
    %v2790 = vunpack.c.l.b16 %v2691
    %v2791 = vunpack.c.l.b16 %v2692
    %v2792 = vpack.c.b16 %v2761, %v2760
    %v2793 = vpack.c.b16 %v2763, %v2762
    %v2794 = vpack.c.b16 %v2765, %v2764
    %v2795 = vpack.c.b16 %v2767, %v2766
    %v2796 = vpack.c.b16 %v2769, %v2768
    %v2797 = vpack.c.b16 %v2771, %v2770
    %v2798 = vpack.c.b16 %v2773, %v2772
    %v2799 = vpack.c.b16 %v2775, %v2774
    %v2800 = vpack.c.b16 %v2777, %v2776
    %v2801 = vpack.c.b16 %v2779, %v2778
    %v2802 = vpack.c.b16 %v2781, %v2780
    %v2803 = vpack.c.b16 %v2783, %v2782
    %v2804 = vpack.c.b16 %v2785, %v2784
    %v2805 = vpack.c.b16 %v2787, %v2786
    %v2806 = vpack.c.b16 %v2789, %v2788
    %v2807 = vpack.c.b16 %v2791, %v2790
    %2824 = vmatprep.subr.bf16.mxu0 0
    %2825 = vmatpush1.bf16.msra.mxu0 %v2792
    %2826 = vmatprep.subr.bf16.mxu0 0
    %2827 = vmatpush1.bf16.msra.mxu0 %v2793
    %2828 = vmatprep.subr.bf16.mxu0 0
    %2829 = vmatpush1.bf16.msra.mxu0 %v2794
    %2830 = vmatprep.subr.bf16.mxu0 0
    %2831 = vmatpush1.bf16.msra.mxu0 %v2795
    %2832 = vmatprep.subr.bf16.mxu0 0
    %2833 = vmatpush1.bf16.msra.mxu0 %v2796
    %2834 = vmatprep.subr.bf16.mxu0 0
    %2835 = vmatpush1.bf16.msra.mxu0 %v2797
    %2836 = vmatprep.subr.bf16.mxu0 0
    %2837 = vmatpush1.bf16.msra.mxu0 %v2798
    %2838 = vmatprep.subr.bf16.mxu0 0
    %2839 = vmatpush1.bf16.msra.mxu0 %v2799
    %2840 = vmatprep.subr.bf16.mxu0 0
    %2841 = vmatpush1.bf16.msra.mxu0 %v2800
    %2842 = vmatprep.subr.bf16.mxu0 0
    %2843 = vmatpush1.bf16.msra.mxu0 %v2801
    %2844 = vmatprep.subr.bf16.mxu0 0
    %2845 = vmatpush1.bf16.msra.mxu0 %v2802
    %2846 = vmatprep.subr.bf16.mxu0 0
    %2847 = vmatpush1.bf16.msra.mxu0 %v2803
    %2848 = vmatprep.subr.bf16.mxu0 0
    %2849 = vmatpush1.bf16.msra.mxu0 %v2804
    %2850 = vmatprep.subr.bf16.mxu0 0
    %2851 = vmatpush1.bf16.msra.mxu0 %v2805
    %2852 = vmatprep.subr.bf16.mxu0 0
    %2853 = vmatpush1.bf16.msra.mxu0 %v2806
    %2854 = vmatprep.subr.bf16.mxu0 0
    %2855 = vmatpush1.bf16.msra.mxu0 %v2807
    %2856 = vmatprep.mubr.bf16.mxu0 %v2719
    %2857 = vmatmul.mubr.bf16.gmra.mrb[0].mxu0 %v2716
    %v2858 = vpop.f32.mrb[0].mxu0
    %v2859 = vadd.f32 0.0, %v2858
    %v2860 = vpop.f32.mrb[0].mxu0
    %v2861 = vpop.f32.mrb[0].mxu0
    %v2862 = vadd.f32 0.0, %v2861
    %v2863 = vpop.f32.mrb[0].mxu0
    %2864 = vmatprep.mubr.bf16.mxu0 %v2723
    %2865 = vmatmul.mubr.bf16.gmra.mrb[0].mxu0 %v2721
    %v2866 = vpop.f32.mrb[0].mxu0
    %v2867 = vadd.f32 0.0, %v2866
    %v2868 = vpop.f32.mrb[0].mxu0
    %v2869 = vpop.f32.mrb[0].mxu0
    %v2870 = vadd.f32 0.0, %v2869
    %v2871 = vpop.f32.mrb[0].mxu0
    %2872 = vdwg.mxu0
    %v2874 = vunpack.c.l.b16 %v2622
    %v2875 = vunpack.c.h.b16 %v2622
    %v2876 = vpack.c.b16 %v2700, %v2874
    %v2877 = vpack.c.b16 %v2701, %v2875
    %v2879 = vshrl.u32 %v2876, 16
    %v2881 = vrot.slane %v2879, 2
    %v2882 = vshll.u32 %v2876, 16
    %v2884 = vrot.slane %v2882, 3
    %v2885 = vor.u32 %v2881, %v2884
    %v2887 = vshrl.u32 %v2710, 16
    %v2889 = vrot.slane %v2887, 2
    %v2890 = vshll.u32 %v2710, 16
    %v2892 = vrot.slane %v2890, 3
    %v2893 = vor.u32 %v2889, %v2892
    %v2894 = vsel %vm92, %v2885, %v2893
    %v2896 = vshrl.u32 %v2877, 16
    %v2898 = vrot.slane %v2896, 2
    %v2899 = vshll.u32 %v2877, 16
    %v2901 = vrot.slane %v2899, 3
    %v2902 = vor.u32 %v2898, %v2901
    %v2904 = vshrl.u32 %v2711, 16
    %v2906 = vrot.slane %v2904, 2
    %v2907 = vshll.u32 %v2711, 16
    %v2909 = vrot.slane %v2907, 3
    %v2910 = vor.u32 %v2906, %v2909
    %v2911 = vsel %vm92, %v2902, %v2910
    %v2913 = vshll.u32 %v2712, 16
    %v2915 = vrot.slane %v2913, 3
    %v2916 = vsel %vm92, %v2893, %v2915
    %v2918 = vshll.u32 %v2713, 16
    %v2920 = vrot.slane %v2918, 3
    %v2921 = vsel %vm92, %v2910, %v2920
    %v2958 = vunpack.c.l.b16 %v2627
    %v2959 = vunpack.c.l.b16 %v2628
    %v2960 = vunpack.c.l.b16 %v2629
    %v2961 = vunpack.c.l.b16 %v2630
    %v2962 = vunpack.c.l.b16 %v2631
    %v2963 = vunpack.c.l.b16 %v2632
    %v2964 = vunpack.c.l.b16 %v2633
    %v2965 = vunpack.c.l.b16 %v2634
    %v2966 = vunpack.c.l.b16 %v2635
    %v2967 = vunpack.c.l.b16 %v2636
    %v2968 = vunpack.c.l.b16 %v2637
    %v2969 = vunpack.c.l.b16 %v2638
    %v2970 = vunpack.c.l.b16 %v2639
    %v2971 = vunpack.c.l.b16 %v2640
    %v2972 = vunpack.c.l.b16 %v2641
    %v2973 = vunpack.c.l.b16 %v2642
    %v2974 = vunpack.c.l.b16 %v2643
    %v2975 = vunpack.c.l.b16 %v2644
    %v2976 = vunpack.c.l.b16 %v2645
    %v2977 = vunpack.c.l.b16 %v2646
    %v2978 = vunpack.c.l.b16 %v2647
    %v2979 = vunpack.c.l.b16 %v2648
    %v2980 = vunpack.c.l.b16 %v2649
    %v2981 = vunpack.c.l.b16 %v2650
    %v2982 = vunpack.c.l.b16 %v2651
    %v2983 = vunpack.c.l.b16 %v2652
    %v2984 = vunpack.c.l.b16 %v2653
    %v2985 = vunpack.c.l.b16 %v2654
    %v2986 = vunpack.c.l.b16 %v2655
    %v2987 = vunpack.c.l.b16 %v2656
    %v2988 = vunpack.c.l.b16 %v2657
    %v2989 = vunpack.c.l.b16 %v2658
    %v2990 = vpack.c.b16 %v2959, %v2958
    %v2991 = vpack.c.b16 %v2961, %v2960
    %v2992 = vpack.c.b16 %v2963, %v2962
    %v2993 = vpack.c.b16 %v2965, %v2964
    %v2994 = vpack.c.b16 %v2967, %v2966
    %v2995 = vpack.c.b16 %v2969, %v2968
    %v2996 = vpack.c.b16 %v2971, %v2970
    %v2997 = vpack.c.b16 %v2973, %v2972
    %v2998 = vpack.c.b16 %v2975, %v2974
    %v2999 = vpack.c.b16 %v2977, %v2976
    %v3000 = vpack.c.b16 %v2979, %v2978
    %v3001 = vpack.c.b16 %v2981, %v2980
    %v3002 = vpack.c.b16 %v2983, %v2982
    %v3003 = vpack.c.b16 %v2985, %v2984
    %v3004 = vpack.c.b16 %v2987, %v2986
    %v3005 = vpack.c.b16 %v2989, %v2988
    %3022 = vmatprep.subr.bf16.mxu0 0
    %3023 = vmatpush1.bf16.msra.mxu0 %v2990
    %3024 = vmatprep.subr.bf16.mxu0 0
    %3025 = vmatpush1.bf16.msra.mxu0 %v2991
    %3026 = vmatprep.subr.bf16.mxu0 0
    %3027 = vmatpush1.bf16.msra.mxu0 %v2992
    %3028 = vmatprep.subr.bf16.mxu0 0
    %3029 = vmatpush1.bf16.msra.mxu0 %v2993
    %3030 = vmatprep.subr.bf16.mxu0 0
    %3031 = vmatpush1.bf16.msra.mxu0 %v2994
    %3032 = vmatprep.subr.bf16.mxu0 0
    %3033 = vmatpush1.bf16.msra.mxu0 %v2995
    %3034 = vmatprep.subr.bf16.mxu0 0
    %3035 = vmatpush1.bf16.msra.mxu0 %v2996
    %3036 = vmatprep.subr.bf16.mxu0 0
    %3037 = vmatpush1.bf16.msra.mxu0 %v2997
    %3038 = vmatprep.subr.bf16.mxu0 0
    %3039 = vmatpush1.bf16.msra.mxu0 %v2998
    %3040 = vmatprep.subr.bf16.mxu0 0
    %3041 = vmatpush1.bf16.msra.mxu0 %v2999
    %3042 = vmatprep.subr.bf16.mxu0 0
    %3043 = vmatpush1.bf16.msra.mxu0 %v3000
    %3044 = vmatprep.subr.bf16.mxu0 0
    %3045 = vmatpush1.bf16.msra.mxu0 %v3001
    %3046 = vmatprep.subr.bf16.mxu0 0
    %3047 = vmatpush1.bf16.msra.mxu0 %v3002
    %3048 = vmatprep.subr.bf16.mxu0 0
    %3049 = vmatpush1.bf16.msra.mxu0 %v3003
    %3050 = vmatprep.subr.bf16.mxu0 0
    %3051 = vmatpush1.bf16.msra.mxu0 %v3004
    %3052 = vmatprep.subr.bf16.mxu0 0
    %3053 = vmatpush1.bf16.msra.mxu0 %v3005
    %3054 = vmatprep.mubr.bf16.mxu0 %v2911
    %3055 = vmatmul.mubr.bf16.gmra.mrb[0].mxu0 %v2894
    %v3056 = vpop.f32.mrb[0].mxu0
    %v3057 = vadd.f32 %v2859, %v3056
    %v3058 = vpop.f32.mrb[0].mxu0
    %v3059 = vpop.f32.mrb[0].mxu0
    %v3060 = vadd.f32 %v2862, %v3059
    %v3061 = vpop.f32.mrb[0].mxu0
    %3062 = vmatprep.mubr.bf16.mxu0 %v2921
    %3063 = vmatmul.mubr.bf16.gmra.mrb[0].mxu0 %v2916
    %v3064 = vpop.f32.mrb[0].mxu0
    %v3065 = vadd.f32 %v2867, %v3064
    %v3066 = vpop.f32.mrb[0].mxu0
    %v3067 = vpop.f32.mrb[0].mxu0
    %v3068 = vadd.f32 %v2870, %v3067
    %v3069 = vpop.f32.mrb[0].mxu0
    %3070 = vdwg.mxu0
    %v3071 = vld [vmem:[#allocation3 + $0x28] sm:$0x33]
    %s3072 = scalar_lea.vmem [#allocation8], 256
    %v3073 = vld [vmem:[%s3072] sm:$0xf]
    %v3074 = vld [vmem:[%s3072 + $0x4] sm:$0xf]
    %v3075 = vld [vmem:[%s3072 + $0x8] sm:$0xf]
    %v3076 = vld [vmem:[%s3072 + $0xc] sm:$0xf]
    %v3077 = vld [vmem:[%s3072 + $0x10] sm:$0xf]
    %v3078 = vld [vmem:[%s3072 + $0x14] sm:$0xf]
    %v3079 = vld [vmem:[%s3072 + $0x18] sm:$0xf]
    %v3080 = vld [vmem:[%s3072 + $0x1c] sm:$0xf]
    %v3081 = vld [vmem:[%s3072 + $0x20] sm:$0xf]
    %v3082 = vld [vmem:[%s3072 + $0x24] sm:$0xf]
    %v3083 = vld [vmem:[%s3072 + $0x28] sm:$0xf]
    %v3084 = vld [vmem:[%s3072 + $0x2c] sm:$0xf]
    %v3085 = vld [vmem:[%s3072 + $0x30] sm:$0xf]
    %v3086 = vld [vmem:[%s3072 + $0x34] sm:$0xf]
    %v3087 = vld [vmem:[%s3072 + $0x38] sm:$0xf]
    %v3088 = vld [vmem:[%s3072 + $0x3c] sm:$0xf]
    %v3089 = vld [vmem:[%s3072 + $0x40] sm:$0xf]
    %v3090 = vld [vmem:[%s3072 + $0x44] sm:$0xf]
    %v3091 = vld [vmem:[%s3072 + $0x48] sm:$0xf]
    %v3092 = vld [vmem:[%s3072 + $0x4c] sm:$0xf]
    %v3093 = vld [vmem:[%s3072 + $0x50] sm:$0xf]
    %v3094 = vld [vmem:[%s3072 + $0x54] sm:$0xf]
    %v3095 = vld [vmem:[%s3072 + $0x58] sm:$0xf]
    %v3096 = vld [vmem:[%s3072 + $0x5c] sm:$0xf]
    %v3097 = vld [vmem:[%s3072 + $0x60] sm:$0xf]
    %v3098 = vld [vmem:[%s3072 + $0x64] sm:$0xf]
    %v3099 = vld [vmem:[%s3072 + $0x68] sm:$0xf]
    %v3100 = vld [vmem:[%s3072 + $0x6c] sm:$0xf]
    %v3101 = vld [vmem:[%s3072 + $0x70] sm:$0xf]
    %v3102 = vld [vmem:[%s3072 + $0x74] sm:$0xf]
    %v3103 = vld [vmem:[%s3072 + $0x78] sm:$0xf]
    %v3104 = vld [vmem:[%s3072 + $0x7c] sm:$0xf]
    %v3106 = vunpack.c.l.b16 %v3071
    %v3107 = vunpack.c.h.b16 %v3071
    %v3108 = vpack.c.b16 %v3106, %v3106
    %v3109 = vpack.c.b16 %v3107, %v3107
    %v3111 = vshrl.u32 %v2708, 16
    %v3113 = vrot.slane %v3111, 3
    %v3114 = vshll.u32 %v2708, 16
    %v3116 = vrot.slane %v3114, 4
    %v3117 = vor.u32 %v3113, %v3116
    %v3118 = vrot.slane %v2887, 3
    %v3119 = vrot.slane %v2890, 4
    %v3120 = vor.u32 %v3118, %v3119
    %v3121 = vsel %vm1978, %v3117, %v3120
    %v3123 = vshrl.u32 %v2709, 16
    %v3125 = vrot.slane %v3123, 3
    %v3126 = vshll.u32 %v2709, 16
    %v3128 = vrot.slane %v3126, 4
    %v3129 = vor.u32 %v3125, %v3128
    %v3130 = vrot.slane %v2904, 3
    %v3131 = vrot.slane %v2907, 4
    %v3132 = vor.u32 %v3130, %v3131
    %v3133 = vsel %vm1978, %v3129, %v3132
    %v3135 = vshrl.u32 %v3108, 16
    %v3137 = vrot.slane %v3135, 3
    %v3138 = vshll.u32 %v3108, 16
    %v3140 = vrot.slane %v3138, 4
    %v3141 = vor.u32 %v3137, %v3140
    %v3142 = vsel %vm1978, %v3120, %v3141
    %v3144 = vshrl.u32 %v3109, 16
    %v3146 = vrot.slane %v3144, 3
    %v3147 = vshll.u32 %v3109, 16
    %v3149 = vrot.slane %v3147, 4
    %v3150 = vor.u32 %v3146, %v3149
    %v3151 = vsel %vm1978, %v3132, %v3150
    %v3188 = vunpack.c.l.b16 %v3073
    %v3189 = vunpack.c.l.b16 %v3074
    %v3190 = vunpack.c.l.b16 %v3075
    %v3191 = vunpack.c.l.b16 %v3076
    %v3192 = vunpack.c.l.b16 %v3077
    %v3193 = vunpack.c.l.b16 %v3078
    %v3194 = vunpack.c.l.b16 %v3079
    %v3195 = vunpack.c.l.b16 %v3080
    %v3196 = vunpack.c.l.b16 %v3081
    %v3197 = vunpack.c.l.b16 %v3082
    %v3198 = vunpack.c.l.b16 %v3083
    %v3199 = vunpack.c.l.b16 %v3084
    %v3200 = vunpack.c.l.b16 %v3085
    %v3201 = vunpack.c.l.b16 %v3086
    %v3202 = vunpack.c.l.b16 %v3087
    %v3203 = vunpack.c.l.b16 %v3088
    %v3204 = vunpack.c.l.b16 %v3089
    %v3205 = vunpack.c.l.b16 %v3090
    %v3206 = vunpack.c.l.b16 %v3091
    %v3207 = vunpack.c.l.b16 %v3092
    %v3208 = vunpack.c.l.b16 %v3093
    %v3209 = vunpack.c.l.b16 %v3094
    %v3210 = vunpack.c.l.b16 %v3095
    %v3211 = vunpack.c.l.b16 %v3096
    %v3212 = vunpack.c.l.b16 %v3097
    %v3213 = vunpack.c.l.b16 %v3098
    %v3214 = vunpack.c.l.b16 %v3099
    %v3215 = vunpack.c.l.b16 %v3100
    %v3216 = vunpack.c.l.b16 %v3101
    %v3217 = vunpack.c.l.b16 %v3102
    %v3218 = vunpack.c.l.b16 %v3103
    %v3219 = vunpack.c.l.b16 %v3104
    %v3220 = vpack.c.b16 %v3189, %v3188
    %v3221 = vpack.c.b16 %v3191, %v3190
    %v3222 = vpack.c.b16 %v3193, %v3192
    %v3223 = vpack.c.b16 %v3195, %v3194
    %v3224 = vpack.c.b16 %v3197, %v3196
    %v3225 = vpack.c.b16 %v3199, %v3198
    %v3226 = vpack.c.b16 %v3201, %v3200
    %v3227 = vpack.c.b16 %v3203, %v3202
    %v3228 = vpack.c.b16 %v3205, %v3204
    %v3229 = vpack.c.b16 %v3207, %v3206
    %v3230 = vpack.c.b16 %v3209, %v3208
    %v3231 = vpack.c.b16 %v3211, %v3210
    %v3232 = vpack.c.b16 %v3213, %v3212
    %v3233 = vpack.c.b16 %v3215, %v3214
    %v3234 = vpack.c.b16 %v3217, %v3216
    %v3235 = vpack.c.b16 %v3219, %v3218
    %3252 = vmatprep.subr.bf16.mxu0 0
    %3253 = vmatpush1.bf16.msra.mxu0 %v3220
    %3254 = vmatprep.subr.bf16.mxu0 0
    %3255 = vmatpush1.bf16.msra.mxu0 %v3221
    %3256 = vmatprep.subr.bf16.mxu0 0
    %3257 = vmatpush1.bf16.msra.mxu0 %v3222
    %3258 = vmatprep.subr.bf16.mxu0 0
    %3259 = vmatpush1.bf16.msra.mxu0 %v3223
    %3260 = vmatprep.subr.bf16.mxu0 0
    %3261 = vmatpush1.bf16.msra.mxu0 %v3224
    %3262 = vmatprep.subr.bf16.mxu0 0
    %3263 = vmatpush1.bf16.msra.mxu0 %v3225
    %3264 = vmatprep.subr.bf16.mxu0 0
    %3265 = vmatpush1.bf16.msra.mxu0 %v3226
    %3266 = vmatprep.subr.bf16.mxu0 0
    %3267 = vmatpush1.bf16.msra.mxu0 %v3227
    %3268 = vmatprep.subr.bf16.mxu0 0
    %3269 = vmatpush1.bf16.msra.mxu0 %v3228
    %3270 = vmatprep.subr.bf16.mxu0 0
    %3271 = vmatpush1.bf16.msra.mxu0 %v3229
    %3272 = vmatprep.subr.bf16.mxu0 0
    %3273 = vmatpush1.bf16.msra.mxu0 %v3230
    %3274 = vmatprep.subr.bf16.mxu0 0
    %3275 = vmatpush1.bf16.msra.mxu0 %v3231
    %3276 = vmatprep.subr.bf16.mxu0 0
    %3277 = vmatpush1.bf16.msra.mxu0 %v3232
    %3278 = vmatprep.subr.bf16.mxu0 0
    %3279 = vmatpush1.bf16.msra.mxu0 %v3233
    %3280 = vmatprep.subr.bf16.mxu0 0
    %3281 = vmatpush1.bf16.msra.mxu0 %v3234
    %3282 = vmatprep.subr.bf16.mxu0 0
    %3283 = vmatpush1.bf16.msra.mxu0 %v3235
    %3284 = vmatprep.mubr.bf16.mxu0 %v3133
    %3285 = vmatmul.mubr.bf16.gmra.mrb[0].mxu0 %v3121
    %v3286 = vpop.f32.mrb[0].mxu0
    %v3287 = vadd.f32 0.0, %v3286
    %v3288 = vpop.f32.mrb[0].mxu0
    %v3289 = vpop.f32.mrb[0].mxu0
    %v3290 = vadd.f32 0.0, %v3289
    %v3291 = vpop.f32.mrb[0].mxu0
    %3292 = vmatprep.mubr.bf16.mxu0 %v3151
    %3293 = vmatmul.mubr.bf16.gmra.mrb[0].mxu0 %v3142
    %v3294 = vpop.f32.mrb[0].mxu0
    %v3295 = vadd.f32 0.0, %v3294
    %v3296 = vpop.f32.mrb[0].mxu0
    %v3297 = vpop.f32.mrb[0].mxu0
    %v3298 = vadd.f32 0.0, %v3297
    %v3299 = vpop.f32.mrb[0].mxu0
    %3300 = vdwg.mxu0
    %v3301 = vadd.f32 %v3057, %v3287
    %v3302 = vadd.f32 %v3060, %v3290
    %v3303 = vadd.f32 %v3065, %v3295
    %v3304 = vadd.f32 %v3068, %v3298
    %v3305 = vld [vmem:[%s6] sm:$0x1]
    %v3307 = vlaneseq
    %v3308 = vshrl.u32 %v3307, 7
    %v3309 = vsub.s32 0, %v3308
    %v3310 = vrot.slane %v3305, %v3309
    %v3312 = vadd.f32 %v3301, %v3310
    %v3313 = vadd.f32 %v3302, %v3310
    %v3314 = vadd.f32 %v3303, %v3310
    %v3315 = vadd.f32 %v3304, %v3310
    %3316 = vst [vmem:[%s7] sm:$0xff] %v3312
    %3317 = vst [vmem:[%s7 + $0x8] sm:$0xff] %v3313
    %3318 = vst [vmem:[%s7 + $0x10] sm:$0xff] %v3314
    %3319 = vst [vmem:[%s7 + $0x18] sm:$0xf] %v3315
    %s3320 = scalar_lea.vmem %s0, 24
    %v3321 = vld [vmem:[%s3320] sm:$0xff]
    %v3322 = vld [vmem:[%s3320 + $0x8] sm:$0xff]
    %v3323 = vld [vmem:[%s3320 + $0x10] sm:$0x33]
    %v3324 = vld [vmem:[#allocation4] sm:$0xff]
    %v3325 = vld [vmem:[#allocation4 + $0x8] sm:$0xff]
    %v3326 = vld [vmem:[#allocation4 + $0x10] sm:$0xff]
    %v3327 = vld [vmem:[#allocation4 + $0x18] sm:$0xff]
    %v3328 = vld [vmem:[#allocation4 + $0x20] sm:$0xff]
    %v3329 = vld [vmem:[#allocation4 + $0x28] sm:$0xff]
    %v3330 = vld [vmem:[#allocation4 + $0x30] sm:$0xff]
    %v3331 = vld [vmem:[#allocation4 + $0x38] sm:$0xff]
    %v3332 = vld [vmem:[#allocation4 + $0x40] sm:$0xff]
    %v3333 = vld [vmem:[#allocation4 + $0x48] sm:$0xff]
    %v3334 = vld [vmem:[#allocation4 + $0x50] sm:$0xff]
    %v3335 = vld [vmem:[#allocation4 + $0x58] sm:$0xff]
    %v3336 = vld [vmem:[#allocation4 + $0x60] sm:$0xff]
    %v3337 = vld [vmem:[#allocation4 + $0x68] sm:$0xff]
    %v3338 = vld [vmem:[#allocation4 + $0x70] sm:$0xff]
    %v3339 = vld [vmem:[#allocation4 + $0x78] sm:$0xff]
    %v3340 = vld [vmem:[#allocation4 + $0x80] sm:$0xff]
    %v3341 = vld [vmem:[#allocation4 + $0x88] sm:$0xff]
    %v3342 = vld [vmem:[#allocation4 + $0x90] sm:$0xff]
    %v3343 = vld [vmem:[#allocation4 + $0x98] sm:$0xff]
    %v3344 = vld [vmem:[#allocation4 + $0xa0] sm:$0xff]
    %v3345 = vld [vmem:[#allocation4 + $0xa8] sm:$0xff]
    %v3346 = vld [vmem:[#allocation4 + $0xb0] sm:$0xff]
    %v3347 = vld [vmem:[#allocation4 + $0xb8] sm:$0xff]
    %v3348 = vld [vmem:[#allocation4 + $0xc0] sm:$0xff]
    %v3349 = vld [vmem:[#allocation4 + $0xc8] sm:$0xff]
    %v3350 = vld [vmem:[#allocation4 + $0xd0] sm:$0xff]
    %v3351 = vld [vmem:[#allocation4 + $0xd8] sm:$0xff]
    %v3352 = vld [vmem:[#allocation4 + $0xe0] sm:$0xff]
    %v3353 = vld [vmem:[#allocation4 + $0xe8] sm:$0xff]
    %v3354 = vld [vmem:[#allocation4 + $0xf0] sm:$0xff]
    %v3355 = vld [vmem:[#allocation4 + $0xf8] sm:$0xff]
    %v3356 = vld [vmem:[#allocation4 + $0x100] sm:$0xff]
    %v3357 = vld [vmem:[#allocation4 + $0x108] sm:$0xff]
    %v3358 = vld [vmem:[#allocation4 + $0x110] sm:$0xff]
    %v3359 = vld [vmem:[#allocation4 + $0x118] sm:$0xff]
    %v3360 = vld [vmem:[#allocation4 + $0x120] sm:$0xff]
    %v3361 = vld [vmem:[#allocation4 + $0x128] sm:$0xff]
    %v3362 = vld [vmem:[#allocation4 + $0x130] sm:$0xff]
    %v3363 = vld [vmem:[#allocation4 + $0x138] sm:$0xff]
    %v3364 = vld [vmem:[#allocation4 + $0x140] sm:$0xff]
    %v3365 = vld [vmem:[#allocation4 + $0x148] sm:$0xff]
    %v3366 = vld [vmem:[#allocation4 + $0x150] sm:$0xff]
    %v3367 = vld [vmem:[#allocation4 + $0x158] sm:$0xff]
    %v3368 = vld [vmem:[#allocation4 + $0x160] sm:$0xff]
    %v3369 = vld [vmem:[#allocation4 + $0x168] sm:$0xff]
    %v3370 = vld [vmem:[#allocation4 + $0x170] sm:$0xff]
    %v3371 = vld [vmem:[#allocation4 + $0x178] sm:$0xff]
    %v3372 = vld [vmem:[%s2] sm:$0xff]
    %v3373 = vld [vmem:[%s2 + $0x8] sm:$0xff]
    %v3376 = vlaneseq
    %v3377 = vshrl.u32 %v3376, 7
    %v3378 = vsub.s32 0, %v3377
    %v3379 = vrot.slane %v3372, %v3378
    %v3380 = vlaneseq
    %v3381 = vshrl.u32 %v3380, 7
    %v3382 = vsub.s32 4, %v3381
    %v3383 = vrot.slane %v3372, %v3382
    %v3384 = vlaneseq
    %v3385 = vshrl.u32 %v3384, 7
    %v3386 = vsub.s32 0, %v3385
    %v3387 = vrot.slane %v3373, %v3386
    %v3388 = vlaneseq
    %v3389 = vshrl.u32 %v3388, 7
    %v3390 = vsub.s32 4, %v3389
    %v3391 = vrot.slane %v3373, %v3390
    %v3396 = vlaneseq
    %v3397 = vshrl.u32 %v3396, 7
    %v3398 = vsub.s32 0, %v3397
    %v3399 = vrot.slane %v3379, %v3398
    %v3400 = vlaneseq
    %v3401 = vshrl.u32 %v3400, 7
    %v3402 = vsub.s32 0, %v3401
    %v3403 = vrot.slane %v3383, %v3402
    %v3404 = vlaneseq
    %v3405 = vshrl.u32 %v3404, 7
    %v3406 = vsub.s32 0, %v3405
    %v3407 = vrot.slane %v3387, %v3406
    %v3408 = vlaneseq
    %v3409 = vshrl.u32 %v3408, 7
    %v3410 = vsub.s32 0, %v3409
    %v3411 = vrot.slane %v3391, %v3410
    %v3415 = vunpack.c.l.b16 %v3321
    %v3416 = vunpack.c.h.b16 %v3321
    %v3417 = vunpack.c.l.b16 %v3322
    %v3418 = vunpack.c.h.b16 %v3322
    %v3419 = vunpack.c.l.b16 %v3323
    %v3420 = vunpack.c.h.b16 %v3323
    %v3421 = vpack.c.b16 %v3417, %v3415
    %v3422 = vpack.c.b16 %v3418, %v3416
    %v3423 = vpack.c.b16 %v3419, %v3419
    %v3424 = vpack.c.b16 %v3420, %v3420
    %v3475 = vunpack.c.l.b16 %v3324
    %v3476 = vunpack.c.h.b16 %v3324
    %v3477 = vunpack.c.l.b16 %v3325
    %v3478 = vunpack.c.h.b16 %v3325
    %v3479 = vunpack.c.l.b16 %v3326
    %v3480 = vunpack.c.h.b16 %v3326
    %v3481 = vunpack.c.l.b16 %v3327
    %v3482 = vunpack.c.h.b16 %v3327
    %v3483 = vunpack.c.l.b16 %v3328
    %v3484 = vunpack.c.h.b16 %v3328
    %v3485 = vunpack.c.l.b16 %v3329
    %v3486 = vunpack.c.h.b16 %v3329
    %v3487 = vunpack.c.l.b16 %v3330
    %v3488 = vunpack.c.h.b16 %v3330
    %v3489 = vunpack.c.l.b16 %v3331
    %v3490 = vunpack.c.h.b16 %v3331
    %v3491 = vunpack.c.l.b16 %v3332
    %v3492 = vunpack.c.h.b16 %v3332
    %v3493 = vunpack.c.l.b16 %v3333
    %v3494 = vunpack.c.h.b16 %v3333
    %v3495 = vunpack.c.l.b16 %v3334
    %v3496 = vunpack.c.h.b16 %v3334
    %v3497 = vunpack.c.l.b16 %v3335
    %v3498 = vunpack.c.h.b16 %v3335
    %v3499 = vunpack.c.l.b16 %v3336
    %v3500 = vunpack.c.h.b16 %v3336
    %v3501 = vunpack.c.l.b16 %v3337
    %v3502 = vunpack.c.h.b16 %v3337
    %v3503 = vunpack.c.l.b16 %v3338
    %v3504 = vunpack.c.h.b16 %v3338
    %v3505 = vunpack.c.l.b16 %v3339
    %v3506 = vunpack.c.h.b16 %v3339
    %v3507 = vunpack.c.l.b16 %v3340
    %v3508 = vunpack.c.h.b16 %v3340
    %v3509 = vunpack.c.l.b16 %v3341
    %v3510 = vunpack.c.h.b16 %v3341
    %v3511 = vunpack.c.l.b16 %v3342
    %v3512 = vunpack.c.h.b16 %v3342
    %v3513 = vunpack.c.l.b16 %v3343
    %v3514 = vunpack.c.h.b16 %v3343
    %v3515 = vunpack.c.l.b16 %v3344
    %v3516 = vunpack.c.h.b16 %v3344
    %v3517 = vunpack.c.l.b16 %v3345
    %v3518 = vunpack.c.h.b16 %v3345
    %v3519 = vunpack.c.l.b16 %v3346
    %v3520 = vunpack.c.h.b16 %v3346
    %v3521 = vunpack.c.l.b16 %v3347
    %v3522 = vunpack.c.h.b16 %v3347
    %v3523 = vunpack.c.l.b16 %v3348
    %v3524 = vunpack.c.h.b16 %v3348
    %v3525 = vunpack.c.l.b16 %v3349
    %v3526 = vunpack.c.h.b16 %v3349
    %v3527 = vunpack.c.l.b16 %v3350
    %v3528 = vunpack.c.h.b16 %v3350
    %v3529 = vunpack.c.l.b16 %v3351
    %v3530 = vunpack.c.h.b16 %v3351
    %v3531 = vunpack.c.l.b16 %v3352
    %v3532 = vunpack.c.h.b16 %v3352
    %v3533 = vunpack.c.l.b16 %v3353
    %v3534 = vunpack.c.h.b16 %v3353
    %v3535 = vunpack.c.l.b16 %v3354
    %v3536 = vunpack.c.h.b16 %v3354
    %v3537 = vunpack.c.l.b16 %v3355
    %v3538 = vunpack.c.h.b16 %v3355
    %v3539 = vunpack.c.l.b16 %v3356
    %v3540 = vunpack.c.h.b16 %v3356
    %v3541 = vunpack.c.l.b16 %v3357
    %v3542 = vunpack.c.h.b16 %v3357
    %v3543 = vunpack.c.l.b16 %v3358
    %v3544 = vunpack.c.h.b16 %v3358
    %v3545 = vunpack.c.l.b16 %v3359
    %v3546 = vunpack.c.h.b16 %v3359
    %v3547 = vunpack.c.l.b16 %v3360
    %v3548 = vunpack.c.h.b16 %v3360
    %v3549 = vunpack.c.l.b16 %v3361
    %v3550 = vunpack.c.h.b16 %v3361
    %v3551 = vunpack.c.l.b16 %v3362
    %v3552 = vunpack.c.h.b16 %v3362
    %v3553 = vunpack.c.l.b16 %v3363
    %v3554 = vunpack.c.h.b16 %v3363
    %v3555 = vunpack.c.l.b16 %v3364
    %v3556 = vunpack.c.h.b16 %v3364
    %v3557 = vunpack.c.l.b16 %v3365
    %v3558 = vunpack.c.h.b16 %v3365
    %v3559 = vunpack.c.l.b16 %v3366
    %v3560 = vunpack.c.h.b16 %v3366
    %v3561 = vunpack.c.l.b16 %v3367
    %v3562 = vunpack.c.h.b16 %v3367
    %v3563 = vunpack.c.l.b16 %v3368
    %v3564 = vunpack.c.h.b16 %v3368
    %v3565 = vunpack.c.l.b16 %v3369
    %v3566 = vunpack.c.h.b16 %v3369
    %v3567 = vunpack.c.l.b16 %v3370
    %v3568 = vunpack.c.h.b16 %v3370
    %v3569 = vunpack.c.l.b16 %v3371
    %v3570 = vunpack.c.h.b16 %v3371
    %v3571 = vpack.c.b16 %v3479, %v3475
    %v3572 = vpack.c.b16 %v3480, %v3476
    %v3573 = vpack.c.b16 %v3481, %v3477
    %v3574 = vpack.c.b16 %v3482, %v3478
    %v3575 = vpack.c.b16 %v3487, %v3483
    %v3576 = vpack.c.b16 %v3488, %v3484
    %v3577 = vpack.c.b16 %v3489, %v3485
    %v3578 = vpack.c.b16 %v3490, %v3486
    %v3579 = vpack.c.b16 %v3495, %v3491
    %v3580 = vpack.c.b16 %v3496, %v3492
    %v3581 = vpack.c.b16 %v3497, %v3493
    %v3582 = vpack.c.b16 %v3498, %v3494
    %v3583 = vpack.c.b16 %v3503, %v3499
    %v3584 = vpack.c.b16 %v3504, %v3500
    %v3585 = vpack.c.b16 %v3505, %v3501
    %v3586 = vpack.c.b16 %v3506, %v3502
    %v3587 = vpack.c.b16 %v3511, %v3507
    %v3588 = vpack.c.b16 %v3512, %v3508
    %v3589 = vpack.c.b16 %v3513, %v3509
    %v3590 = vpack.c.b16 %v3514, %v3510
    %v3591 = vpack.c.b16 %v3519, %v3515
    %v3592 = vpack.c.b16 %v3520, %v3516
    %v3593 = vpack.c.b16 %v3521, %v3517
    %v3594 = vpack.c.b16 %v3522, %v3518
    %v3595 = vpack.c.b16 %v3527, %v3523
    %v3596 = vpack.c.b16 %v3528, %v3524
    %v3597 = vpack.c.b16 %v3529, %v3525
    %v3598 = vpack.c.b16 %v3530, %v3526
    %v3599 = vpack.c.b16 %v3535, %v3531
    %v3600 = vpack.c.b16 %v3536, %v3532
    %v3601 = vpack.c.b16 %v3537, %v3533
    %v3602 = vpack.c.b16 %v3538, %v3534
    %v3603 = vpack.c.b16 %v3543, %v3539
    %v3604 = vpack.c.b16 %v3544, %v3540
    %v3605 = vpack.c.b16 %v3545, %v3541
    %v3606 = vpack.c.b16 %v3546, %v3542
    %v3607 = vpack.c.b16 %v3551, %v3547
    %v3608 = vpack.c.b16 %v3552, %v3548
    %v3609 = vpack.c.b16 %v3553, %v3549
    %v3610 = vpack.c.b16 %v3554, %v3550
    %v3611 = vpack.c.b16 %v3559, %v3555
    %v3612 = vpack.c.b16 %v3560, %v3556
    %v3613 = vpack.c.b16 %v3561, %v3557
    %v3614 = vpack.c.b16 %v3562, %v3558
    %v3615 = vpack.c.b16 %v3567, %v3563
    %v3616 = vpack.c.b16 %v3568, %v3564
    %v3617 = vpack.c.b16 %v3569, %v3565
    %v3618 = vpack.c.b16 %v3570, %v3566
    %v3668 = vsel %vm444, %v3422, 0
    %v3671 = vsel %vm444, %v3424, 0
    %3673 = vmatprep.subr.bf16.mxu0 %v3572
    %3674 = vmatpush1.bf16.msra.mxu0 %v3571
    %3675 = vmatprep.subr.bf16.mxu0 %v3576
    %3676 = vmatpush1.bf16.msra.mxu0 %v3575
    %3677 = vmatprep.subr.bf16.mxu0 %v3580
    %3678 = vmatpush1.bf16.msra.mxu0 %v3579
    %3679 = vmatprep.subr.bf16.mxu0 %v3584
    %3680 = vmatpush1.bf16.msra.mxu0 %v3583
    %3681 = vmatprep.subr.bf16.mxu0 %v3588
    %3682 = vmatpush1.bf16.msra.mxu0 %v3587
    %3683 = vmatprep.subr.bf16.mxu0 %v3592
    %3684 = vmatpush1.bf16.msra.mxu0 %v3591
    %3685 = vmatprep.subr.bf16.mxu0 %v3596
    %3686 = vmatpush1.bf16.msra.mxu0 %v3595
    %3687 = vmatprep.subr.bf16.mxu0 %v3600
    %3688 = vmatpush1.bf16.msra.mxu0 %v3599
    %3689 = vmatprep.subr.bf16.mxu0 %v3604
    %3690 = vmatpush1.bf16.msra.mxu0 %v3603
    %3691 = vmatprep.subr.bf16.mxu0 %v3608
    %3692 = vmatpush1.bf16.msra.mxu0 %v3607
    %3693 = vmatprep.subr.bf16.mxu0 %v3612
    %3694 = vmatpush1.bf16.msra.mxu0 %v3611
    %3695 = vmatprep.subr.bf16.mxu0 %v3616
    %3696 = vmatpush1.bf16.msra.mxu0 %v3615
    %3697 = vmatprep.subr.bf16.mxu0 0
    %3698 = vmatpush1.bf16.msra.mxu0 0
    %3699 = vmatprep.subr.bf16.mxu0 0
    %3700 = vmatpush1.bf16.msra.mxu0 0
    %3701 = vmatprep.subr.bf16.mxu0 0
    %3702 = vmatpush1.bf16.msra.mxu0 0
    %3703 = vmatprep.subr.bf16.mxu0 0
    %3704 = vmatpush1.bf16.msra.mxu0 0
    %3705 = vmatprep.mubr.bf16.mxu0 %v3668
    %3706 = vmatmul.mubr.bf16.gmra.mrb[0].mxu0 %v3421
    %v3707 = vpop.f32.mrb[0].mxu0
    %v3708 = vadd.f32 %v3399, %v3707
    %v3709 = vpop.f32.mrb[0].mxu0
    %v3710 = vadd.f32 %v3403, %v3709
    %v3711 = vpop.f32.mrb[0].mxu0
    %v3712 = vadd.f32 %v3399, %v3711
    %v3713 = vpop.f32.mrb[0].mxu0
    %v3714 = vadd.f32 %v3403, %v3713
    %3715 = vmatprep.mubr.bf16.mxu0 %v3671
    %3716 = vmatmul.mubr.bf16.gmra.mrb[0].mxu0 %v3423
    %v3717 = vpop.f32.mrb[0].mxu0
    %v3718 = vadd.f32 %v3399, %v3717
    %v3719 = vpop.f32.mrb[0].mxu0
    %v3720 = vadd.f32 %v3403, %v3719
    %v3721 = vpop.f32.mrb[0].mxu0
    %v3722 = vpop.f32.mrb[0].mxu0
    %3723 = vdwg.mxu0
    %3724 = vmatprep.subr.bf16.mxu0 %v3574
    %3725 = vmatpush1.bf16.msra.mxu0 %v3573
    %3726 = vmatprep.subr.bf16.mxu0 %v3578
    %3727 = vmatpush1.bf16.msra.mxu0 %v3577
    %3728 = vmatprep.subr.bf16.mxu0 %v3582
    %3729 = vmatpush1.bf16.msra.mxu0 %v3581
    %3730 = vmatprep.subr.bf16.mxu0 %v3586
    %3731 = vmatpush1.bf16.msra.mxu0 %v3585
    %3732 = vmatprep.subr.bf16.mxu0 %v3590
    %3733 = vmatpush1.bf16.msra.mxu0 %v3589
    %3734 = vmatprep.subr.bf16.mxu0 %v3594
    %3735 = vmatpush1.bf16.msra.mxu0 %v3593
    %3736 = vmatprep.subr.bf16.mxu0 %v3598
    %3737 = vmatpush1.bf16.msra.mxu0 %v3597
    %3738 = vmatprep.subr.bf16.mxu0 %v3602
    %3739 = vmatpush1.bf16.msra.mxu0 %v3601
    %3740 = vmatprep.subr.bf16.mxu0 %v3606
    %3741 = vmatpush1.bf16.msra.mxu0 %v3605
    %3742 = vmatprep.subr.bf16.mxu0 %v3610
    %3743 = vmatpush1.bf16.msra.mxu0 %v3609
    %3744 = vmatprep.subr.bf16.mxu0 %v3614
    %3745 = vmatpush1.bf16.msra.mxu0 %v3613
    %3746 = vmatprep.subr.bf16.mxu0 %v3618
    %3747 = vmatpush1.bf16.msra.mxu0 %v3617
    %3748 = vmatprep.subr.bf16.mxu0 0
    %3749 = vmatpush1.bf16.msra.mxu0 0
    %3750 = vmatprep.subr.bf16.mxu0 0
    %3751 = vmatpush1.bf16.msra.mxu0 0
    %3752 = vmatprep.subr.bf16.mxu0 0
    %3753 = vmatpush1.bf16.msra.mxu0 0
    %3754 = vmatprep.subr.bf16.mxu0 0
    %3755 = vmatpush1.bf16.msra.mxu0 0
    %3756 = vmatprep.mubr.bf16.mxu0 %v3668
    %3757 = vmatmul.mubr.bf16.gmra.mrb[0].mxu0 %v3421
    %v3758 = vpop.f32.mrb[0].mxu0
    %v3759 = vadd.f32 %v3407, %v3758
    %v3760 = vpop.f32.mrb[0].mxu0
    %v3761 = vadd.f32 %v3411, %v3760
    %v3762 = vpop.f32.mrb[0].mxu0
    %v3763 = vadd.f32 %v3407, %v3762
    %v3764 = vpop.f32.mrb[0].mxu0
    %v3765 = vadd.f32 %v3411, %v3764
    %3766 = vmatprep.mubr.bf16.mxu0 %v3671
    %3767 = vmatmul.mubr.bf16.gmra.mrb[0].mxu0 %v3423
    %v3768 = vpop.f32.mrb[0].mxu0
    %v3769 = vadd.f32 %v3407, %v3768
    %v3770 = vpop.f32.mrb[0].mxu0
    %v3771 = vadd.f32 %v3411, %v3770
    %v3772 = vpop.f32.mrb[0].mxu0
    %v3773 = vpop.f32.mrb[0].mxu0
    %3774 = vdwg.mxu0
    %v3775 = vmax.f32 %v3708, 0.0
    %v3776 = vmax.f32 %v3710, 0.0
    %v3777 = vmax.f32 %v3759, 0.0
    %v3778 = vmax.f32 %v3761, 0.0
    %v3779 = vmax.f32 %v3712, 0.0
    %v3780 = vmax.f32 %v3714, 0.0
    %v3781 = vmax.f32 %v3763, 0.0
    %v3782 = vmax.f32 %v3765, 0.0
    %v3783 = vmax.f32 %v3718, 0.0
    %v3784 = vmax.f32 %v3720, 0.0
    %v3785 = vmax.f32 %v3769, 0.0
    %v3786 = vmax.f32 %v3771, 0.0
    %v3787 = vmin.f32 %v3708, 0.0
    %v3788 = vmin.f32 %v3710, 0.0
    %v3789 = vmin.f32 %v3759, 0.0
    %v3790 = vmin.f32 %v3761, 0.0
    %v3791 = vmin.f32 %v3712, 0.0
    %v3792 = vmin.f32 %v3714, 0.0
    %v3793 = vmin.f32 %v3763, 0.0
    %v3794 = vmin.f32 %v3765, 0.0
    %v3795 = vmin.f32 %v3718, 0.0
    %v3796 = vmin.f32 %v3720, 0.0
    %v3797 = vmin.f32 %v3769, 0.0
    %v3798 = vmin.f32 %v3771, 0.0
    %v3799 = vlaneseq
    %v3800 = vshrl.u32 %v3799, 7
    %v3801 = vsub.s32 1, %v3800
    %v3802 = vrot.slane %v3372, %v3801
    %v3803 = vlaneseq
    %v3804 = vshrl.u32 %v3803, 7
    %v3805 = vsub.s32 5, %v3804
    %v3806 = vrot.slane %v3372, %v3805
    %v3807 = vlaneseq
    %v3808 = vshrl.u32 %v3807, 7
    %v3809 = vsub.s32 1, %v3808
    %v3810 = vrot.slane %v3373, %v3809
    %v3811 = vlaneseq
    %v3812 = vshrl.u32 %v3811, 7
    %v3813 = vsub.s32 5, %v3812
    %v3814 = vrot.slane %v3373, %v3813
    %v3819 = vlaneseq
    %v3820 = vshrl.u32 %v3819, 7
    %v3821 = vsub.s32 1, %v3820
    %v3822 = vrot.slane %v3802, %v3821
    %v3823 = vlaneseq
    %v3824 = vshrl.u32 %v3823, 7
    %v3825 = vsub.s32 1, %v3824
    %v3826 = vrot.slane %v3806, %v3825
    %v3827 = vlaneseq
    %v3828 = vshrl.u32 %v3827, 7
    %v3829 = vsub.s32 1, %v3828
    %v3830 = vrot.slane %v3810, %v3829
    %v3831 = vlaneseq
    %v3832 = vshrl.u32 %v3831, 7
    %v3833 = vsub.s32 1, %v3832
    %v3834 = vrot.slane %v3814, %v3833
    %v3835 = vmul.f32 %v3822, %v3787
    %v3836 = vmul.f32 %v3826, %v3788
    %v3837 = vmul.f32 %v3830, %v3789
    %v3838 = vmul.f32 %v3834, %v3790
    %v3839 = vmul.f32 %v3822, %v3791
    %v3840 = vmul.f32 %v3826, %v3792
    %v3841 = vmul.f32 %v3830, %v3793
    %v3842 = vmul.f32 %v3834, %v3794
    %v3843 = vmul.f32 %v3822, %v3795
    %v3844 = vmul.f32 %v3826, %v3796
    %v3845 = vmul.f32 %v3830, %v3797
    %v3846 = vmul.f32 %v3834, %v3798
    %v3847 = vadd.f32 %v3775, %v3835
    %v3848 = vadd.f32 %v3776, %v3836
    %v3849 = vadd.f32 %v3777, %v3837
    %v3850 = vadd.f32 %v3778, %v3838
    %v3851 = vadd.f32 %v3779, %v3839
    %v3852 = vadd.f32 %v3780, %v3840
    %v3853 = vadd.f32 %v3781, %v3841
    %v3854 = vadd.f32 %v3782, %v3842
    %v3855 = vadd.f32 %v3783, %v3843
    %v3856 = vadd.f32 %v3784, %v3844
    %v3857 = vadd.f32 %v3785, %v3845
    %v3858 = vadd.f32 %v3786, %v3846
    %v3859 = vlaneseq
    %v3860 = vshrl.u32 %v3859, 7
    %v3861 = vsub.s32 2, %v3860
    %v3862 = vrot.slane %v3372, %v3861
    %v3863 = vlaneseq
    %v3864 = vshrl.u32 %v3863, 7
    %v3865 = vsub.s32 6, %v3864
    %v3866 = vrot.slane %v3372, %v3865
    %v3867 = vlaneseq
    %v3868 = vshrl.u32 %v3867, 7
    %v3869 = vsub.s32 2, %v3868
    %v3870 = vrot.slane %v3373, %v3869
    %v3871 = vlaneseq
    %v3872 = vshrl.u32 %v3871, 7
    %v3873 = vsub.s32 6, %v3872
    %v3874 = vrot.slane %v3373, %v3873
    %v3879 = vlaneseq
    %v3880 = vshrl.u32 %v3879, 7
    %v3881 = vsub.s32 2, %v3880
    %v3882 = vrot.slane %v3862, %v3881
    %v3883 = vlaneseq
    %v3884 = vshrl.u32 %v3883, 7
    %v3885 = vsub.s32 2, %v3884
    %v3886 = vrot.slane %v3866, %v3885
    %v3887 = vlaneseq
    %v3888 = vshrl.u32 %v3887, 7
    %v3889 = vsub.s32 2, %v3888
    %v3890 = vrot.slane %v3870, %v3889
    %v3891 = vlaneseq
    %v3892 = vshrl.u32 %v3891, 7
    %v3893 = vsub.s32 2, %v3892
    %v3894 = vrot.slane %v3874, %v3893
    %v3895 = vmul.f32 %v3847, %v3882
    %v3896 = vmul.f32 %v3848, %v3886
    %v3897 = vmul.f32 %v3849, %v3890
    %v3898 = vmul.f32 %v3850, %v3894
    %v3899 = vmul.f32 %v3851, %v3882
    %v3900 = vmul.f32 %v3852, %v3886
    %v3901 = vmul.f32 %v3853, %v3890
    %v3902 = vmul.f32 %v3854, %v3894
    %v3903 = vmul.f32 %v3855, %v3882
    %v3904 = vmul.f32 %v3856, %v3886
    %v3905 = vmul.f32 %v3857, %v3890
    %v3906 = vmul.f32 %v3858, %v3894
    %v3907 = vlaneseq
    %v3908 = vshrl.u32 %v3907, 7
    %v3909 = vsub.s32 3, %v3908
    %v3910 = vrot.slane %v3372, %v3909
    %v3911 = vlaneseq
    %v3912 = vshrl.u32 %v3911, 7
    %v3913 = vsub.s32 7, %v3912
    %v3914 = vrot.slane %v3372, %v3913
    %v3915 = vlaneseq
    %v3916 = vshrl.u32 %v3915, 7
    %v3917 = vsub.s32 3, %v3916
    %v3918 = vrot.slane %v3373, %v3917
    %v3919 = vlaneseq
    %v3920 = vshrl.u32 %v3919, 7
    %v3921 = vsub.s32 7, %v3920
    %v3922 = vrot.slane %v3373, %v3921
    %v3927 = vlaneseq
    %v3928 = vshrl.u32 %v3927, 7
    %v3929 = vsub.s32 3, %v3928
    %v3930 = vrot.slane %v3910, %v3929
    %v3931 = vlaneseq
    %v3932 = vshrl.u32 %v3931, 7
    %v3933 = vsub.s32 3, %v3932
    %v3934 = vrot.slane %v3914, %v3933
    %v3935 = vlaneseq
    %v3936 = vshrl.u32 %v3935, 7
    %v3937 = vsub.s32 3, %v3936
    %v3938 = vrot.slane %v3918, %v3937
    %v3939 = vlaneseq
    %v3940 = vshrl.u32 %v3939, 7
    %v3941 = vsub.s32 3, %v3940
    %v3942 = vrot.slane %v3922, %v3941
    %v3943 = vadd.f32 %v3895, %v3930
    %v3944 = vadd.f32 %v3896, %v3934
    %v3945 = vadd.f32 %v3897, %v3938
    %v3946 = vadd.f32 %v3898, %v3942
    %v3947 = vadd.f32 %v3899, %v3930
    %v3948 = vadd.f32 %v3900, %v3934
    %v3949 = vadd.f32 %v3901, %v3938
    %v3950 = vadd.f32 %v3902, %v3942
    %v3951 = vadd.f32 %v3903, %v3930
    %v3952 = vadd.f32 %v3904, %v3934
    %v3953 = vadd.f32 %v3905, %v3938
    %v3954 = vadd.f32 %v3906, %v3942
    %v3955 = vpack.c.bf16 %v3947, %v3943
    %v3956 = vpack.c.bf16 %v3948, %v3944
    %v3957 = vpack.c.bf16 %v3949, %v3945
    %v3958 = vpack.c.bf16 %v3950, %v3946
    %v3959 = vpack.c.bf16 %v3951, %v3951
    %v3960 = vpack.c.bf16 %v3952, %v3952
    %v3961 = vpack.c.bf16 %v3953, %v3953
    %v3962 = vpack.c.bf16 %v3954, %v3954
    %v3971 = vunpack.c.l.b16 %v3955
    %v3972 = vunpack.c.l.b16 %v3956
    %v3973 = vunpack.c.l.b16 %v3957
    %v3974 = vunpack.c.l.b16 %v3958
    %v3975 = vunpack.c.h.b16 %v3955
    %v3976 = vunpack.c.h.b16 %v3956
    %v3977 = vunpack.c.h.b16 %v3957
    %v3978 = vunpack.c.h.b16 %v3958
    %v3979 = vunpack.c.l.b16 %v3959
    %v3980 = vunpack.c.l.b16 %v3960
    %v3981 = vunpack.c.l.b16 %v3961
    %v3982 = vunpack.c.l.b16 %v3962
    %v3983 = vpack.c.b16 %v3972, %v3971
    %v3984 = vpack.c.b16 %v3974, %v3973
    %v3985 = vpack.c.b16 %v3976, %v3975
    %v3986 = vpack.c.b16 %v3978, %v3977
    %v3987 = vpack.c.b16 %v3980, %v3979
    %v3988 = vpack.c.b16 %v3982, %v3981
    %3995 = vst [vmem:[#allocation2 + $0x20] sm:$0xff] %v3983
    %3996 = vst [vmem:[#allocation2 + $0x28] sm:$0xff] %v3984
    %3997 = vst [vmem:[#allocation2 + $0x30] sm:$0xff] %v3985
    %3998 = vst [vmem:[#allocation2 + $0x38] sm:$0xff] %v3986
    %3999 = vst [vmem:[#allocation2 + $0x40] sm:$0x33] %v3987
    %4000 = vst [vmem:[#allocation2 + $0x48] sm:$0x33] %v3988
    %v4001 = vld [vmem:[#allocation2 + $0x10] sm:$0xcc]
    %v4002 = vld [vmem:[#allocation2 + $0x18] sm:$0xcc]
    %v4003 = vld [vmem:[#allocation2 + $0x20] sm:$0xff]
    %v4004 = vld [vmem:[#allocation2 + $0x28] sm:$0xff]
    %v4005 = vld [vmem:[#allocation2 + $0x30] sm:$0xff]
    %v4006 = vld [vmem:[#allocation2 + $0x38] sm:$0xff]
    %v4007 = vld [vmem:[#allocation2 + $0x40] sm:$0x77]
    %v4008 = vld [vmem:[#allocation2 + $0x48] sm:$0x77]
    %v4009 = vld [vmem:[#allocation6] sm:$0xff]
    %v4010 = vld [vmem:[#allocation6 + $0x8] sm:$0xff]
    %v4011 = vld [vmem:[#allocation6 + $0x10] sm:$0xff]
    %v4012 = vld [vmem:[#allocation6 + $0x18] sm:$0xff]
    %v4013 = vld [vmem:[#allocation6 + $0x20] sm:$0xff]
    %v4014 = vld [vmem:[#allocation6 + $0x28] sm:$0xff]
    %v4015 = vld [vmem:[#allocation6 + $0x30] sm:$0xff]
    %v4016 = vld [vmem:[#allocation6 + $0x38] sm:$0xff]
    %v4017 = vld [vmem:[#allocation6 + $0x40] sm:$0xff]
    %v4018 = vld [vmem:[#allocation6 + $0x48] sm:$0xff]
    %v4019 = vld [vmem:[#allocation6 + $0x50] sm:$0xff]
    %v4020 = vld [vmem:[#allocation6 + $0x58] sm:$0xff]
    %v4021 = vld [vmem:[#allocation6 + $0x60] sm:$0xff]
    %v4022 = vld [vmem:[#allocation6 + $0x68] sm:$0xff]
    %v4023 = vld [vmem:[#allocation6 + $0x70] sm:$0xff]
    %v4024 = vld [vmem:[#allocation6 + $0x78] sm:$0xff]
    %v4025 = vld [vmem:[#allocation6 + $0x80] sm:$0xff]
    %v4026 = vld [vmem:[#allocation6 + $0x88] sm:$0xff]
    %v4027 = vld [vmem:[#allocation6 + $0x90] sm:$0xff]
    %v4028 = vld [vmem:[#allocation6 + $0x98] sm:$0xff]
    %v4029 = vld [vmem:[#allocation6 + $0xa0] sm:$0xff]
    %v4030 = vld [vmem:[#allocation6 + $0xa8] sm:$0xff]
    %v4031 = vld [vmem:[#allocation6 + $0xb0] sm:$0xff]
    %v4032 = vld [vmem:[#allocation6 + $0xb8] sm:$0xff]
    %v4033 = vld [vmem:[#allocation6 + $0xc0] sm:$0xff]
    %v4034 = vld [vmem:[#allocation6 + $0xc8] sm:$0xff]
    %v4035 = vld [vmem:[#allocation6 + $0xd0] sm:$0xff]
    %v4036 = vld [vmem:[#allocation6 + $0xd8] sm:$0xff]
    %v4037 = vld [vmem:[#allocation6 + $0xe0] sm:$0xff]
    %v4038 = vld [vmem:[#allocation6 + $0xe8] sm:$0xff]
    %v4039 = vld [vmem:[#allocation6 + $0xf0] sm:$0xff]
    %v4040 = vld [vmem:[#allocation6 + $0xf8] sm:$0xff]
    %v4041 = vld [vmem:[#allocation6 + $0x100] sm:$0xff]
    %v4042 = vld [vmem:[#allocation6 + $0x108] sm:$0xff]
    %v4043 = vld [vmem:[#allocation6 + $0x110] sm:$0xff]
    %v4044 = vld [vmem:[#allocation6 + $0x118] sm:$0xff]
    %v4045 = vld [vmem:[#allocation6 + $0x120] sm:$0xff]
    %v4046 = vld [vmem:[#allocation6 + $0x128] sm:$0xff]
    %v4047 = vld [vmem:[#allocation6 + $0x130] sm:$0xff]
    %v4048 = vld [vmem:[#allocation6 + $0x138] sm:$0xff]
    %v4049 = vld [vmem:[#allocation6 + $0x140] sm:$0xff]
    %v4050 = vld [vmem:[#allocation6 + $0x148] sm:$0xff]
    %v4051 = vld [vmem:[#allocation6 + $0x150] sm:$0xff]
    %v4052 = vld [vmem:[#allocation6 + $0x158] sm:$0xff]
    %v4053 = vld [vmem:[#allocation6 + $0x160] sm:$0xff]
    %v4054 = vld [vmem:[#allocation6 + $0x168] sm:$0xff]
    %v4055 = vld [vmem:[#allocation6 + $0x170] sm:$0xff]
    %v4056 = vld [vmem:[#allocation6 + $0x178] sm:$0xff]
    %v4057 = vld [vmem:[#allocation6 + $0x180] sm:$0xff]
    %v4058 = vld [vmem:[#allocation6 + $0x188] sm:$0xff]
    %v4059 = vld [vmem:[#allocation6 + $0x190] sm:$0xff]
    %v4060 = vld [vmem:[#allocation6 + $0x198] sm:$0xff]
    %v4061 = vld [vmem:[#allocation6 + $0x1a0] sm:$0xff]
    %v4062 = vld [vmem:[#allocation6 + $0x1a8] sm:$0xff]
    %v4063 = vld [vmem:[#allocation6 + $0x1b0] sm:$0xff]
    %v4064 = vld [vmem:[#allocation6 + $0x1b8] sm:$0xff]
    %v4065 = vld [vmem:[#allocation6 + $0x1c0] sm:$0xff]
    %v4066 = vld [vmem:[#allocation6 + $0x1c8] sm:$0xff]
    %v4067 = vld [vmem:[#allocation6 + $0x1d0] sm:$0xff]
    %v4068 = vld [vmem:[#allocation6 + $0x1d8] sm:$0xff]
    %v4069 = vld [vmem:[#allocation6 + $0x1e0] sm:$0xff]
    %v4070 = vld [vmem:[#allocation6 + $0x1e8] sm:$0xff]
    %v4071 = vld [vmem:[#allocation6 + $0x1f0] sm:$0xff]
    %v4072 = vld [vmem:[#allocation6 + $0x1f8] sm:$0xff]
    %v4073 = vld [vmem:[#allocation2 + $0x10] sm:$0x88]
    %v4074 = vld [vmem:[#allocation2 + $0x18] sm:$0x88]
    %v4075 = vld [vmem:[%s853] sm:$0xff]
    %v4076 = vld [vmem:[%s853 + $0x8] sm:$0xff]
    %v4077 = vld [vmem:[%s853 + $0x10] sm:$0xff]
    %v4078 = vld [vmem:[%s853 + $0x18] sm:$0xff]
    %v4079 = vld [vmem:[%s853 + $0x20] sm:$0xff]
    %v4080 = vld [vmem:[%s853 + $0x28] sm:$0xff]
    %v4081 = vld [vmem:[%s853 + $0x30] sm:$0xff]
    %v4082 = vld [vmem:[%s853 + $0x38] sm:$0xff]
    %v4083 = vld [vmem:[%s853 + $0x40] sm:$0xff]
    %v4084 = vld [vmem:[%s853 + $0x48] sm:$0xff]
    %v4085 = vld [vmem:[%s853 + $0x50] sm:$0xff]
    %v4086 = vld [vmem:[%s853 + $0x58] sm:$0xff]
    %v4087 = vld [vmem:[%s853 + $0x60] sm:$0xff]
    %v4088 = vld [vmem:[%s853 + $0x68] sm:$0xff]
    %v4089 = vld [vmem:[%s853 + $0x70] sm:$0xff]
    %v4090 = vld [vmem:[%s853 + $0x78] sm:$0xff]
    %v4091 = vld [vmem:[%s853 + $0x80] sm:$0xff]
    %v4092 = vld [vmem:[%s853 + $0x88] sm:$0xff]
    %v4093 = vld [vmem:[%s853 + $0x90] sm:$0xff]
    %v4094 = vld [vmem:[%s853 + $0x98] sm:$0xff]
    %v4095 = vld [vmem:[%s853 + $0xa0] sm:$0xff]
    %v4096 = vld [vmem:[%s853 + $0xa8] sm:$0xff]
    %v4097 = vld [vmem:[%s853 + $0xb0] sm:$0xff]
    %v4098 = vld [vmem:[%s853 + $0xb8] sm:$0xff]
    %v4099 = vld [vmem:[%s853 + $0xc0] sm:$0xff]
    %v4100 = vld [vmem:[%s853 + $0xc8] sm:$0xff]
    %v4101 = vld [vmem:[%s853 + $0xd0] sm:$0xff]
    %v4102 = vld [vmem:[%s853 + $0xd8] sm:$0xff]
    %v4103 = vld [vmem:[%s853 + $0xe0] sm:$0xff]
    %v4104 = vld [vmem:[%s853 + $0xe8] sm:$0xff]
    %v4105 = vld [vmem:[%s853 + $0xf0] sm:$0xff]
    %v4106 = vld [vmem:[%s853 + $0xf8] sm:$0xff]
    %v4107 = vld [vmem:[%s853 + $0x100] sm:$0xff]
    %v4108 = vld [vmem:[%s853 + $0x108] sm:$0xff]
    %v4109 = vld [vmem:[%s853 + $0x110] sm:$0xff]
    %v4110 = vld [vmem:[%s853 + $0x118] sm:$0xff]
    %v4111 = vld [vmem:[%s853 + $0x120] sm:$0xff]
    %v4112 = vld [vmem:[%s853 + $0x128] sm:$0xff]
    %v4113 = vld [vmem:[%s853 + $0x130] sm:$0xff]
    %v4114 = vld [vmem:[%s853 + $0x138] sm:$0xff]
    %v4115 = vld [vmem:[%s853 + $0x140] sm:$0xff]
    %v4116 = vld [vmem:[%s853 + $0x148] sm:$0xff]
    %v4117 = vld [vmem:[%s853 + $0x150] sm:$0xff]
    %v4118 = vld [vmem:[%s853 + $0x158] sm:$0xff]
    %v4119 = vld [vmem:[%s853 + $0x160] sm:$0xff]
    %v4120 = vld [vmem:[%s853 + $0x168] sm:$0xff]
    %v4121 = vld [vmem:[%s853 + $0x170] sm:$0xff]
    %v4122 = vld [vmem:[%s853 + $0x178] sm:$0xff]
    %v4123 = vld [vmem:[%s853 + $0x180] sm:$0xff]
    %v4124 = vld [vmem:[%s853 + $0x188] sm:$0xff]
    %v4125 = vld [vmem:[%s853 + $0x190] sm:$0xff]
    %v4126 = vld [vmem:[%s853 + $0x198] sm:$0xff]
    %v4127 = vld [vmem:[%s853 + $0x1a0] sm:$0xff]
    %v4128 = vld [vmem:[%s853 + $0x1a8] sm:$0xff]
    %v4129 = vld [vmem:[%s853 + $0x1b0] sm:$0xff]
    %v4130 = vld [vmem:[%s853 + $0x1b8] sm:$0xff]
    %v4131 = vld [vmem:[%s853 + $0x1c0] sm:$0xff]
    %v4132 = vld [vmem:[%s853 + $0x1c8] sm:$0xff]
    %v4133 = vld [vmem:[%s853 + $0x1d0] sm:$0xff]
    %v4134 = vld [vmem:[%s853 + $0x1d8] sm:$0xff]
    %v4135 = vld [vmem:[%s853 + $0x1e0] sm:$0xff]
    %v4136 = vld [vmem:[%s853 + $0x1e8] sm:$0xff]
    %v4137 = vld [vmem:[%s853 + $0x1f0] sm:$0xff]
    %v4138 = vld [vmem:[%s853 + $0x1f8] sm:$0xff]
    %v4147 = vunpack.c.l.b16 %v4073
    %v4148 = vunpack.c.h.b16 %v4073
    %v4149 = vunpack.c.l.b16 %v4074
    %v4150 = vunpack.c.h.b16 %v4074
    %v4151 = vunpack.c.l.b16 %v4003
    %v4152 = vunpack.c.h.b16 %v4003
    %v4153 = vunpack.c.l.b16 %v4004
    %v4154 = vunpack.c.h.b16 %v4004
    %v4155 = vunpack.c.l.b16 %v4005
    %v4156 = vunpack.c.h.b16 %v4005
    %v4157 = vunpack.c.l.b16 %v4006
    %v4158 = vunpack.c.h.b16 %v4006
    %v4159 = vunpack.c.l.b16 %v4007
    %v4160 = vunpack.c.h.b16 %v4007
    %v4161 = vunpack.c.l.b16 %v4008
    %v4162 = vunpack.c.h.b16 %v4008
    %v4163 = vpack.c.b16 %v4151, %v4147
    %v4164 = vpack.c.b16 %v4152, %v4148
    %v4165 = vpack.c.b16 %v4153, %v4149
    %v4166 = vpack.c.b16 %v4154, %v4150
    %v4167 = vpack.c.b16 %v4159, %v4155
    %v4168 = vpack.c.b16 %v4160, %v4156
    %v4169 = vpack.c.b16 %v4161, %v4157
    %v4170 = vpack.c.b16 %v4162, %v4158
    %v4171 = vrot.slane %v4163, 3
    %v4172 = vrot.slane %v4167, 3
    %v4173 = vsel %vm950, %v4171, %v4172
    %v4174 = vrot.slane %v4164, 3
    %v4175 = vrot.slane %v4168, 3
    %v4176 = vsel %vm950, %v4174, %v4175
    %v4177 = vrot.slane %v4165, 3
    %v4178 = vrot.slane %v4169, 3
    %v4179 = vsel %vm950, %v4177, %v4178
    %v4180 = vrot.slane %v4166, 3
    %v4181 = vrot.slane %v4170, 3
    %v4182 = vsel %vm950, %v4180, %v4181
    %v4255 = vunpack.c.l.b16 %v4075
    %v4256 = vunpack.c.h.b16 %v4075
    %v4257 = vunpack.c.l.b16 %v4076
    %v4258 = vunpack.c.h.b16 %v4076
    %v4259 = vunpack.c.l.b16 %v4077
    %v4260 = vunpack.c.h.b16 %v4077
    %v4261 = vunpack.c.l.b16 %v4078
    %v4262 = vunpack.c.h.b16 %v4078
    %v4263 = vunpack.c.l.b16 %v4079
    %v4264 = vunpack.c.h.b16 %v4079
    %v4265 = vunpack.c.l.b16 %v4080
    %v4266 = vunpack.c.h.b16 %v4080
    %v4267 = vunpack.c.l.b16 %v4081
    %v4268 = vunpack.c.h.b16 %v4081
    %v4269 = vunpack.c.l.b16 %v4082
    %v4270 = vunpack.c.h.b16 %v4082
    %v4271 = vunpack.c.l.b16 %v4083
    %v4272 = vunpack.c.h.b16 %v4083
    %v4273 = vunpack.c.l.b16 %v4084
    %v4274 = vunpack.c.h.b16 %v4084
    %v4275 = vunpack.c.l.b16 %v4085
    %v4276 = vunpack.c.h.b16 %v4085
    %v4277 = vunpack.c.l.b16 %v4086
    %v4278 = vunpack.c.h.b16 %v4086
    %v4279 = vunpack.c.l.b16 %v4087
    %v4280 = vunpack.c.h.b16 %v4087
    %v4281 = vunpack.c.l.b16 %v4088
    %v4282 = vunpack.c.h.b16 %v4088
    %v4283 = vunpack.c.l.b16 %v4089
    %v4284 = vunpack.c.h.b16 %v4089
    %v4285 = vunpack.c.l.b16 %v4090
    %v4286 = vunpack.c.h.b16 %v4090
    %v4287 = vunpack.c.l.b16 %v4091
    %v4288 = vunpack.c.h.b16 %v4091
    %v4289 = vunpack.c.l.b16 %v4092
    %v4290 = vunpack.c.h.b16 %v4092
    %v4291 = vunpack.c.l.b16 %v4093
    %v4292 = vunpack.c.h.b16 %v4093
    %v4293 = vunpack.c.l.b16 %v4094
    %v4294 = vunpack.c.h.b16 %v4094
    %v4295 = vunpack.c.l.b16 %v4095
    %v4296 = vunpack.c.h.b16 %v4095
    %v4297 = vunpack.c.l.b16 %v4096
    %v4298 = vunpack.c.h.b16 %v4096
    %v4299 = vunpack.c.l.b16 %v4097
    %v4300 = vunpack.c.h.b16 %v4097
    %v4301 = vunpack.c.l.b16 %v4098
    %v4302 = vunpack.c.h.b16 %v4098
    %v4303 = vunpack.c.l.b16 %v4099
    %v4304 = vunpack.c.h.b16 %v4099
    %v4305 = vunpack.c.l.b16 %v4100
    %v4306 = vunpack.c.h.b16 %v4100
    %v4307 = vunpack.c.l.b16 %v4101
    %v4308 = vunpack.c.h.b16 %v4101
    %v4309 = vunpack.c.l.b16 %v4102
    %v4310 = vunpack.c.h.b16 %v4102
    %v4311 = vunpack.c.l.b16 %v4103
    %v4312 = vunpack.c.h.b16 %v4103
    %v4313 = vunpack.c.l.b16 %v4104
    %v4314 = vunpack.c.h.b16 %v4104
    %v4315 = vunpack.c.l.b16 %v4105
    %v4316 = vunpack.c.h.b16 %v4105
    %v4317 = vunpack.c.l.b16 %v4106
    %v4318 = vunpack.c.h.b16 %v4106
    %v4319 = vunpack.c.l.b16 %v4107
    %v4320 = vunpack.c.h.b16 %v4107
    %v4321 = vunpack.c.l.b16 %v4108
    %v4322 = vunpack.c.h.b16 %v4108
    %v4323 = vunpack.c.l.b16 %v4109
    %v4324 = vunpack.c.h.b16 %v4109
    %v4325 = vunpack.c.l.b16 %v4110
    %v4326 = vunpack.c.h.b16 %v4110
    %v4327 = vunpack.c.l.b16 %v4111
    %v4328 = vunpack.c.h.b16 %v4111
    %v4329 = vunpack.c.l.b16 %v4112
    %v4330 = vunpack.c.h.b16 %v4112
    %v4331 = vunpack.c.l.b16 %v4113
    %v4332 = vunpack.c.h.b16 %v4113
    %v4333 = vunpack.c.l.b16 %v4114
    %v4334 = vunpack.c.h.b16 %v4114
    %v4335 = vunpack.c.l.b16 %v4115
    %v4336 = vunpack.c.h.b16 %v4115
    %v4337 = vunpack.c.l.b16 %v4116
    %v4338 = vunpack.c.h.b16 %v4116
    %v4339 = vunpack.c.l.b16 %v4117
    %v4340 = vunpack.c.h.b16 %v4117
    %v4341 = vunpack.c.l.b16 %v4118
    %v4342 = vunpack.c.h.b16 %v4118
    %v4343 = vunpack.c.l.b16 %v4119
    %v4344 = vunpack.c.h.b16 %v4119
    %v4345 = vunpack.c.l.b16 %v4120
    %v4346 = vunpack.c.h.b16 %v4120
    %v4347 = vunpack.c.l.b16 %v4121
    %v4348 = vunpack.c.h.b16 %v4121
    %v4349 = vunpack.c.l.b16 %v4122
    %v4350 = vunpack.c.h.b16 %v4122
    %v4351 = vunpack.c.l.b16 %v4123
    %v4352 = vunpack.c.h.b16 %v4123
    %v4353 = vunpack.c.l.b16 %v4124
    %v4354 = vunpack.c.h.b16 %v4124
    %v4355 = vunpack.c.l.b16 %v4125
    %v4356 = vunpack.c.h.b16 %v4125
    %v4357 = vunpack.c.l.b16 %v4126
    %v4358 = vunpack.c.h.b16 %v4126
    %v4359 = vunpack.c.l.b16 %v4127
    %v4360 = vunpack.c.h.b16 %v4127
    %v4361 = vunpack.c.l.b16 %v4128
    %v4362 = vunpack.c.h.b16 %v4128
    %v4363 = vunpack.c.l.b16 %v4129
    %v4364 = vunpack.c.h.b16 %v4129
    %v4365 = vunpack.c.l.b16 %v4130
    %v4366 = vunpack.c.h.b16 %v4130
    %v4367 = vunpack.c.l.b16 %v4131
    %v4368 = vunpack.c.h.b16 %v4131
    %v4369 = vunpack.c.l.b16 %v4132
    %v4370 = vunpack.c.h.b16 %v4132
    %v4371 = vunpack.c.l.b16 %v4133
    %v4372 = vunpack.c.h.b16 %v4133
    %v4373 = vunpack.c.l.b16 %v4134
    %v4374 = vunpack.c.h.b16 %v4134
    %v4375 = vunpack.c.l.b16 %v4135
    %v4376 = vunpack.c.h.b16 %v4135
    %v4377 = vunpack.c.l.b16 %v4136
    %v4378 = vunpack.c.h.b16 %v4136
    %v4379 = vunpack.c.l.b16 %v4137
    %v4380 = vunpack.c.h.b16 %v4137
    %v4381 = vunpack.c.l.b16 %v4138
    %v4382 = vunpack.c.h.b16 %v4138
    %v4383 = vpack.c.b16 %v4257, %v4255
    %v4384 = vpack.c.b16 %v4258, %v4256
    %v4385 = vpack.c.b16 %v4261, %v4259
    %v4386 = vpack.c.b16 %v4262, %v4260
    %v4387 = vpack.c.b16 %v4265, %v4263
    %v4388 = vpack.c.b16 %v4266, %v4264
    %v4389 = vpack.c.b16 %v4269, %v4267
    %v4390 = vpack.c.b16 %v4270, %v4268
    %v4391 = vpack.c.b16 %v4273, %v4271
    %v4392 = vpack.c.b16 %v4274, %v4272
    %v4393 = vpack.c.b16 %v4277, %v4275
    %v4394 = vpack.c.b16 %v4278, %v4276
    %v4395 = vpack.c.b16 %v4281, %v4279
    %v4396 = vpack.c.b16 %v4282, %v4280
    %v4397 = vpack.c.b16 %v4285, %v4283
    %v4398 = vpack.c.b16 %v4286, %v4284
    %v4399 = vpack.c.b16 %v4289, %v4287
    %v4400 = vpack.c.b16 %v4290, %v4288
    %v4401 = vpack.c.b16 %v4293, %v4291
    %v4402 = vpack.c.b16 %v4294, %v4292
    %v4403 = vpack.c.b16 %v4297, %v4295
    %v4404 = vpack.c.b16 %v4298, %v4296
    %v4405 = vpack.c.b16 %v4301, %v4299
    %v4406 = vpack.c.b16 %v4302, %v4300
    %v4407 = vpack.c.b16 %v4305, %v4303
    %v4408 = vpack.c.b16 %v4306, %v4304
    %v4409 = vpack.c.b16 %v4309, %v4307
    %v4410 = vpack.c.b16 %v4310, %v4308
    %v4411 = vpack.c.b16 %v4313, %v4311
    %v4412 = vpack.c.b16 %v4314, %v4312
    %v4413 = vpack.c.b16 %v4317, %v4315
    %v4414 = vpack.c.b16 %v4318, %v4316
    %v4415 = vpack.c.b16 %v4321, %v4319
    %v4416 = vpack.c.b16 %v4322, %v4320
    %v4417 = vpack.c.b16 %v4325, %v4323
    %v4418 = vpack.c.b16 %v4326, %v4324
    %v4419 = vpack.c.b16 %v4329, %v4327
    %v4420 = vpack.c.b16 %v4330, %v4328
    %v4421 = vpack.c.b16 %v4333, %v4331
    %v4422 = vpack.c.b16 %v4334, %v4332
    %v4423 = vpack.c.b16 %v4337, %v4335
    %v4424 = vpack.c.b16 %v4338, %v4336
    %v4425 = vpack.c.b16 %v4341, %v4339
    %v4426 = vpack.c.b16 %v4342, %v4340
    %v4427 = vpack.c.b16 %v4345, %v4343
    %v4428 = vpack.c.b16 %v4346, %v4344
    %v4429 = vpack.c.b16 %v4349, %v4347
    %v4430 = vpack.c.b16 %v4350, %v4348
    %v4431 = vpack.c.b16 %v4353, %v4351
    %v4432 = vpack.c.b16 %v4354, %v4352
    %v4433 = vpack.c.b16 %v4357, %v4355
    %v4434 = vpack.c.b16 %v4358, %v4356
    %v4435 = vpack.c.b16 %v4361, %v4359
    %v4436 = vpack.c.b16 %v4362, %v4360
    %v4437 = vpack.c.b16 %v4365, %v4363
    %v4438 = vpack.c.b16 %v4366, %v4364
    %v4439 = vpack.c.b16 %v4369, %v4367
    %v4440 = vpack.c.b16 %v4370, %v4368
    %v4441 = vpack.c.b16 %v4373, %v4371
    %v4442 = vpack.c.b16 %v4374, %v4372
    %v4443 = vpack.c.b16 %v4377, %v4375
    %v4444 = vpack.c.b16 %v4378, %v4376
    %v4445 = vpack.c.b16 %v4381, %v4379
    %v4446 = vpack.c.b16 %v4382, %v4380
    %4511 = vmatprep.subr.bf16.mxu0 %v4384
    %4512 = vmatpush1.bf16.msra.mxu0 %v4383
    %4513 = vmatprep.subr.bf16.mxu0 %v4386
    %4514 = vmatpush1.bf16.msra.mxu0 %v4385
    %4515 = vmatprep.subr.bf16.mxu0 %v4388
    %4516 = vmatpush1.bf16.msra.mxu0 %v4387
    %4517 = vmatprep.subr.bf16.mxu0 %v4390
    %4518 = vmatpush1.bf16.msra.mxu0 %v4389
    %4519 = vmatprep.subr.bf16.mxu0 %v4392
    %4520 = vmatpush1.bf16.msra.mxu0 %v4391
    %4521 = vmatprep.subr.bf16.mxu0 %v4394
    %4522 = vmatpush1.bf16.msra.mxu0 %v4393
    %4523 = vmatprep.subr.bf16.mxu0 %v4396
    %4524 = vmatpush1.bf16.msra.mxu0 %v4395
    %4525 = vmatprep.subr.bf16.mxu0 %v4398
    %4526 = vmatpush1.bf16.msra.mxu0 %v4397
    %4527 = vmatprep.subr.bf16.mxu0 %v4400
    %4528 = vmatpush1.bf16.msra.mxu0 %v4399
    %4529 = vmatprep.subr.bf16.mxu0 %v4402
    %4530 = vmatpush1.bf16.msra.mxu0 %v4401
    %4531 = vmatprep.subr.bf16.mxu0 %v4404
    %4532 = vmatpush1.bf16.msra.mxu0 %v4403
    %4533 = vmatprep.subr.bf16.mxu0 %v4406
    %4534 = vmatpush1.bf16.msra.mxu0 %v4405
    %4535 = vmatprep.subr.bf16.mxu0 %v4408
    %4536 = vmatpush1.bf16.msra.mxu0 %v4407
    %4537 = vmatprep.subr.bf16.mxu0 %v4410
    %4538 = vmatpush1.bf16.msra.mxu0 %v4409
    %4539 = vmatprep.subr.bf16.mxu0 %v4412
    %4540 = vmatpush1.bf16.msra.mxu0 %v4411
    %4541 = vmatprep.subr.bf16.mxu0 %v4414
    %4542 = vmatpush1.bf16.msra.mxu0 %v4413
    %4543 = vmatprep.mubr.bf16.mxu0 %v4176
    %4544 = vmatmul.mubr.bf16.gmra.mrb[0].mxu0 %v4173
    %v4545 = vpop.f32.mrb[0].mxu0
    %v4546 = vadd.f32 0.0, %v4545
    %v4547 = vpop.f32.mrb[0].mxu0
    %v4548 = vadd.f32 0.0, %v4547
    %v4549 = vpop.f32.mrb[0].mxu0
    %v4550 = vadd.f32 0.0, %v4549
    %v4551 = vpop.f32.mrb[0].mxu0
    %v4552 = vadd.f32 0.0, %v4551
    %4553 = vmatprep.mubr.bf16.mxu0 %v4175
    %4554 = vmatmul.mubr.bf16.gmra.mrb[0].mxu0 %v4172
    %v4555 = vpop.f32.mrb[0].mxu0
    %v4556 = vadd.f32 0.0, %v4555
    %v4557 = vpop.f32.mrb[0].mxu0
    %v4558 = vadd.f32 0.0, %v4557
    %v4559 = vpop.f32.mrb[0].mxu0
    %v4560 = vpop.f32.mrb[0].mxu0
    %4561 = vdwg.mxu0
    %4562 = vmatprep.subr.bf16.mxu0 %v4416
    %4563 = vmatpush1.bf16.msra.mxu0 %v4415
    %4564 = vmatprep.subr.bf16.mxu0 %v4418
    %4565 = vmatpush1.bf16.msra.mxu0 %v4417
    %4566 = vmatprep.subr.bf16.mxu0 %v4420
    %4567 = vmatpush1.bf16.msra.mxu0 %v4419
    %4568 = vmatprep.subr.bf16.mxu0 %v4422
    %4569 = vmatpush1.bf16.msra.mxu0 %v4421
    %4570 = vmatprep.subr.bf16.mxu0 %v4424
    %4571 = vmatpush1.bf16.msra.mxu0 %v4423
    %4572 = vmatprep.subr.bf16.mxu0 %v4426
    %4573 = vmatpush1.bf16.msra.mxu0 %v4425
    %4574 = vmatprep.subr.bf16.mxu0 %v4428
    %4575 = vmatpush1.bf16.msra.mxu0 %v4427
    %4576 = vmatprep.subr.bf16.mxu0 %v4430
    %4577 = vmatpush1.bf16.msra.mxu0 %v4429
    %4578 = vmatprep.subr.bf16.mxu0 %v4432
    %4579 = vmatpush1.bf16.msra.mxu0 %v4431
    %4580 = vmatprep.subr.bf16.mxu0 %v4434
    %4581 = vmatpush1.bf16.msra.mxu0 %v4433
    %4582 = vmatprep.subr.bf16.mxu0 %v4436
    %4583 = vmatpush1.bf16.msra.mxu0 %v4435
    %4584 = vmatprep.subr.bf16.mxu0 %v4438
    %4585 = vmatpush1.bf16.msra.mxu0 %v4437
    %4586 = vmatprep.subr.bf16.mxu0 %v4440
    %4587 = vmatpush1.bf16.msra.mxu0 %v4439
    %4588 = vmatprep.subr.bf16.mxu0 %v4442
    %4589 = vmatpush1.bf16.msra.mxu0 %v4441
    %4590 = vmatprep.subr.bf16.mxu0 %v4444
    %4591 = vmatpush1.bf16.msra.mxu0 %v4443
    %4592 = vmatprep.subr.bf16.mxu0 %v4446
    %4593 = vmatpush1.bf16.msra.mxu0 %v4445
    %4594 = vmatprep.mubr.bf16.mxu0 %v4182
    %4595 = vmatmul.mubr.bf16.gmra.mrb[0].mxu0 %v4179
    %v4596 = vpop.f32.mrb[0].mxu0
    %v4597 = vadd.f32 %v4546, %v4596
    %v4598 = vpop.f32.mrb[0].mxu0
    %v4599 = vadd.f32 %v4548, %v4598
    %v4600 = vpop.f32.mrb[0].mxu0
    %v4601 = vadd.f32 %v4550, %v4600
    %v4602 = vpop.f32.mrb[0].mxu0
    %v4603 = vadd.f32 %v4552, %v4602
    %4604 = vmatprep.mubr.bf16.mxu0 %v4181
    %4605 = vmatmul.mubr.bf16.gmra.mrb[0].mxu0 %v4178
    %v4606 = vpop.f32.mrb[0].mxu0
    %v4607 = vadd.f32 %v4556, %v4606
    %v4608 = vpop.f32.mrb[0].mxu0
    %v4609 = vadd.f32 %v4558, %v4608
    %v4610 = vpop.f32.mrb[0].mxu0
    %v4611 = vpop.f32.mrb[0].mxu0
    %4612 = vdwg.mxu0
    %v4615 = vunpack.c.l.b16 %v4001
    %v4616 = vunpack.c.h.b16 %v4001
    %v4617 = vunpack.c.l.b16 %v4002
    %v4618 = vunpack.c.h.b16 %v4002
    %v4619 = vpack.c.b16 %v4151, %v4615
    %v4620 = vpack.c.b16 %v4152, %v4616
    %v4621 = vpack.c.b16 %v4153, %v4617
    %v4622 = vpack.c.b16 %v4154, %v4618
    %v4624 = vshrl.u32 %v4619, 16
    %v4626 = vrot.slane %v4624, 2
    %v4627 = vshll.u32 %v4619, 16
    %v4629 = vrot.slane %v4627, 3
    %v4630 = vor.u32 %v4626, %v4629
    %v4632 = vshrl.u32 %v4167, 16
    %v4634 = vrot.slane %v4632, 2
    %v4635 = vshll.u32 %v4167, 16
    %v4637 = vrot.slane %v4635, 3
    %v4638 = vor.u32 %v4634, %v4637
    %v4639 = vsel %vm92, %v4630, %v4638
    %v4641 = vshrl.u32 %v4620, 16
    %v4643 = vrot.slane %v4641, 2
    %v4644 = vshll.u32 %v4620, 16
    %v4646 = vrot.slane %v4644, 3
    %v4647 = vor.u32 %v4643, %v4646
    %v4649 = vshrl.u32 %v4168, 16
    %v4651 = vrot.slane %v4649, 2
    %v4652 = vshll.u32 %v4168, 16
    %v4654 = vrot.slane %v4652, 3
    %v4655 = vor.u32 %v4651, %v4654
    %v4656 = vsel %vm92, %v4647, %v4655
    %v4658 = vshrl.u32 %v4621, 16
    %v4660 = vrot.slane %v4658, 2
    %v4661 = vshll.u32 %v4621, 16
    %v4663 = vrot.slane %v4661, 3
    %v4664 = vor.u32 %v4660, %v4663
    %v4666 = vshrl.u32 %v4169, 16
    %v4668 = vrot.slane %v4666, 2
    %v4669 = vshll.u32 %v4169, 16
    %v4671 = vrot.slane %v4669, 3
    %v4672 = vor.u32 %v4668, %v4671
    %v4673 = vsel %vm92, %v4664, %v4672
    %v4675 = vshrl.u32 %v4622, 16
    %v4677 = vrot.slane %v4675, 2
    %v4678 = vshll.u32 %v4622, 16
    %v4680 = vrot.slane %v4678, 3
    %v4681 = vor.u32 %v4677, %v4680
    %v4683 = vshrl.u32 %v4170, 16
    %v4685 = vrot.slane %v4683, 2
    %v4686 = vshll.u32 %v4170, 16
    %v4688 = vrot.slane %v4686, 3
    %v4689 = vor.u32 %v4685, %v4688
    %v4690 = vsel %vm92, %v4681, %v4689
    %v4763 = vunpack.c.l.b16 %v4009
    %v4764 = vunpack.c.h.b16 %v4009
    %v4765 = vunpack.c.l.b16 %v4010
    %v4766 = vunpack.c.h.b16 %v4010
    %v4767 = vunpack.c.l.b16 %v4011
    %v4768 = vunpack.c.h.b16 %v4011
    %v4769 = vunpack.c.l.b16 %v4012
    %v4770 = vunpack.c.h.b16 %v4012
    %v4771 = vunpack.c.l.b16 %v4013
    %v4772 = vunpack.c.h.b16 %v4013
    %v4773 = vunpack.c.l.b16 %v4014
    %v4774 = vunpack.c.h.b16 %v4014
    %v4775 = vunpack.c.l.b16 %v4015
    %v4776 = vunpack.c.h.b16 %v4015
    %v4777 = vunpack.c.l.b16 %v4016
    %v4778 = vunpack.c.h.b16 %v4016
    %v4779 = vunpack.c.l.b16 %v4017
    %v4780 = vunpack.c.h.b16 %v4017
    %v4781 = vunpack.c.l.b16 %v4018
    %v4782 = vunpack.c.h.b16 %v4018
    %v4783 = vunpack.c.l.b16 %v4019
    %v4784 = vunpack.c.h.b16 %v4019
    %v4785 = vunpack.c.l.b16 %v4020
    %v4786 = vunpack.c.h.b16 %v4020
    %v4787 = vunpack.c.l.b16 %v4021
    %v4788 = vunpack.c.h.b16 %v4021
    %v4789 = vunpack.c.l.b16 %v4022
    %v4790 = vunpack.c.h.b16 %v4022
    %v4791 = vunpack.c.l.b16 %v4023
    %v4792 = vunpack.c.h.b16 %v4023
    %v4793 = vunpack.c.l.b16 %v4024
    %v4794 = vunpack.c.h.b16 %v4024
    %v4795 = vunpack.c.l.b16 %v4025
    %v4796 = vunpack.c.h.b16 %v4025
    %v4797 = vunpack.c.l.b16 %v4026
    %v4798 = vunpack.c.h.b16 %v4026
    %v4799 = vunpack.c.l.b16 %v4027
    %v4800 = vunpack.c.h.b16 %v4027
    %v4801 = vunpack.c.l.b16 %v4028
    %v4802 = vunpack.c.h.b16 %v4028
    %v4803 = vunpack.c.l.b16 %v4029
    %v4804 = vunpack.c.h.b16 %v4029
    %v4805 = vunpack.c.l.b16 %v4030
    %v4806 = vunpack.c.h.b16 %v4030
    %v4807 = vunpack.c.l.b16 %v4031
    %v4808 = vunpack.c.h.b16 %v4031
    %v4809 = vunpack.c.l.b16 %v4032
    %v4810 = vunpack.c.h.b16 %v4032
    %v4811 = vunpack.c.l.b16 %v4033
    %v4812 = vunpack.c.h.b16 %v4033
    %v4813 = vunpack.c.l.b16 %v4034
    %v4814 = vunpack.c.h.b16 %v4034
    %v4815 = vunpack.c.l.b16 %v4035
    %v4816 = vunpack.c.h.b16 %v4035
    %v4817 = vunpack.c.l.b16 %v4036
    %v4818 = vunpack.c.h.b16 %v4036
    %v4819 = vunpack.c.l.b16 %v4037
    %v4820 = vunpack.c.h.b16 %v4037
    %v4821 = vunpack.c.l.b16 %v4038
    %v4822 = vunpack.c.h.b16 %v4038
    %v4823 = vunpack.c.l.b16 %v4039
    %v4824 = vunpack.c.h.b16 %v4039
    %v4825 = vunpack.c.l.b16 %v4040
    %v4826 = vunpack.c.h.b16 %v4040
    %v4827 = vunpack.c.l.b16 %v4041
    %v4828 = vunpack.c.h.b16 %v4041
    %v4829 = vunpack.c.l.b16 %v4042
    %v4830 = vunpack.c.h.b16 %v4042
    %v4831 = vunpack.c.l.b16 %v4043
    %v4832 = vunpack.c.h.b16 %v4043
    %v4833 = vunpack.c.l.b16 %v4044
    %v4834 = vunpack.c.h.b16 %v4044
    %v4835 = vunpack.c.l.b16 %v4045
    %v4836 = vunpack.c.h.b16 %v4045
    %v4837 = vunpack.c.l.b16 %v4046
    %v4838 = vunpack.c.h.b16 %v4046
    %v4839 = vunpack.c.l.b16 %v4047
    %v4840 = vunpack.c.h.b16 %v4047
    %v4841 = vunpack.c.l.b16 %v4048
    %v4842 = vunpack.c.h.b16 %v4048
    %v4843 = vunpack.c.l.b16 %v4049
    %v4844 = vunpack.c.h.b16 %v4049
    %v4845 = vunpack.c.l.b16 %v4050
    %v4846 = vunpack.c.h.b16 %v4050
    %v4847 = vunpack.c.l.b16 %v4051
    %v4848 = vunpack.c.h.b16 %v4051
    %v4849 = vunpack.c.l.b16 %v4052
    %v4850 = vunpack.c.h.b16 %v4052
    %v4851 = vunpack.c.l.b16 %v4053
    %v4852 = vunpack.c.h.b16 %v4053
    %v4853 = vunpack.c.l.b16 %v4054
    %v4854 = vunpack.c.h.b16 %v4054
    %v4855 = vunpack.c.l.b16 %v4055
    %v4856 = vunpack.c.h.b16 %v4055
    %v4857 = vunpack.c.l.b16 %v4056
    %v4858 = vunpack.c.h.b16 %v4056
    %v4859 = vunpack.c.l.b16 %v4057
    %v4860 = vunpack.c.h.b16 %v4057
    %v4861 = vunpack.c.l.b16 %v4058
    %v4862 = vunpack.c.h.b16 %v4058
    %v4863 = vunpack.c.l.b16 %v4059
    %v4864 = vunpack.c.h.b16 %v4059
    %v4865 = vunpack.c.l.b16 %v4060
    %v4866 = vunpack.c.h.b16 %v4060
    %v4867 = vunpack.c.l.b16 %v4061
    %v4868 = vunpack.c.h.b16 %v4061
    %v4869 = vunpack.c.l.b16 %v4062
    %v4870 = vunpack.c.h.b16 %v4062
    %v4871 = vunpack.c.l.b16 %v4063
    %v4872 = vunpack.c.h.b16 %v4063
    %v4873 = vunpack.c.l.b16 %v4064
    %v4874 = vunpack.c.h.b16 %v4064
    %v4875 = vunpack.c.l.b16 %v4065
    %v4876 = vunpack.c.h.b16 %v4065
    %v4877 = vunpack.c.l.b16 %v4066
    %v4878 = vunpack.c.h.b16 %v4066
    %v4879 = vunpack.c.l.b16 %v4067
    %v4880 = vunpack.c.h.b16 %v4067
    %v4881 = vunpack.c.l.b16 %v4068
    %v4882 = vunpack.c.h.b16 %v4068
    %v4883 = vunpack.c.l.b16 %v4069
    %v4884 = vunpack.c.h.b16 %v4069
    %v4885 = vunpack.c.l.b16 %v4070
    %v4886 = vunpack.c.h.b16 %v4070
    %v4887 = vunpack.c.l.b16 %v4071
    %v4888 = vunpack.c.h.b16 %v4071
    %v4889 = vunpack.c.l.b16 %v4072
    %v4890 = vunpack.c.h.b16 %v4072
    %v4891 = vpack.c.b16 %v4765, %v4763
    %v4892 = vpack.c.b16 %v4766, %v4764
    %v4893 = vpack.c.b16 %v4769, %v4767
    %v4894 = vpack.c.b16 %v4770, %v4768
    %v4895 = vpack.c.b16 %v4773, %v4771
    %v4896 = vpack.c.b16 %v4774, %v4772
    %v4897 = vpack.c.b16 %v4777, %v4775
    %v4898 = vpack.c.b16 %v4778, %v4776
    %v4899 = vpack.c.b16 %v4781, %v4779
    %v4900 = vpack.c.b16 %v4782, %v4780
    %v4901 = vpack.c.b16 %v4785, %v4783
    %v4902 = vpack.c.b16 %v4786, %v4784
    %v4903 = vpack.c.b16 %v4789, %v4787
    %v4904 = vpack.c.b16 %v4790, %v4788
    %v4905 = vpack.c.b16 %v4793, %v4791
    %v4906 = vpack.c.b16 %v4794, %v4792
    %v4907 = vpack.c.b16 %v4797, %v4795
    %v4908 = vpack.c.b16 %v4798, %v4796
    %v4909 = vpack.c.b16 %v4801, %v4799
    %v4910 = vpack.c.b16 %v4802, %v4800
    %v4911 = vpack.c.b16 %v4805, %v4803
    %v4912 = vpack.c.b16 %v4806, %v4804
    %v4913 = vpack.c.b16 %v4809, %v4807
    %v4914 = vpack.c.b16 %v4810, %v4808
    %v4915 = vpack.c.b16 %v4813, %v4811
    %v4916 = vpack.c.b16 %v4814, %v4812
    %v4917 = vpack.c.b16 %v4817, %v4815
    %v4918 = vpack.c.b16 %v4818, %v4816
    %v4919 = vpack.c.b16 %v4821, %v4819
    %v4920 = vpack.c.b16 %v4822, %v4820
    %v4921 = vpack.c.b16 %v4825, %v4823
    %v4922 = vpack.c.b16 %v4826, %v4824
    %v4923 = vpack.c.b16 %v4829, %v4827
    %v4924 = vpack.c.b16 %v4830, %v4828
    %v4925 = vpack.c.b16 %v4833, %v4831
    %v4926 = vpack.c.b16 %v4834, %v4832
    %v4927 = vpack.c.b16 %v4837, %v4835
    %v4928 = vpack.c.b16 %v4838, %v4836
    %v4929 = vpack.c.b16 %v4841, %v4839
    %v4930 = vpack.c.b16 %v4842, %v4840
    %v4931 = vpack.c.b16 %v4845, %v4843
    %v4932 = vpack.c.b16 %v4846, %v4844
    %v4933 = vpack.c.b16 %v4849, %v4847
    %v4934 = vpack.c.b16 %v4850, %v4848
    %v4935 = vpack.c.b16 %v4853, %v4851
    %v4936 = vpack.c.b16 %v4854, %v4852
    %v4937 = vpack.c.b16 %v4857, %v4855
    %v4938 = vpack.c.b16 %v4858, %v4856
    %v4939 = vpack.c.b16 %v4861, %v4859
    %v4940 = vpack.c.b16 %v4862, %v4860
    %v4941 = vpack.c.b16 %v4865, %v4863
    %v4942 = vpack.c.b16 %v4866, %v4864
    %v4943 = vpack.c.b16 %v4869, %v4867
    %v4944 = vpack.c.b16 %v4870, %v4868
    %v4945 = vpack.c.b16 %v4873, %v4871
    %v4946 = vpack.c.b16 %v4874, %v4872
    %v4947 = vpack.c.b16 %v4877, %v4875
    %v4948 = vpack.c.b16 %v4878, %v4876
    %v4949 = vpack.c.b16 %v4881, %v4879
    %v4950 = vpack.c.b16 %v4882, %v4880
    %v4951 = vpack.c.b16 %v4885, %v4883
    %v4952 = vpack.c.b16 %v4886, %v4884
    %v4953 = vpack.c.b16 %v4889, %v4887
    %v4954 = vpack.c.b16 %v4890, %v4888
    %5019 = vmatprep.subr.bf16.mxu0 %v4892
    %5020 = vmatpush1.bf16.msra.mxu0 %v4891
    %5021 = vmatprep.subr.bf16.mxu0 %v4894
    %5022 = vmatpush1.bf16.msra.mxu0 %v4893
    %5023 = vmatprep.subr.bf16.mxu0 %v4896
    %5024 = vmatpush1.bf16.msra.mxu0 %v4895
    %5025 = vmatprep.subr.bf16.mxu0 %v4898
    %5026 = vmatpush1.bf16.msra.mxu0 %v4897
    %5027 = vmatprep.subr.bf16.mxu0 %v4900
    %5028 = vmatpush1.bf16.msra.mxu0 %v4899
    %5029 = vmatprep.subr.bf16.mxu0 %v4902
    %5030 = vmatpush1.bf16.msra.mxu0 %v4901
    %5031 = vmatprep.subr.bf16.mxu0 %v4904
    %5032 = vmatpush1.bf16.msra.mxu0 %v4903
    %5033 = vmatprep.subr.bf16.mxu0 %v4906
    %5034 = vmatpush1.bf16.msra.mxu0 %v4905
    %5035 = vmatprep.subr.bf16.mxu0 %v4908
    %5036 = vmatpush1.bf16.msra.mxu0 %v4907
    %5037 = vmatprep.subr.bf16.mxu0 %v4910
    %5038 = vmatpush1.bf16.msra.mxu0 %v4909
    %5039 = vmatprep.subr.bf16.mxu0 %v4912
    %5040 = vmatpush1.bf16.msra.mxu0 %v4911
    %5041 = vmatprep.subr.bf16.mxu0 %v4914
    %5042 = vmatpush1.bf16.msra.mxu0 %v4913
    %5043 = vmatprep.subr.bf16.mxu0 %v4916
    %5044 = vmatpush1.bf16.msra.mxu0 %v4915
    %5045 = vmatprep.subr.bf16.mxu0 %v4918
    %5046 = vmatpush1.bf16.msra.mxu0 %v4917
    %5047 = vmatprep.subr.bf16.mxu0 %v4920
    %5048 = vmatpush1.bf16.msra.mxu0 %v4919
    %5049 = vmatprep.subr.bf16.mxu0 %v4922
    %5050 = vmatpush1.bf16.msra.mxu0 %v4921
    %5051 = vmatprep.mubr.bf16.mxu0 %v4656
    %5052 = vmatmul.mubr.bf16.gmra.mrb[0].mxu0 %v4639
    %v5053 = vpop.f32.mrb[0].mxu0
    %v5054 = vadd.f32 %v4597, %v5053
    %v5055 = vpop.f32.mrb[0].mxu0
    %v5056 = vadd.f32 %v4599, %v5055
    %v5057 = vpop.f32.mrb[0].mxu0
    %v5058 = vadd.f32 %v4601, %v5057
    %v5059 = vpop.f32.mrb[0].mxu0
    %v5060 = vadd.f32 %v4603, %v5059
    %5061 = vmatprep.mubr.bf16.mxu0 %v4655
    %5062 = vmatmul.mubr.bf16.gmra.mrb[0].mxu0 %v4638
    %v5063 = vpop.f32.mrb[0].mxu0
    %v5064 = vadd.f32 %v4607, %v5063
    %v5065 = vpop.f32.mrb[0].mxu0
    %v5066 = vadd.f32 %v4609, %v5065
    %v5067 = vpop.f32.mrb[0].mxu0
    %v5068 = vpop.f32.mrb[0].mxu0
    %5069 = vdwg.mxu0
    %5070 = vmatprep.subr.bf16.mxu0 %v4924
    %5071 = vmatpush1.bf16.msra.mxu0 %v4923
    %5072 = vmatprep.subr.bf16.mxu0 %v4926
    %5073 = vmatpush1.bf16.msra.mxu0 %v4925
    %5074 = vmatprep.subr.bf16.mxu0 %v4928
    %5075 = vmatpush1.bf16.msra.mxu0 %v4927
    %5076 = vmatprep.subr.bf16.mxu0 %v4930
    %5077 = vmatpush1.bf16.msra.mxu0 %v4929
    %5078 = vmatprep.subr.bf16.mxu0 %v4932
    %5079 = vmatpush1.bf16.msra.mxu0 %v4931
    %5080 = vmatprep.subr.bf16.mxu0 %v4934
    %5081 = vmatpush1.bf16.msra.mxu0 %v4933
    %5082 = vmatprep.subr.bf16.mxu0 %v4936
    %5083 = vmatpush1.bf16.msra.mxu0 %v4935
    %5084 = vmatprep.subr.bf16.mxu0 %v4938
    %5085 = vmatpush1.bf16.msra.mxu0 %v4937
    %5086 = vmatprep.subr.bf16.mxu0 %v4940
    %5087 = vmatpush1.bf16.msra.mxu0 %v4939
    %5088 = vmatprep.subr.bf16.mxu0 %v4942
    %5089 = vmatpush1.bf16.msra.mxu0 %v4941
    %5090 = vmatprep.subr.bf16.mxu0 %v4944
    %5091 = vmatpush1.bf16.msra.mxu0 %v4943
    %5092 = vmatprep.subr.bf16.mxu0 %v4946
    %5093 = vmatpush1.bf16.msra.mxu0 %v4945
    %5094 = vmatprep.subr.bf16.mxu0 %v4948
    %5095 = vmatpush1.bf16.msra.mxu0 %v4947
    %5096 = vmatprep.subr.bf16.mxu0 %v4950
    %5097 = vmatpush1.bf16.msra.mxu0 %v4949
    %5098 = vmatprep.subr.bf16.mxu0 %v4952
    %5099 = vmatpush1.bf16.msra.mxu0 %v4951
    %5100 = vmatprep.subr.bf16.mxu0 %v4954
    %5101 = vmatpush1.bf16.msra.mxu0 %v4953
    %5102 = vmatprep.mubr.bf16.mxu0 %v4690
    %5103 = vmatmul.mubr.bf16.gmra.mrb[0].mxu0 %v4673
    %v5104 = vpop.f32.mrb[0].mxu0
    %v5105 = vadd.f32 %v5054, %v5104
    %v5106 = vpop.f32.mrb[0].mxu0
    %v5107 = vadd.f32 %v5056, %v5106
    %v5108 = vpop.f32.mrb[0].mxu0
    %v5109 = vadd.f32 %v5058, %v5108
    %v5110 = vpop.f32.mrb[0].mxu0
    %v5111 = vadd.f32 %v5060, %v5110
    %5112 = vmatprep.mubr.bf16.mxu0 %v4689
    %5113 = vmatmul.mubr.bf16.gmra.mrb[0].mxu0 %v4672
    %v5114 = vpop.f32.mrb[0].mxu0
    %v5115 = vadd.f32 %v5064, %v5114
    %v5116 = vpop.f32.mrb[0].mxu0
    %v5117 = vadd.f32 %v5066, %v5116
    %v5118 = vpop.f32.mrb[0].mxu0
    %v5119 = vpop.f32.mrb[0].mxu0
    %5120 = vdwg.mxu0
    %v5121 = vld [vmem:[#allocation2 + $0x40] sm:$0xff]
    %v5122 = vld [vmem:[#allocation2 + $0x48] sm:$0xff]
    %v5123 = vld [vmem:[%s1903] sm:$0xff]
    %v5124 = vld [vmem:[%s1903 + $0x8] sm:$0xff]
    %v5125 = vld [vmem:[%s1903 + $0x10] sm:$0xff]
    %v5126 = vld [vmem:[%s1903 + $0x18] sm:$0xff]
    %v5127 = vld [vmem:[%s1903 + $0x20] sm:$0xff]
    %v5128 = vld [vmem:[%s1903 + $0x28] sm:$0xff]
    %v5129 = vld [vmem:[%s1903 + $0x30] sm:$0xff]
    %v5130 = vld [vmem:[%s1903 + $0x38] sm:$0xff]
    %v5131 = vld [vmem:[%s1903 + $0x40] sm:$0xff]
    %v5132 = vld [vmem:[%s1903 + $0x48] sm:$0xff]
    %v5133 = vld [vmem:[%s1903 + $0x50] sm:$0xff]
    %v5134 = vld [vmem:[%s1903 + $0x58] sm:$0xff]
    %v5135 = vld [vmem:[%s1903 + $0x60] sm:$0xff]
    %v5136 = vld [vmem:[%s1903 + $0x68] sm:$0xff]
    %v5137 = vld [vmem:[%s1903 + $0x70] sm:$0xff]
    %v5138 = vld [vmem:[%s1903 + $0x78] sm:$0xff]
    %v5139 = vld [vmem:[%s1903 + $0x80] sm:$0xff]
    %v5140 = vld [vmem:[%s1903 + $0x88] sm:$0xff]
    %v5141 = vld [vmem:[%s1903 + $0x90] sm:$0xff]
    %v5142 = vld [vmem:[%s1903 + $0x98] sm:$0xff]
    %v5143 = vld [vmem:[%s1903 + $0xa0] sm:$0xff]
    %v5144 = vld [vmem:[%s1903 + $0xa8] sm:$0xff]
    %v5145 = vld [vmem:[%s1903 + $0xb0] sm:$0xff]
    %v5146 = vld [vmem:[%s1903 + $0xb8] sm:$0xff]
    %v5147 = vld [vmem:[%s1903 + $0xc0] sm:$0xff]
    %v5148 = vld [vmem:[%s1903 + $0xc8] sm:$0xff]
    %v5149 = vld [vmem:[%s1903 + $0xd0] sm:$0xff]
    %v5150 = vld [vmem:[%s1903 + $0xd8] sm:$0xff]
    %v5151 = vld [vmem:[%s1903 + $0xe0] sm:$0xff]
    %v5152 = vld [vmem:[%s1903 + $0xe8] sm:$0xff]
    %v5153 = vld [vmem:[%s1903 + $0xf0] sm:$0xff]
    %v5154 = vld [vmem:[%s1903 + $0xf8] sm:$0xff]
    %v5155 = vld [vmem:[%s1903 + $0x100] sm:$0xff]
    %v5156 = vld [vmem:[%s1903 + $0x108] sm:$0xff]
    %v5157 = vld [vmem:[%s1903 + $0x110] sm:$0xff]
    %v5158 = vld [vmem:[%s1903 + $0x118] sm:$0xff]
    %v5159 = vld [vmem:[%s1903 + $0x120] sm:$0xff]
    %v5160 = vld [vmem:[%s1903 + $0x128] sm:$0xff]
    %v5161 = vld [vmem:[%s1903 + $0x130] sm:$0xff]
    %v5162 = vld [vmem:[%s1903 + $0x138] sm:$0xff]
    %v5163 = vld [vmem:[%s1903 + $0x140] sm:$0xff]
    %v5164 = vld [vmem:[%s1903 + $0x148] sm:$0xff]
    %v5165 = vld [vmem:[%s1903 + $0x150] sm:$0xff]
    %v5166 = vld [vmem:[%s1903 + $0x158] sm:$0xff]
    %v5167 = vld [vmem:[%s1903 + $0x160] sm:$0xff]
    %v5168 = vld [vmem:[%s1903 + $0x168] sm:$0xff]
    %v5169 = vld [vmem:[%s1903 + $0x170] sm:$0xff]
    %v5170 = vld [vmem:[%s1903 + $0x178] sm:$0xff]
    %v5171 = vld [vmem:[%s1903 + $0x180] sm:$0xff]
    %v5172 = vld [vmem:[%s1903 + $0x188] sm:$0xff]
    %v5173 = vld [vmem:[%s1903 + $0x190] sm:$0xff]
    %v5174 = vld [vmem:[%s1903 + $0x198] sm:$0xff]
    %v5175 = vld [vmem:[%s1903 + $0x1a0] sm:$0xff]
    %v5176 = vld [vmem:[%s1903 + $0x1a8] sm:$0xff]
    %v5177 = vld [vmem:[%s1903 + $0x1b0] sm:$0xff]
    %v5178 = vld [vmem:[%s1903 + $0x1b8] sm:$0xff]
    %v5179 = vld [vmem:[%s1903 + $0x1c0] sm:$0xff]
    %v5180 = vld [vmem:[%s1903 + $0x1c8] sm:$0xff]
    %v5181 = vld [vmem:[%s1903 + $0x1d0] sm:$0xff]
    %v5182 = vld [vmem:[%s1903 + $0x1d8] sm:$0xff]
    %v5183 = vld [vmem:[%s1903 + $0x1e0] sm:$0xff]
    %v5184 = vld [vmem:[%s1903 + $0x1e8] sm:$0xff]
    %v5185 = vld [vmem:[%s1903 + $0x1f0] sm:$0xff]
    %v5186 = vld [vmem:[%s1903 + $0x1f8] sm:$0xff]
    %v5189 = vunpack.c.l.b16 %v5121
    %v5190 = vunpack.c.h.b16 %v5121
    %v5191 = vunpack.c.l.b16 %v5122
    %v5192 = vunpack.c.h.b16 %v5122
    %v5193 = vpack.c.b16 %v5189, %v4155
    %v5194 = vpack.c.b16 %v5190, %v4156
    %v5195 = vpack.c.b16 %v5191, %v4157
    %v5196 = vpack.c.b16 %v5192, %v4158
    %v5198 = vshrl.u32 %v4163, 16
    %v5200 = vrot.slane %v5198, 3
    %v5201 = vshll.u32 %v4163, 16
    %v5203 = vrot.slane %v5201, 4
    %v5204 = vor.u32 %v5200, %v5203
    %v5206 = vshrl.u32 %v5193, 16
    %v5208 = vrot.slane %v5206, 3
    %v5209 = vshll.u32 %v5193, 16
    %v5211 = vrot.slane %v5209, 4
    %v5212 = vor.u32 %v5208, %v5211
    %v5213 = vsel %vm1978, %v5204, %v5212
    %v5215 = vshrl.u32 %v4164, 16
    %v5217 = vrot.slane %v5215, 3
    %v5218 = vshll.u32 %v4164, 16
    %v5220 = vrot.slane %v5218, 4
    %v5221 = vor.u32 %v5217, %v5220
    %v5223 = vshrl.u32 %v5194, 16
    %v5225 = vrot.slane %v5223, 3
    %v5226 = vshll.u32 %v5194, 16
    %v5228 = vrot.slane %v5226, 4
    %v5229 = vor.u32 %v5225, %v5228
    %v5230 = vsel %vm1978, %v5221, %v5229
    %v5232 = vshrl.u32 %v4165, 16
    %v5234 = vrot.slane %v5232, 3
    %v5235 = vshll.u32 %v4165, 16
    %v5237 = vrot.slane %v5235, 4
    %v5238 = vor.u32 %v5234, %v5237
    %v5240 = vshrl.u32 %v5195, 16
    %v5242 = vrot.slane %v5240, 3
    %v5243 = vshll.u32 %v5195, 16
    %v5245 = vrot.slane %v5243, 4
    %v5246 = vor.u32 %v5242, %v5245
    %v5247 = vsel %vm1978, %v5238, %v5246
    %v5249 = vshrl.u32 %v4166, 16
    %v5251 = vrot.slane %v5249, 3
    %v5252 = vshll.u32 %v4166, 16
    %v5254 = vrot.slane %v5252, 4
    %v5255 = vor.u32 %v5251, %v5254
    %v5257 = vshrl.u32 %v5196, 16
    %v5259 = vrot.slane %v5257, 3
    %v5260 = vshll.u32 %v5196, 16
    %v5262 = vrot.slane %v5260, 4
    %v5263 = vor.u32 %v5259, %v5262
    %v5264 = vsel %vm1978, %v5255, %v5263
    %v5337 = vunpack.c.l.b16 %v5123
    %v5338 = vunpack.c.h.b16 %v5123
    %v5339 = vunpack.c.l.b16 %v5124
    %v5340 = vunpack.c.h.b16 %v5124
    %v5341 = vunpack.c.l.b16 %v5125
    %v5342 = vunpack.c.h.b16 %v5125
    %v5343 = vunpack.c.l.b16 %v5126
    %v5344 = vunpack.c.h.b16 %v5126
    %v5345 = vunpack.c.l.b16 %v5127
    %v5346 = vunpack.c.h.b16 %v5127
    %v5347 = vunpack.c.l.b16 %v5128
    %v5348 = vunpack.c.h.b16 %v5128
    %v5349 = vunpack.c.l.b16 %v5129
    %v5350 = vunpack.c.h.b16 %v5129
    %v5351 = vunpack.c.l.b16 %v5130
    %v5352 = vunpack.c.h.b16 %v5130
    %v5353 = vunpack.c.l.b16 %v5131
    %v5354 = vunpack.c.h.b16 %v5131
    %v5355 = vunpack.c.l.b16 %v5132
    %v5356 = vunpack.c.h.b16 %v5132
    %v5357 = vunpack.c.l.b16 %v5133
    %v5358 = vunpack.c.h.b16 %v5133
    %v5359 = vunpack.c.l.b16 %v5134
    %v5360 = vunpack.c.h.b16 %v5134
    %v5361 = vunpack.c.l.b16 %v5135
    %v5362 = vunpack.c.h.b16 %v5135
    %v5363 = vunpack.c.l.b16 %v5136
    %v5364 = vunpack.c.h.b16 %v5136
    %v5365 = vunpack.c.l.b16 %v5137
    %v5366 = vunpack.c.h.b16 %v5137
    %v5367 = vunpack.c.l.b16 %v5138
    %v5368 = vunpack.c.h.b16 %v5138
    %v5369 = vunpack.c.l.b16 %v5139
    %v5370 = vunpack.c.h.b16 %v5139
    %v5371 = vunpack.c.l.b16 %v5140
    %v5372 = vunpack.c.h.b16 %v5140
    %v5373 = vunpack.c.l.b16 %v5141
    %v5374 = vunpack.c.h.b16 %v5141
    %v5375 = vunpack.c.l.b16 %v5142
    %v5376 = vunpack.c.h.b16 %v5142
    %v5377 = vunpack.c.l.b16 %v5143
    %v5378 = vunpack.c.h.b16 %v5143
    %v5379 = vunpack.c.l.b16 %v5144
    %v5380 = vunpack.c.h.b16 %v5144
    %v5381 = vunpack.c.l.b16 %v5145
    %v5382 = vunpack.c.h.b16 %v5145
    %v5383 = vunpack.c.l.b16 %v5146
    %v5384 = vunpack.c.h.b16 %v5146
    %v5385 = vunpack.c.l.b16 %v5147
    %v5386 = vunpack.c.h.b16 %v5147
    %v5387 = vunpack.c.l.b16 %v5148
    %v5388 = vunpack.c.h.b16 %v5148
    %v5389 = vunpack.c.l.b16 %v5149
    %v5390 = vunpack.c.h.b16 %v5149
    %v5391 = vunpack.c.l.b16 %v5150
    %v5392 = vunpack.c.h.b16 %v5150
    %v5393 = vunpack.c.l.b16 %v5151
    %v5394 = vunpack.c.h.b16 %v5151
    %v5395 = vunpack.c.l.b16 %v5152
    %v5396 = vunpack.c.h.b16 %v5152
    %v5397 = vunpack.c.l.b16 %v5153
    %v5398 = vunpack.c.h.b16 %v5153
    %v5399 = vunpack.c.l.b16 %v5154
    %v5400 = vunpack.c.h.b16 %v5154
    %v5401 = vunpack.c.l.b16 %v5155
    %v5402 = vunpack.c.h.b16 %v5155
    %v5403 = vunpack.c.l.b16 %v5156
    %v5404 = vunpack.c.h.b16 %v5156
    %v5405 = vunpack.c.l.b16 %v5157
    %v5406 = vunpack.c.h.b16 %v5157
    %v5407 = vunpack.c.l.b16 %v5158
    %v5408 = vunpack.c.h.b16 %v5158
    %v5409 = vunpack.c.l.b16 %v5159
    %v5410 = vunpack.c.h.b16 %v5159
    %v5411 = vunpack.c.l.b16 %v5160
    %v5412 = vunpack.c.h.b16 %v5160
    %v5413 = vunpack.c.l.b16 %v5161
    %v5414 = vunpack.c.h.b16 %v5161
    %v5415 = vunpack.c.l.b16 %v5162
    %v5416 = vunpack.c.h.b16 %v5162
    %v5417 = vunpack.c.l.b16 %v5163
    %v5418 = vunpack.c.h.b16 %v5163
    %v5419 = vunpack.c.l.b16 %v5164
    %v5420 = vunpack.c.h.b16 %v5164
    %v5421 = vunpack.c.l.b16 %v5165
    %v5422 = vunpack.c.h.b16 %v5165
    %v5423 = vunpack.c.l.b16 %v5166
    %v5424 = vunpack.c.h.b16 %v5166
    %v5425 = vunpack.c.l.b16 %v5167
    %v5426 = vunpack.c.h.b16 %v5167
    %v5427 = vunpack.c.l.b16 %v5168
    %v5428 = vunpack.c.h.b16 %v5168
    %v5429 = vunpack.c.l.b16 %v5169
    %v5430 = vunpack.c.h.b16 %v5169
    %v5431 = vunpack.c.l.b16 %v5170
    %v5432 = vunpack.c.h.b16 %v5170
    %v5433 = vunpack.c.l.b16 %v5171
    %v5434 = vunpack.c.h.b16 %v5171
    %v5435 = vunpack.c.l.b16 %v5172
    %v5436 = vunpack.c.h.b16 %v5172
    %v5437 = vunpack.c.l.b16 %v5173
    %v5438 = vunpack.c.h.b16 %v5173
    %v5439 = vunpack.c.l.b16 %v5174
    %v5440 = vunpack.c.h.b16 %v5174
    %v5441 = vunpack.c.l.b16 %v5175
    %v5442 = vunpack.c.h.b16 %v5175
    %v5443 = vunpack.c.l.b16 %v5176
    %v5444 = vunpack.c.h.b16 %v5176
    %v5445 = vunpack.c.l.b16 %v5177
    %v5446 = vunpack.c.h.b16 %v5177
    %v5447 = vunpack.c.l.b16 %v5178
    %v5448 = vunpack.c.h.b16 %v5178
    %v5449 = vunpack.c.l.b16 %v5179
    %v5450 = vunpack.c.h.b16 %v5179
    %v5451 = vunpack.c.l.b16 %v5180
    %v5452 = vunpack.c.h.b16 %v5180
    %v5453 = vunpack.c.l.b16 %v5181
    %v5454 = vunpack.c.h.b16 %v5181
    %v5455 = vunpack.c.l.b16 %v5182
    %v5456 = vunpack.c.h.b16 %v5182
    %v5457 = vunpack.c.l.b16 %v5183
    %v5458 = vunpack.c.h.b16 %v5183
    %v5459 = vunpack.c.l.b16 %v5184
    %v5460 = vunpack.c.h.b16 %v5184
    %v5461 = vunpack.c.l.b16 %v5185
    %v5462 = vunpack.c.h.b16 %v5185
    %v5463 = vunpack.c.l.b16 %v5186
    %v5464 = vunpack.c.h.b16 %v5186
    %v5465 = vpack.c.b16 %v5339, %v5337
    %v5466 = vpack.c.b16 %v5340, %v5338
    %v5467 = vpack.c.b16 %v5343, %v5341
    %v5468 = vpack.c.b16 %v5344, %v5342
    %v5469 = vpack.c.b16 %v5347, %v5345
    %v5470 = vpack.c.b16 %v5348, %v5346
    %v5471 = vpack.c.b16 %v5351, %v5349
    %v5472 = vpack.c.b16 %v5352, %v5350
    %v5473 = vpack.c.b16 %v5355, %v5353
    %v5474 = vpack.c.b16 %v5356, %v5354
    %v5475 = vpack.c.b16 %v5359, %v5357
    %v5476 = vpack.c.b16 %v5360, %v5358
    %v5477 = vpack.c.b16 %v5363, %v5361
    %v5478 = vpack.c.b16 %v5364, %v5362
    %v5479 = vpack.c.b16 %v5367, %v5365
    %v5480 = vpack.c.b16 %v5368, %v5366
    %v5481 = vpack.c.b16 %v5371, %v5369
    %v5482 = vpack.c.b16 %v5372, %v5370
    %v5483 = vpack.c.b16 %v5375, %v5373
    %v5484 = vpack.c.b16 %v5376, %v5374
    %v5485 = vpack.c.b16 %v5379, %v5377
    %v5486 = vpack.c.b16 %v5380, %v5378
    %v5487 = vpack.c.b16 %v5383, %v5381
    %v5488 = vpack.c.b16 %v5384, %v5382
    %v5489 = vpack.c.b16 %v5387, %v5385
    %v5490 = vpack.c.b16 %v5388, %v5386
    %v5491 = vpack.c.b16 %v5391, %v5389
    %v5492 = vpack.c.b16 %v5392, %v5390
    %v5493 = vpack.c.b16 %v5395, %v5393
    %v5494 = vpack.c.b16 %v5396, %v5394
    %v5495 = vpack.c.b16 %v5399, %v5397
    %v5496 = vpack.c.b16 %v5400, %v5398
    %v5497 = vpack.c.b16 %v5403, %v5401
    %v5498 = vpack.c.b16 %v5404, %v5402
    %v5499 = vpack.c.b16 %v5407, %v5405
    %v5500 = vpack.c.b16 %v5408, %v5406
    %v5501 = vpack.c.b16 %v5411, %v5409
    %v5502 = vpack.c.b16 %v5412, %v5410
    %v5503 = vpack.c.b16 %v5415, %v5413
    %v5504 = vpack.c.b16 %v5416, %v5414
    %v5505 = vpack.c.b16 %v5419, %v5417
    %v5506 = vpack.c.b16 %v5420, %v5418
    %v5507 = vpack.c.b16 %v5423, %v5421
    %v5508 = vpack.c.b16 %v5424, %v5422
    %v5509 = vpack.c.b16 %v5427, %v5425
    %v5510 = vpack.c.b16 %v5428, %v5426
    %v5511 = vpack.c.b16 %v5431, %v5429
    %v5512 = vpack.c.b16 %v5432, %v5430
    %v5513 = vpack.c.b16 %v5435, %v5433
    %v5514 = vpack.c.b16 %v5436, %v5434
    %v5515 = vpack.c.b16 %v5439, %v5437
    %v5516 = vpack.c.b16 %v5440, %v5438
    %v5517 = vpack.c.b16 %v5443, %v5441
    %v5518 = vpack.c.b16 %v5444, %v5442
    %v5519 = vpack.c.b16 %v5447, %v5445
    %v5520 = vpack.c.b16 %v5448, %v5446
    %v5521 = vpack.c.b16 %v5451, %v5449
    %v5522 = vpack.c.b16 %v5452, %v5450
    %v5523 = vpack.c.b16 %v5455, %v5453
    %v5524 = vpack.c.b16 %v5456, %v5454
    %v5525 = vpack.c.b16 %v5459, %v5457
    %v5526 = vpack.c.b16 %v5460, %v5458
    %v5527 = vpack.c.b16 %v5463, %v5461
    %v5528 = vpack.c.b16 %v5464, %v5462
    %5593 = vmatprep.subr.bf16.mxu0 %v5466
    %5594 = vmatpush1.bf16.msra.mxu0 %v5465
    %5595 = vmatprep.subr.bf16.mxu0 %v5468
    %5596 = vmatpush1.bf16.msra.mxu0 %v5467
    %5597 = vmatprep.subr.bf16.mxu0 %v5470
    %5598 = vmatpush1.bf16.msra.mxu0 %v5469
    %5599 = vmatprep.subr.bf16.mxu0 %v5472
    %5600 = vmatpush1.bf16.msra.mxu0 %v5471
    %5601 = vmatprep.subr.bf16.mxu0 %v5474
    %5602 = vmatpush1.bf16.msra.mxu0 %v5473
    %5603 = vmatprep.subr.bf16.mxu0 %v5476
    %5604 = vmatpush1.bf16.msra.mxu0 %v5475
    %5605 = vmatprep.subr.bf16.mxu0 %v5478
    %5606 = vmatpush1.bf16.msra.mxu0 %v5477
    %5607 = vmatprep.subr.bf16.mxu0 %v5480
    %5608 = vmatpush1.bf16.msra.mxu0 %v5479
    %5609 = vmatprep.subr.bf16.mxu0 %v5482
    %5610 = vmatpush1.bf16.msra.mxu0 %v5481
    %5611 = vmatprep.subr.bf16.mxu0 %v5484
    %5612 = vmatpush1.bf16.msra.mxu0 %v5483
    %5613 = vmatprep.subr.bf16.mxu0 %v5486
    %5614 = vmatpush1.bf16.msra.mxu0 %v5485
    %5615 = vmatprep.subr.bf16.mxu0 %v5488
    %5616 = vmatpush1.bf16.msra.mxu0 %v5487
    %5617 = vmatprep.subr.bf16.mxu0 %v5490
    %5618 = vmatpush1.bf16.msra.mxu0 %v5489
    %5619 = vmatprep.subr.bf16.mxu0 %v5492
    %5620 = vmatpush1.bf16.msra.mxu0 %v5491
    %5621 = vmatprep.subr.bf16.mxu0 %v5494
    %5622 = vmatpush1.bf16.msra.mxu0 %v5493
    %5623 = vmatprep.subr.bf16.mxu0 %v5496
    %5624 = vmatpush1.bf16.msra.mxu0 %v5495
    %5625 = vmatprep.mubr.bf16.mxu0 %v5230
    %5626 = vmatmul.mubr.bf16.gmra.mrb[0].mxu0 %v5213
    %v5627 = vpop.f32.mrb[0].mxu0
    %v5628 = vadd.f32 0.0, %v5627
    %v5629 = vpop.f32.mrb[0].mxu0
    %v5630 = vadd.f32 0.0, %v5629
    %v5631 = vpop.f32.mrb[0].mxu0
    %v5632 = vadd.f32 0.0, %v5631
    %v5633 = vpop.f32.mrb[0].mxu0
    %v5634 = vadd.f32 0.0, %v5633
    %5635 = vmatprep.mubr.bf16.mxu0 %v5229
    %5636 = vmatmul.mubr.bf16.gmra.mrb[0].mxu0 %v5212
    %v5637 = vpop.f32.mrb[0].mxu0
    %v5638 = vadd.f32 0.0, %v5637
    %v5639 = vpop.f32.mrb[0].mxu0
    %v5640 = vadd.f32 0.0, %v5639
    %v5641 = vpop.f32.mrb[0].mxu0
    %v5642 = vpop.f32.mrb[0].mxu0
    %5643 = vdwg.mxu0
    %5644 = vmatprep.subr.bf16.mxu0 %v5498
    %5645 = vmatpush1.bf16.msra.mxu0 %v5497
    %5646 = vmatprep.subr.bf16.mxu0 %v5500
    %5647 = vmatpush1.bf16.msra.mxu0 %v5499
    %5648 = vmatprep.subr.bf16.mxu0 %v5502
    %5649 = vmatpush1.bf16.msra.mxu0 %v5501
    %5650 = vmatprep.subr.bf16.mxu0 %v5504
    %5651 = vmatpush1.bf16.msra.mxu0 %v5503
    %5652 = vmatprep.subr.bf16.mxu0 %v5506
    %5653 = vmatpush1.bf16.msra.mxu0 %v5505
    %5654 = vmatprep.subr.bf16.mxu0 %v5508
    %5655 = vmatpush1.bf16.msra.mxu0 %v5507
    %5656 = vmatprep.subr.bf16.mxu0 %v5510
    %5657 = vmatpush1.bf16.msra.mxu0 %v5509
    %5658 = vmatprep.subr.bf16.mxu0 %v5512
    %5659 = vmatpush1.bf16.msra.mxu0 %v5511
    %5660 = vmatprep.subr.bf16.mxu0 %v5514
    %5661 = vmatpush1.bf16.msra.mxu0 %v5513
    %5662 = vmatprep.subr.bf16.mxu0 %v5516
    %5663 = vmatpush1.bf16.msra.mxu0 %v5515
    %5664 = vmatprep.subr.bf16.mxu0 %v5518
    %5665 = vmatpush1.bf16.msra.mxu0 %v5517
    %5666 = vmatprep.subr.bf16.mxu0 %v5520
    %5667 = vmatpush1.bf16.msra.mxu0 %v5519
    %5668 = vmatprep.subr.bf16.mxu0 %v5522
    %5669 = vmatpush1.bf16.msra.mxu0 %v5521
    %5670 = vmatprep.subr.bf16.mxu0 %v5524
    %5671 = vmatpush1.bf16.msra.mxu0 %v5523
    %5672 = vmatprep.subr.bf16.mxu0 %v5526
    %5673 = vmatpush1.bf16.msra.mxu0 %v5525
    %5674 = vmatprep.subr.bf16.mxu0 %v5528
    %5675 = vmatpush1.bf16.msra.mxu0 %v5527
    %5676 = vmatprep.mubr.bf16.mxu0 %v5264
    %5677 = vmatmul.mubr.bf16.gmra.mrb[0].mxu0 %v5247
    %v5678 = vpop.f32.mrb[0].mxu0
    %v5679 = vadd.f32 %v5628, %v5678
    %v5680 = vpop.f32.mrb[0].mxu0
    %v5681 = vadd.f32 %v5630, %v5680
    %v5682 = vpop.f32.mrb[0].mxu0
    %v5683 = vadd.f32 %v5632, %v5682
    %v5684 = vpop.f32.mrb[0].mxu0
    %v5685 = vadd.f32 %v5634, %v5684
    %5686 = vmatprep.mubr.bf16.mxu0 %v5263
    %5687 = vmatmul.mubr.bf16.gmra.mrb[0].mxu0 %v5246
    %v5688 = vpop.f32.mrb[0].mxu0
    %v5689 = vadd.f32 %v5638, %v5688
    %v5690 = vpop.f32.mrb[0].mxu0
    %v5691 = vadd.f32 %v5640, %v5690
    %v5692 = vpop.f32.mrb[0].mxu0
    %v5693 = vpop.f32.mrb[0].mxu0
    %5694 = vdwg.mxu0
    %v5695 = vadd.f32 %v5105, %v5679
    %v5696 = vadd.f32 %v5107, %v5681
    %v5697 = vadd.f32 %v5109, %v5683
    %v5698 = vadd.f32 %v5111, %v5685
    %v5699 = vadd.f32 %v5115, %v5689
    %v5700 = vadd.f32 %v5117, %v5691
    %v5701 = vld [vmem:[%s4] sm:$0xff]
    %v5703 = vlaneseq
    %v5704 = vshrl.u32 %v5703, 7
    %v5705 = vsub.s32 0, %v5704
    %v5706 = vrot.slane %v5701, %v5705
    %v5707 = vlaneseq
    %v5708 = vshrl.u32 %v5707, 7
    %v5709 = vsub.s32 4, %v5708
    %v5710 = vrot.slane %v5701, %v5709
    %v5713 = vlaneseq
    %v5714 = vshrl.u32 %v5713, 7
    %v5715 = vsub.s32 0, %v5714
    %v5716 = vrot.slane %v5706, %v5715
    %v5717 = vlaneseq
    %v5718 = vshrl.u32 %v5717, 7
    %v5719 = vsub.s32 0, %v5718
    %v5720 = vrot.slane %v5710, %v5719
    %v5721 = vadd.f32 %v5695, %v5716
    %v5722 = vadd.f32 %v5696, %v5720
    %v5723 = vadd.f32 %v5697, %v5716
    %v5724 = vadd.f32 %v5698, %v5720
    %v5725 = vadd.f32 %v5699, %v5716
    %v5726 = vadd.f32 %v5700, %v5720
    %v5727 = vmax.f32 %v5721, 0.0
    %v5728 = vmax.f32 %v5722, 0.0
    %v5729 = vmax.f32 %v5723, 0.0
    %v5730 = vmax.f32 %v5724, 0.0
    %v5731 = vmax.f32 %v5725, 0.0
    %v5732 = vmax.f32 %v5726, 0.0
    %v5733 = vmin.f32 %v5721, 0.0
    %v5734 = vmin.f32 %v5722, 0.0
    %v5735 = vmin.f32 %v5723, 0.0
    %v5736 = vmin.f32 %v5724, 0.0
    %v5737 = vmin.f32 %v5725, 0.0
    %v5738 = vmin.f32 %v5726, 0.0
    %v5739 = vlaneseq
    %v5740 = vshrl.u32 %v5739, 7
    %v5741 = vsub.s32 1, %v5740
    %v5742 = vrot.slane %v5701, %v5741
    %v5743 = vlaneseq
    %v5744 = vshrl.u32 %v5743, 7
    %v5745 = vsub.s32 5, %v5744
    %v5746 = vrot.slane %v5701, %v5745
    %v5749 = vlaneseq
    %v5750 = vshrl.u32 %v5749, 7
    %v5751 = vsub.s32 1, %v5750
    %v5752 = vrot.slane %v5742, %v5751
    %v5753 = vlaneseq
    %v5754 = vshrl.u32 %v5753, 7
    %v5755 = vsub.s32 1, %v5754
    %v5756 = vrot.slane %v5746, %v5755
    %v5757 = vmul.f32 %v5752, %v5733
    %v5758 = vmul.f32 %v5756, %v5734
    %v5759 = vmul.f32 %v5752, %v5735
    %v5760 = vmul.f32 %v5756, %v5736
    %v5761 = vmul.f32 %v5752, %v5737
    %v5762 = vmul.f32 %v5756, %v5738
    %v5763 = vadd.f32 %v5727, %v5757
    %v5764 = vadd.f32 %v5728, %v5758
    %v5765 = vadd.f32 %v5729, %v5759
    %v5766 = vadd.f32 %v5730, %v5760
    %v5767 = vadd.f32 %v5731, %v5761
    %v5768 = vadd.f32 %v5732, %v5762
    %v5769 = vlaneseq
    %v5770 = vshrl.u32 %v5769, 7
    %v5771 = vsub.s32 2, %v5770
    %v5772 = vrot.slane %v5701, %v5771
    %v5773 = vlaneseq
    %v5774 = vshrl.u32 %v5773, 7
    %v5775 = vsub.s32 6, %v5774
    %v5776 = vrot.slane %v5701, %v5775
    %v5779 = vlaneseq
    %v5780 = vshrl.u32 %v5779, 7
    %v5781 = vsub.s32 2, %v5780
    %v5782 = vrot.slane %v5772, %v5781
    %v5783 = vlaneseq
    %v5784 = vshrl.u32 %v5783, 7
    %v5785 = vsub.s32 2, %v5784
    %v5786 = vrot.slane %v5776, %v5785
    %v5787 = vmul.f32 %v5763, %v5782
    %v5788 = vmul.f32 %v5764, %v5786
    %v5789 = vmul.f32 %v5765, %v5782
    %v5790 = vmul.f32 %v5766, %v5786
    %v5791 = vmul.f32 %v5767, %v5782
    %v5792 = vmul.f32 %v5768, %v5786
    %v5793 = vlaneseq
    %v5794 = vshrl.u32 %v5793, 7
    %v5795 = vsub.s32 3, %v5794
    %v5796 = vrot.slane %v5701, %v5795
    %v5797 = vlaneseq
    %v5798 = vshrl.u32 %v5797, 7
    %v5799 = vsub.s32 7, %v5798
    %v5800 = vrot.slane %v5701, %v5799
    %v5803 = vlaneseq
    %v5804 = vshrl.u32 %v5803, 7
    %v5805 = vsub.s32 3, %v5804
    %v5806 = vrot.slane %v5796, %v5805
    %v5807 = vlaneseq
    %v5808 = vshrl.u32 %v5807, 7
    %v5809 = vsub.s32 3, %v5808
    %v5810 = vrot.slane %v5800, %v5809
    %v5811 = vadd.f32 %v5787, %v5806
    %v5812 = vadd.f32 %v5788, %v5810
    %v5813 = vadd.f32 %v5789, %v5806
    %v5814 = vadd.f32 %v5790, %v5810
    %v5815 = vadd.f32 %v5791, %v5806
    %v5816 = vadd.f32 %v5792, %v5810
    %v5817 = vpack.c.bf16 %v5813, %v5811
    %v5818 = vpack.c.bf16 %v5814, %v5812
    %v5819 = vpack.c.bf16 %v5815, %v5815
    %v5820 = vpack.c.bf16 %v5816, %v5816
    %v5825 = vunpack.c.l.b16 %v5817
    %v5826 = vunpack.c.l.b16 %v5818
    %v5827 = vunpack.c.h.b16 %v5817
    %v5828 = vunpack.c.h.b16 %v5818
    %v5829 = vunpack.c.l.b16 %v5819
    %v5830 = vunpack.c.l.b16 %v5820
    %v5831 = vpack.c.b16 %v5826, %v5825
    %v5832 = vpack.c.b16 %v5828, %v5827
    %v5833 = vpack.c.b16 %v5830, %v5829
    %5837 = vst [vmem:[#allocation3 + $0x10] sm:$0xff] %v5831
    %5838 = vst [vmem:[#allocation3 + $0x18] sm:$0xff] %v5832
    %5839 = vst [vmem:[#allocation3 + $0x20] sm:$0xff] %v5833
    %v5840 = vld [vmem:[#allocation3 + $0x8] sm:$0xcc]
    %v5841 = vld [vmem:[#allocation3 + $0x10] sm:$0xff]
    %v5842 = vld [vmem:[#allocation3 + $0x18] sm:$0xff]
    %v5843 = vld [vmem:[#allocation3 + $0x20] sm:$0xff]
    %v5844 = vld [vmem:[#allocation3 + $0x28] sm:$0x11]
    %v5845 = vld [vmem:[#allocation8] sm:$0xf]
    %v5846 = vld [vmem:[#allocation8 + $0x4] sm:$0xf]
    %v5847 = vld [vmem:[#allocation8 + $0x8] sm:$0xf]
    %v5848 = vld [vmem:[#allocation8 + $0xc] sm:$0xf]
    %v5849 = vld [vmem:[#allocation8 + $0x10] sm:$0xf]
    %v5850 = vld [vmem:[#allocation8 + $0x14] sm:$0xf]
    %v5851 = vld [vmem:[#allocation8 + $0x18] sm:$0xf]
    %v5852 = vld [vmem:[#allocation8 + $0x1c] sm:$0xf]
    %v5853 = vld [vmem:[#allocation8 + $0x20] sm:$0xf]
    %v5854 = vld [vmem:[#allocation8 + $0x24] sm:$0xf]
    %v5855 = vld [vmem:[#allocation8 + $0x28] sm:$0xf]
    %v5856 = vld [vmem:[#allocation8 + $0x2c] sm:$0xf]
    %v5857 = vld [vmem:[#allocation8 + $0x30] sm:$0xf]
    %v5858 = vld [vmem:[#allocation8 + $0x34] sm:$0xf]
    %v5859 = vld [vmem:[#allocation8 + $0x38] sm:$0xf]
    %v5860 = vld [vmem:[#allocation8 + $0x3c] sm:$0xf]
    %v5861 = vld [vmem:[#allocation8 + $0x40] sm:$0xf]
    %v5862 = vld [vmem:[#allocation8 + $0x44] sm:$0xf]
    %v5863 = vld [vmem:[#allocation8 + $0x48] sm:$0xf]
    %v5864 = vld [vmem:[#allocation8 + $0x4c] sm:$0xf]
    %v5865 = vld [vmem:[#allocation8 + $0x50] sm:$0xf]
    %v5866 = vld [vmem:[#allocation8 + $0x54] sm:$0xf]
    %v5867 = vld [vmem:[#allocation8 + $0x58] sm:$0xf]
    %v5868 = vld [vmem:[#allocation8 + $0x5c] sm:$0xf]
    %v5869 = vld [vmem:[#allocation8 + $0x60] sm:$0xf]
    %v5870 = vld [vmem:[#allocation8 + $0x64] sm:$0xf]
    %v5871 = vld [vmem:[#allocation8 + $0x68] sm:$0xf]
    %v5872 = vld [vmem:[#allocation8 + $0x6c] sm:$0xf]
    %v5873 = vld [vmem:[#allocation8 + $0x70] sm:$0xf]
    %v5874 = vld [vmem:[#allocation8 + $0x74] sm:$0xf]
    %v5875 = vld [vmem:[#allocation8 + $0x78] sm:$0xf]
    %v5876 = vld [vmem:[#allocation8 + $0x7c] sm:$0xf]
    %v5877 = vld [vmem:[#allocation3 + $0x8] sm:$0x88]
    %v5878 = vld [vmem:[%s2660] sm:$0xf]
    %v5879 = vld [vmem:[%s2660 + $0x4] sm:$0xf]
    %v5880 = vld [vmem:[%s2660 + $0x8] sm:$0xf]
    %v5881 = vld [vmem:[%s2660 + $0xc] sm:$0xf]
    %v5882 = vld [vmem:[%s2660 + $0x10] sm:$0xf]
    %v5883 = vld [vmem:[%s2660 + $0x14] sm:$0xf]
    %v5884 = vld [vmem:[%s2660 + $0x18] sm:$0xf]
    %v5885 = vld [vmem:[%s2660 + $0x1c] sm:$0xf]
    %v5886 = vld [vmem:[%s2660 + $0x20] sm:$0xf]
    %v5887 = vld [vmem:[%s2660 + $0x24] sm:$0xf]
    %v5888 = vld [vmem:[%s2660 + $0x28] sm:$0xf]
    %v5889 = vld [vmem:[%s2660 + $0x2c] sm:$0xf]
    %v5890 = vld [vmem:[%s2660 + $0x30] sm:$0xf]
    %v5891 = vld [vmem:[%s2660 + $0x34] sm:$0xf]
    %v5892 = vld [vmem:[%s2660 + $0x38] sm:$0xf]
    %v5893 = vld [vmem:[%s2660 + $0x3c] sm:$0xf]
    %v5894 = vld [vmem:[%s2660 + $0x40] sm:$0xf]
    %v5895 = vld [vmem:[%s2660 + $0x44] sm:$0xf]
    %v5896 = vld [vmem:[%s2660 + $0x48] sm:$0xf]
    %v5897 = vld [vmem:[%s2660 + $0x4c] sm:$0xf]
    %v5898 = vld [vmem:[%s2660 + $0x50] sm:$0xf]
    %v5899 = vld [vmem:[%s2660 + $0x54] sm:$0xf]
    %v5900 = vld [vmem:[%s2660 + $0x58] sm:$0xf]
    %v5901 = vld [vmem:[%s2660 + $0x5c] sm:$0xf]
    %v5902 = vld [vmem:[%s2660 + $0x60] sm:$0xf]
    %v5903 = vld [vmem:[%s2660 + $0x64] sm:$0xf]
    %v5904 = vld [vmem:[%s2660 + $0x68] sm:$0xf]
    %v5905 = vld [vmem:[%s2660 + $0x6c] sm:$0xf]
    %v5906 = vld [vmem:[%s2660 + $0x70] sm:$0xf]
    %v5907 = vld [vmem:[%s2660 + $0x74] sm:$0xf]
    %v5908 = vld [vmem:[%s2660 + $0x78] sm:$0xf]
    %v5909 = vld [vmem:[%s2660 + $0x7c] sm:$0xf]
    %v5915 = vunpack.c.l.b16 %v5877
    %v5916 = vunpack.c.h.b16 %v5877
    %v5917 = vunpack.c.l.b16 %v5841
    %v5918 = vunpack.c.h.b16 %v5841
    %v5919 = vunpack.c.l.b16 %v5842
    %v5920 = vunpack.c.h.b16 %v5842
    %v5921 = vunpack.c.l.b16 %v5843
    %v5922 = vunpack.c.h.b16 %v5843
    %v5923 = vunpack.c.l.b16 %v5844
    %v5924 = vunpack.c.h.b16 %v5844
    %v5925 = vpack.c.b16 %v5917, %v5915
    %v5926 = vpack.c.b16 %v5918, %v5916
    %v5927 = vpack.c.b16 %v5921, %v5919
    %v5928 = vpack.c.b16 %v5922, %v5920
    %v5929 = vpack.c.b16 %v5923, %v5923
    %v5930 = vpack.c.b16 %v5924, %v5924
    %v5931 = vrot.slane %v5925, 3
    %v5932 = vrot.slane %v5927, 3
    %v5933 = vsel %vm950, %v5931, %v5932
    %v5934 = vrot.slane %v5926, 3
    %v5935 = vrot.slane %v5928, 3
    %v5936 = vsel %vm950, %v5934, %v5935
    %v5937 = vrot.slane %v5929, 3
    %v5938 = vsel %vm950, %v5932, %v5937
    %v5939 = vrot.slane %v5930, 3
    %v5940 = vsel %vm950, %v5935, %v5939
    %v5977 = vunpack.c.l.b16 %v5878
    %v5978 = vunpack.c.l.b16 %v5879
    %v5979 = vunpack.c.l.b16 %v5880
    %v5980 = vunpack.c.l.b16 %v5881
    %v5981 = vunpack.c.l.b16 %v5882
    %v5982 = vunpack.c.l.b16 %v5883
    %v5983 = vunpack.c.l.b16 %v5884
    %v5984 = vunpack.c.l.b16 %v5885
    %v5985 = vunpack.c.l.b16 %v5886
    %v5986 = vunpack.c.l.b16 %v5887
    %v5987 = vunpack.c.l.b16 %v5888
    %v5988 = vunpack.c.l.b16 %v5889
    %v5989 = vunpack.c.l.b16 %v5890
    %v5990 = vunpack.c.l.b16 %v5891
    %v5991 = vunpack.c.l.b16 %v5892
    %v5992 = vunpack.c.l.b16 %v5893
    %v5993 = vunpack.c.l.b16 %v5894
    %v5994 = vunpack.c.l.b16 %v5895
    %v5995 = vunpack.c.l.b16 %v5896
    %v5996 = vunpack.c.l.b16 %v5897
    %v5997 = vunpack.c.l.b16 %v5898
    %v5998 = vunpack.c.l.b16 %v5899
    %v5999 = vunpack.c.l.b16 %v5900
    %v6000 = vunpack.c.l.b16 %v5901
    %v6001 = vunpack.c.l.b16 %v5902
    %v6002 = vunpack.c.l.b16 %v5903
    %v6003 = vunpack.c.l.b16 %v5904
    %v6004 = vunpack.c.l.b16 %v5905
    %v6005 = vunpack.c.l.b16 %v5906
    %v6006 = vunpack.c.l.b16 %v5907
    %v6007 = vunpack.c.l.b16 %v5908
    %v6008 = vunpack.c.l.b16 %v5909
    %v6009 = vpack.c.b16 %v5978, %v5977
    %v6010 = vpack.c.b16 %v5980, %v5979
    %v6011 = vpack.c.b16 %v5982, %v5981
    %v6012 = vpack.c.b16 %v5984, %v5983
    %v6013 = vpack.c.b16 %v5986, %v5985
    %v6014 = vpack.c.b16 %v5988, %v5987
    %v6015 = vpack.c.b16 %v5990, %v5989
    %v6016 = vpack.c.b16 %v5992, %v5991
    %v6017 = vpack.c.b16 %v5994, %v5993
    %v6018 = vpack.c.b16 %v5996, %v5995
    %v6019 = vpack.c.b16 %v5998, %v5997
    %v6020 = vpack.c.b16 %v6000, %v5999
    %v6021 = vpack.c.b16 %v6002, %v6001
    %v6022 = vpack.c.b16 %v6004, %v6003
    %v6023 = vpack.c.b16 %v6006, %v6005
    %v6024 = vpack.c.b16 %v6008, %v6007
    %6041 = vmatprep.subr.bf16.mxu0 0
    %6042 = vmatpush1.bf16.msra.mxu0 %v6009
    %6043 = vmatprep.subr.bf16.mxu0 0
    %6044 = vmatpush1.bf16.msra.mxu0 %v6010
    %6045 = vmatprep.subr.bf16.mxu0 0
    %6046 = vmatpush1.bf16.msra.mxu0 %v6011
    %6047 = vmatprep.subr.bf16.mxu0 0
    %6048 = vmatpush1.bf16.msra.mxu0 %v6012
    %6049 = vmatprep.subr.bf16.mxu0 0
    %6050 = vmatpush1.bf16.msra.mxu0 %v6013
    %6051 = vmatprep.subr.bf16.mxu0 0
    %6052 = vmatpush1.bf16.msra.mxu0 %v6014
    %6053 = vmatprep.subr.bf16.mxu0 0
    %6054 = vmatpush1.bf16.msra.mxu0 %v6015
    %6055 = vmatprep.subr.bf16.mxu0 0
    %6056 = vmatpush1.bf16.msra.mxu0 %v6016
    %6057 = vmatprep.subr.bf16.mxu0 0
    %6058 = vmatpush1.bf16.msra.mxu0 %v6017
    %6059 = vmatprep.subr.bf16.mxu0 0
    %6060 = vmatpush1.bf16.msra.mxu0 %v6018
    %6061 = vmatprep.subr.bf16.mxu0 0
    %6062 = vmatpush1.bf16.msra.mxu0 %v6019
    %6063 = vmatprep.subr.bf16.mxu0 0
    %6064 = vmatpush1.bf16.msra.mxu0 %v6020
    %6065 = vmatprep.subr.bf16.mxu0 0
    %6066 = vmatpush1.bf16.msra.mxu0 %v6021
    %6067 = vmatprep.subr.bf16.mxu0 0
    %6068 = vmatpush1.bf16.msra.mxu0 %v6022
    %6069 = vmatprep.subr.bf16.mxu0 0
    %6070 = vmatpush1.bf16.msra.mxu0 %v6023
    %6071 = vmatprep.subr.bf16.mxu0 0
    %6072 = vmatpush1.bf16.msra.mxu0 %v6024
    %6073 = vmatprep.mubr.bf16.mxu0 %v5936
    %6074 = vmatmul.mubr.bf16.gmra.mrb[0].mxu0 %v5933
    %v6075 = vpop.f32.mrb[0].mxu0
    %v6076 = vadd.f32 0.0, %v6075
    %v6077 = vpop.f32.mrb[0].mxu0
    %v6078 = vpop.f32.mrb[0].mxu0
    %v6079 = vadd.f32 0.0, %v6078
    %v6080 = vpop.f32.mrb[0].mxu0
    %6081 = vmatprep.mubr.bf16.mxu0 %v5940
    %6082 = vmatmul.mubr.bf16.gmra.mrb[0].mxu0 %v5938
    %v6083 = vpop.f32.mrb[0].mxu0
    %v6084 = vadd.f32 0.0, %v6083
    %v6085 = vpop.f32.mrb[0].mxu0
    %v6086 = vpop.f32.mrb[0].mxu0
    %v6087 = vadd.f32 0.0, %v6086
    %v6088 = vpop.f32.mrb[0].mxu0
    %6089 = vdwg.mxu0
    %v6091 = vunpack.c.l.b16 %v5840
    %v6092 = vunpack.c.h.b16 %v5840
    %v6093 = vpack.c.b16 %v5917, %v6091
    %v6094 = vpack.c.b16 %v5918, %v6092
    %v6096 = vshrl.u32 %v6093, 16
    %v6098 = vrot.slane %v6096, 2
    %v6099 = vshll.u32 %v6093, 16
    %v6101 = vrot.slane %v6099, 3
    %v6102 = vor.u32 %v6098, %v6101
    %v6104 = vshrl.u32 %v5927, 16
    %v6106 = vrot.slane %v6104, 2
    %v6107 = vshll.u32 %v5927, 16
    %v6109 = vrot.slane %v6107, 3
    %v6110 = vor.u32 %v6106, %v6109
    %v6111 = vsel %vm92, %v6102, %v6110
    %v6113 = vshrl.u32 %v6094, 16
    %v6115 = vrot.slane %v6113, 2
    %v6116 = vshll.u32 %v6094, 16
    %v6118 = vrot.slane %v6116, 3
    %v6119 = vor.u32 %v6115, %v6118
    %v6121 = vshrl.u32 %v5928, 16
    %v6123 = vrot.slane %v6121, 2
    %v6124 = vshll.u32 %v5928, 16
    %v6126 = vrot.slane %v6124, 3
    %v6127 = vor.u32 %v6123, %v6126
    %v6128 = vsel %vm92, %v6119, %v6127
    %v6130 = vshll.u32 %v5929, 16
    %v6132 = vrot.slane %v6130, 3
    %v6133 = vsel %vm92, %v6110, %v6132
    %v6135 = vshll.u32 %v5930, 16
    %v6137 = vrot.slane %v6135, 3
    %v6138 = vsel %vm92, %v6127, %v6137
    %v6175 = vunpack.c.l.b16 %v5845
    %v6176 = vunpack.c.l.b16 %v5846
    %v6177 = vunpack.c.l.b16 %v5847
    %v6178 = vunpack.c.l.b16 %v5848
    %v6179 = vunpack.c.l.b16 %v5849
    %v6180 = vunpack.c.l.b16 %v5850
    %v6181 = vunpack.c.l.b16 %v5851
    %v6182 = vunpack.c.l.b16 %v5852
    %v6183 = vunpack.c.l.b16 %v5853
    %v6184 = vunpack.c.l.b16 %v5854
    %v6185 = vunpack.c.l.b16 %v5855
    %v6186 = vunpack.c.l.b16 %v5856
    %v6187 = vunpack.c.l.b16 %v5857
    %v6188 = vunpack.c.l.b16 %v5858
    %v6189 = vunpack.c.l.b16 %v5859
    %v6190 = vunpack.c.l.b16 %v5860
    %v6191 = vunpack.c.l.b16 %v5861
    %v6192 = vunpack.c.l.b16 %v5862
    %v6193 = vunpack.c.l.b16 %v5863
    %v6194 = vunpack.c.l.b16 %v5864
    %v6195 = vunpack.c.l.b16 %v5865
    %v6196 = vunpack.c.l.b16 %v5866
    %v6197 = vunpack.c.l.b16 %v5867
    %v6198 = vunpack.c.l.b16 %v5868
    %v6199 = vunpack.c.l.b16 %v5869
    %v6200 = vunpack.c.l.b16 %v5870
    %v6201 = vunpack.c.l.b16 %v5871
    %v6202 = vunpack.c.l.b16 %v5872
    %v6203 = vunpack.c.l.b16 %v5873
    %v6204 = vunpack.c.l.b16 %v5874
    %v6205 = vunpack.c.l.b16 %v5875
    %v6206 = vunpack.c.l.b16 %v5876
    %v6207 = vpack.c.b16 %v6176, %v6175
    %v6208 = vpack.c.b16 %v6178, %v6177
    %v6209 = vpack.c.b16 %v6180, %v6179
    %v6210 = vpack.c.b16 %v6182, %v6181
    %v6211 = vpack.c.b16 %v6184, %v6183
    %v6212 = vpack.c.b16 %v6186, %v6185
    %v6213 = vpack.c.b16 %v6188, %v6187
    %v6214 = vpack.c.b16 %v6190, %v6189
    %v6215 = vpack.c.b16 %v6192, %v6191
    %v6216 = vpack.c.b16 %v6194, %v6193
    %v6217 = vpack.c.b16 %v6196, %v6195
    %v6218 = vpack.c.b16 %v6198, %v6197
    %v6219 = vpack.c.b16 %v6200, %v6199
    %v6220 = vpack.c.b16 %v6202, %v6201
    %v6221 = vpack.c.b16 %v6204, %v6203
    %v6222 = vpack.c.b16 %v6206, %v6205
    %6239 = vmatprep.subr.bf16.mxu0 0
    %6240 = vmatpush1.bf16.msra.mxu0 %v6207
    %6241 = vmatprep.subr.bf16.mxu0 0
    %6242 = vmatpush1.bf16.msra.mxu0 %v6208
    %6243 = vmatprep.subr.bf16.mxu0 0
    %6244 = vmatpush1.bf16.msra.mxu0 %v6209
    %6245 = vmatprep.subr.bf16.mxu0 0
    %6246 = vmatpush1.bf16.msra.mxu0 %v6210
    %6247 = vmatprep.subr.bf16.mxu0 0
    %6248 = vmatpush1.bf16.msra.mxu0 %v6211
    %6249 = vmatprep.subr.bf16.mxu0 0
    %6250 = vmatpush1.bf16.msra.mxu0 %v6212
    %6251 = vmatprep.subr.bf16.mxu0 0
    %6252 = vmatpush1.bf16.msra.mxu0 %v6213
    %6253 = vmatprep.subr.bf16.mxu0 0
    %6254 = vmatpush1.bf16.msra.mxu0 %v6214
    %6255 = vmatprep.subr.bf16.mxu0 0
    %6256 = vmatpush1.bf16.msra.mxu0 %v6215
    %6257 = vmatprep.subr.bf16.mxu0 0
    %6258 = vmatpush1.bf16.msra.mxu0 %v6216
    %6259 = vmatprep.subr.bf16.mxu0 0
    %6260 = vmatpush1.bf16.msra.mxu0 %v6217
    %6261 = vmatprep.subr.bf16.mxu0 0
    %6262 = vmatpush1.bf16.msra.mxu0 %v6218
    %6263 = vmatprep.subr.bf16.mxu0 0
    %6264 = vmatpush1.bf16.msra.mxu0 %v6219
    %6265 = vmatprep.subr.bf16.mxu0 0
    %6266 = vmatpush1.bf16.msra.mxu0 %v6220
    %6267 = vmatprep.subr.bf16.mxu0 0
    %6268 = vmatpush1.bf16.msra.mxu0 %v6221
    %6269 = vmatprep.subr.bf16.mxu0 0
    %6270 = vmatpush1.bf16.msra.mxu0 %v6222
    %6271 = vmatprep.mubr.bf16.mxu0 %v6128
    %6272 = vmatmul.mubr.bf16.gmra.mrb[0].mxu0 %v6111
    %v6273 = vpop.f32.mrb[0].mxu0
    %v6274 = vadd.f32 %v6076, %v6273
    %v6275 = vpop.f32.mrb[0].mxu0
    %v6276 = vpop.f32.mrb[0].mxu0
    %v6277 = vadd.f32 %v6079, %v6276
    %v6278 = vpop.f32.mrb[0].mxu0
    %6279 = vmatprep.mubr.bf16.mxu0 %v6138
    %6280 = vmatmul.mubr.bf16.gmra.mrb[0].mxu0 %v6133
    %v6281 = vpop.f32.mrb[0].mxu0
    %v6282 = vadd.f32 %v6084, %v6281
    %v6283 = vpop.f32.mrb[0].mxu0
    %v6284 = vpop.f32.mrb[0].mxu0
    %v6285 = vadd.f32 %v6087, %v6284
    %v6286 = vpop.f32.mrb[0].mxu0
    %6287 = vdwg.mxu0
    %v6288 = vld [vmem:[#allocation3 + $0x28] sm:$0x33]
    %v6289 = vld [vmem:[%s3072] sm:$0xf]
    %v6290 = vld [vmem:[%s3072 + $0x4] sm:$0xf]
    %v6291 = vld [vmem:[%s3072 + $0x8] sm:$0xf]
    %v6292 = vld [vmem:[%s3072 + $0xc] sm:$0xf]
    %v6293 = vld [vmem:[%s3072 + $0x10] sm:$0xf]
    %v6294 = vld [vmem:[%s3072 + $0x14] sm:$0xf]
    %v6295 = vld [vmem:[%s3072 + $0x18] sm:$0xf]
    %v6296 = vld [vmem:[%s3072 + $0x1c] sm:$0xf]
    %v6297 = vld [vmem:[%s3072 + $0x20] sm:$0xf]
    %v6298 = vld [vmem:[%s3072 + $0x24] sm:$0xf]
    %v6299 = vld [vmem:[%s3072 + $0x28] sm:$0xf]
    %v6300 = vld [vmem:[%s3072 + $0x2c] sm:$0xf]
    %v6301 = vld [vmem:[%s3072 + $0x30] sm:$0xf]
    %v6302 = vld [vmem:[%s3072 + $0x34] sm:$0xf]
    %v6303 = vld [vmem:[%s3072 + $0x38] sm:$0xf]
    %v6304 = vld [vmem:[%s3072 + $0x3c] sm:$0xf]
    %v6305 = vld [vmem:[%s3072 + $0x40] sm:$0xf]
    %v6306 = vld [vmem:[%s3072 + $0x44] sm:$0xf]
    %v6307 = vld [vmem:[%s3072 + $0x48] sm:$0xf]
    %v6308 = vld [vmem:[%s3072 + $0x4c] sm:$0xf]
    %v6309 = vld [vmem:[%s3072 + $0x50] sm:$0xf]
    %v6310 = vld [vmem:[%s3072 + $0x54] sm:$0xf]
    %v6311 = vld [vmem:[%s3072 + $0x58] sm:$0xf]
    %v6312 = vld [vmem:[%s3072 + $0x5c] sm:$0xf]
    %v6313 = vld [vmem:[%s3072 + $0x60] sm:$0xf]
    %v6314 = vld [vmem:[%s3072 + $0x64] sm:$0xf]
    %v6315 = vld [vmem:[%s3072 + $0x68] sm:$0xf]
    %v6316 = vld [vmem:[%s3072 + $0x6c] sm:$0xf]
    %v6317 = vld [vmem:[%s3072 + $0x70] sm:$0xf]
    %v6318 = vld [vmem:[%s3072 + $0x74] sm:$0xf]
    %v6319 = vld [vmem:[%s3072 + $0x78] sm:$0xf]
    %v6320 = vld [vmem:[%s3072 + $0x7c] sm:$0xf]
    %v6322 = vunpack.c.l.b16 %v6288
    %v6323 = vunpack.c.h.b16 %v6288
    %v6324 = vpack.c.b16 %v6322, %v6322
    %v6325 = vpack.c.b16 %v6323, %v6323
    %v6327 = vshrl.u32 %v5925, 16
    %v6329 = vrot.slane %v6327, 3
    %v6330 = vshll.u32 %v5925, 16
    %v6332 = vrot.slane %v6330, 4
    %v6333 = vor.u32 %v6329, %v6332
    %v6334 = vrot.slane %v6104, 3
    %v6335 = vrot.slane %v6107, 4
    %v6336 = vor.u32 %v6334, %v6335
    %v6337 = vsel %vm1978, %v6333, %v6336
    %v6339 = vshrl.u32 %v5926, 16
    %v6341 = vrot.slane %v6339, 3
    %v6342 = vshll.u32 %v5926, 16
    %v6344 = vrot.slane %v6342, 4
    %v6345 = vor.u32 %v6341, %v6344
    %v6346 = vrot.slane %v6121, 3
    %v6347 = vrot.slane %v6124, 4
    %v6348 = vor.u32 %v6346, %v6347
    %v6349 = vsel %vm1978, %v6345, %v6348
    %v6351 = vshrl.u32 %v6324, 16
    %v6353 = vrot.slane %v6351, 3
    %v6354 = vshll.u32 %v6324, 16
    %v6356 = vrot.slane %v6354, 4
    %v6357 = vor.u32 %v6353, %v6356
    %v6358 = vsel %vm1978, %v6336, %v6357
    %v6360 = vshrl.u32 %v6325, 16
    %v6362 = vrot.slane %v6360, 3
    %v6363 = vshll.u32 %v6325, 16
    %v6365 = vrot.slane %v6363, 4
    %v6366 = vor.u32 %v6362, %v6365
    %v6367 = vsel %vm1978, %v6348, %v6366
    %v6404 = vunpack.c.l.b16 %v6289
    %v6405 = vunpack.c.l.b16 %v6290
    %v6406 = vunpack.c.l.b16 %v6291
    %v6407 = vunpack.c.l.b16 %v6292
    %v6408 = vunpack.c.l.b16 %v6293
    %v6409 = vunpack.c.l.b16 %v6294
    %v6410 = vunpack.c.l.b16 %v6295
    %v6411 = vunpack.c.l.b16 %v6296
    %v6412 = vunpack.c.l.b16 %v6297
    %v6413 = vunpack.c.l.b16 %v6298
    %v6414 = vunpack.c.l.b16 %v6299
    %v6415 = vunpack.c.l.b16 %v6300
    %v6416 = vunpack.c.l.b16 %v6301
    %v6417 = vunpack.c.l.b16 %v6302
    %v6418 = vunpack.c.l.b16 %v6303
    %v6419 = vunpack.c.l.b16 %v6304
    %v6420 = vunpack.c.l.b16 %v6305
    %v6421 = vunpack.c.l.b16 %v6306
    %v6422 = vunpack.c.l.b16 %v6307
    %v6423 = vunpack.c.l.b16 %v6308
    %v6424 = vunpack.c.l.b16 %v6309
    %v6425 = vunpack.c.l.b16 %v6310
    %v6426 = vunpack.c.l.b16 %v6311
    %v6427 = vunpack.c.l.b16 %v6312
    %v6428 = vunpack.c.l.b16 %v6313
    %v6429 = vunpack.c.l.b16 %v6314
    %v6430 = vunpack.c.l.b16 %v6315
    %v6431 = vunpack.c.l.b16 %v6316
    %v6432 = vunpack.c.l.b16 %v6317
    %v6433 = vunpack.c.l.b16 %v6318
    %v6434 = vunpack.c.l.b16 %v6319
    %v6435 = vunpack.c.l.b16 %v6320
    %v6436 = vpack.c.b16 %v6405, %v6404
    %v6437 = vpack.c.b16 %v6407, %v6406
    %v6438 = vpack.c.b16 %v6409, %v6408
    %v6439 = vpack.c.b16 %v6411, %v6410
    %v6440 = vpack.c.b16 %v6413, %v6412
    %v6441 = vpack.c.b16 %v6415, %v6414
    %v6442 = vpack.c.b16 %v6417, %v6416
    %v6443 = vpack.c.b16 %v6419, %v6418
    %v6444 = vpack.c.b16 %v6421, %v6420
    %v6445 = vpack.c.b16 %v6423, %v6422
    %v6446 = vpack.c.b16 %v6425, %v6424
    %v6447 = vpack.c.b16 %v6427, %v6426
    %v6448 = vpack.c.b16 %v6429, %v6428
    %v6449 = vpack.c.b16 %v6431, %v6430
    %v6450 = vpack.c.b16 %v6433, %v6432
    %v6451 = vpack.c.b16 %v6435, %v6434
    %6468 = vmatprep.subr.bf16.mxu0 0
    %6469 = vmatpush1.bf16.msra.mxu0 %v6436
    %6470 = vmatprep.subr.bf16.mxu0 0
    %6471 = vmatpush1.bf16.msra.mxu0 %v6437
    %6472 = vmatprep.subr.bf16.mxu0 0
    %6473 = vmatpush1.bf16.msra.mxu0 %v6438
    %6474 = vmatprep.subr.bf16.mxu0 0
    %6475 = vmatpush1.bf16.msra.mxu0 %v6439
    %6476 = vmatprep.subr.bf16.mxu0 0
    %6477 = vmatpush1.bf16.msra.mxu0 %v6440
    %6478 = vmatprep.subr.bf16.mxu0 0
    %6479 = vmatpush1.bf16.msra.mxu0 %v6441
    %6480 = vmatprep.subr.bf16.mxu0 0
    %6481 = vmatpush1.bf16.msra.mxu0 %v6442
    %6482 = vmatprep.subr.bf16.mxu0 0
    %6483 = vmatpush1.bf16.msra.mxu0 %v6443
    %6484 = vmatprep.subr.bf16.mxu0 0
    %6485 = vmatpush1.bf16.msra.mxu0 %v6444
    %6486 = vmatprep.subr.bf16.mxu0 0
    %6487 = vmatpush1.bf16.msra.mxu0 %v6445
    %6488 = vmatprep.subr.bf16.mxu0 0
    %6489 = vmatpush1.bf16.msra.mxu0 %v6446
    %6490 = vmatprep.subr.bf16.mxu0 0
    %6491 = vmatpush1.bf16.msra.mxu0 %v6447
    %6492 = vmatprep.subr.bf16.mxu0 0
    %6493 = vmatpush1.bf16.msra.mxu0 %v6448
    %6494 = vmatprep.subr.bf16.mxu0 0
    %6495 = vmatpush1.bf16.msra.mxu0 %v6449
    %6496 = vmatprep.subr.bf16.mxu0 0
    %6497 = vmatpush1.bf16.msra.mxu0 %v6450
    %6498 = vmatprep.subr.bf16.mxu0 0
    %6499 = vmatpush1.bf16.msra.mxu0 %v6451
    %6500 = vmatprep.mubr.bf16.mxu0 %v6349
    %6501 = vmatmul.mubr.bf16.gmra.mrb[0].mxu0 %v6337
    %v6502 = vpop.f32.mrb[0].mxu0
    %v6503 = vadd.f32 0.0, %v6502
    %v6504 = vpop.f32.mrb[0].mxu0
    %v6505 = vpop.f32.mrb[0].mxu0
    %v6506 = vadd.f32 0.0, %v6505
    %v6507 = vpop.f32.mrb[0].mxu0
    %6508 = vmatprep.mubr.bf16.mxu0 %v6367
    %6509 = vmatmul.mubr.bf16.gmra.mrb[0].mxu0 %v6358
    %v6510 = vpop.f32.mrb[0].mxu0
    %v6511 = vadd.f32 0.0, %v6510
    %v6512 = vpop.f32.mrb[0].mxu0
    %v6513 = vpop.f32.mrb[0].mxu0
    %v6514 = vadd.f32 0.0, %v6513
    %v6515 = vpop.f32.mrb[0].mxu0
    %6516 = vdwg.mxu0
    %v6517 = vadd.f32 %v6274, %v6503
    %v6518 = vadd.f32 %v6277, %v6506
    %v6519 = vadd.f32 %v6282, %v6511
    %v6520 = vadd.f32 %v6285, %v6514
    %v6521 = vld [vmem:[%s6] sm:$0x1]
    %v6523 = vlaneseq
    %v6524 = vshrl.u32 %v6523, 7
    %v6525 = vsub.s32 0, %v6524
    %v6526 = vrot.slane %v6521, %v6525
    %v6528 = vadd.f32 %v6517, %v6526
    %v6529 = vadd.f32 %v6518, %v6526
    %v6530 = vadd.f32 %v6519, %v6526
    %v6531 = vadd.f32 %v6520, %v6526
    %s6532 = scalar_lea.vmem %s7, 32
    %6533 = vst [vmem:[%s6532] sm:$0xff] %v6528
    %6534 = vst [vmem:[%s6532 + $0x8] sm:$0xff] %v6529
    %6535 = vst [vmem:[%s6532 + $0x10] sm:$0xff] %v6530
    %6536 = vst [vmem:[%s6532 + $0x18] sm:$0xf] %v6531
    // Predicated region
    $region42: #{tpu_custom_call.1} parent=1 // pred_check
      _
    $region43: #{tpu_custom_call.1} parent=1 // pred_check_branch
      %6538 = sbr.rel (0) target = $region45
    $region44: #{tpu_custom_call.1} parent=1 // pred_region
      _
    $region45: #{tpu_custom_call.1} parent=1 // pred_fallthru
      _
    // Predicated region
    $region46: #{tpu_custom_call.1} parent=1 // pred_check
      _
    $region47: #{tpu_custom_call.1} parent=1 // pred_check_branch
      %6540 = sbr.rel (0) target = $region49
    $region48: #{tpu_custom_call.1} parent=1 // pred_region
      _
    $region49: #{tpu_custom_call.1} parent=1 // pred_fallthru
      _
    %6541 = vsyncpa [#allocation5], 1
    %6542 = vsyncpa [#allocation7], 1

</llo_original>
